<compile_context>
chip_gen: v7x
topology: tpu7x:2x2x1
jax: 0.10.0
libtpu: 0.0.40
codegen_flags: <defaults>
</compile_context>

<pallas_src>
import math
from functools import partial

import jax
import jax.numpy as jnp
from jax.experimental import pallas as pl
from jax.experimental.pallas import tpu as pltpu


def _mha_kernel(q_ref, kv_ref,
                wq_ref, bq_ref, wk_ref, bk_ref, wv_ref, bv_ref,
                wo_ref, bo_ref, bias_ref,
                out_ref,
                q_scr, m_scr, l_scr, acc_scr,
                *, n_heads: int, d_head: int, scale: float):
    """Flash-style fused MHA.  Grid = (batch, q_tiles, kv_tiles).

    Ref shapes (kernel view):
      q_ref    : (1, tq, D)  bf16
      kv_ref   : (1, tk, D)  bf16
      w*_ref   : (D, D)      bf16  (pre-transposed: in_dim x out_dim)
      b*_ref   : (1, D)      f32
      bias_ref : (tq, tk)    f32   additive mask bias (0 = keep, -1e30 = masked)
      out_ref  : (1, tq, D)
      q_scr    : (H, tq, dh) bf16  scaled, head-split q (lives across kv tiles)
      m_scr    : (H, tq, 1)  f32   running row max
      l_scr    : (H, tq, 1)  f32   running softmax denominator
      acc_scr  : (H, tq, dh) f32   running numerator
    """
    ki = pl.program_id(2)

    @pl.when(ki == 0)
    def _init():
        x_q = q_ref[0]                                               # (tq, D)
        q = jnp.dot(x_q, wq_ref[...], preferred_element_type=jnp.float32)
        q = (q + bq_ref[...]) * scale            # fold 1/sqrt(dh) into q (Sq*D elems)
        q = q.reshape(q.shape[0], n_heads, d_head)                   # (tq, H, dh)
        q_scr[...] = pltpu.einshape("qhd->hqd", q).astype(jnp.bfloat16)
        m_scr[...] = jnp.full(m_scr.shape, -jnp.inf, jnp.float32)
        l_scr[...] = jnp.zeros(l_scr.shape, jnp.float32)
        acc_scr[...] = jnp.zeros(acc_scr.shape, jnp.float32)

    # K / V projections for this kv tile (bf16 MXU operands, f32 accumulate).
    x_kv = kv_ref[0]                                                 # (tk, D)
    k = jnp.dot(x_kv, wk_ref[...], preferred_element_type=jnp.float32) + bk_ref[...]
    v = jnp.dot(x_kv, wv_ref[...], preferred_element_type=jnp.float32) + bv_ref[...]
    k = pltpu.einshape("khd->hkd", k.reshape(k.shape[0], n_heads, d_head))
    v = pltpu.einshape("khd->hkd", v.reshape(v.shape[0], n_heads, d_head))
    k = k.astype(jnp.bfloat16)                                       # (H, tk, dh)
    v = v.astype(jnp.bfloat16)                                       # (H, tk, dh)

    # Batched-over-heads scores (one dot_general, f32) + additive mask bias.
    qh = q_scr[...]                                                  # (H, tq, dh)
    s = jnp.einsum("hqd,hkd->hqk", qh, k,
                   preferred_element_type=jnp.float32)               # (H, tq, tk)
    s = s + bias_ref[...]                                            # broadcast over H

    # Online softmax update — statistics stay in f32 (bf16-safe everywhere incl. v5e).
    m_prev = m_scr[...]
    m_new = jnp.maximum(m_prev, jnp.max(s, axis=-1, keepdims=True))
    alpha = jnp.exp(m_prev - m_new)
    p = jnp.exp(s - m_new)                                           # (H, tq, tk)
    l_scr[...] = alpha * l_scr[...] + jnp.sum(p, axis=-1, keepdims=True)
    pv = jnp.einsum("hqk,hkd->hqd", p.astype(jnp.bfloat16), v,
                    preferred_element_type=jnp.float32)              # (H, tq, dh)
    acc_scr[...] = alpha * acc_scr[...] + pv
    m_scr[...] = m_new
    # TODO(synk): attention dropout (p=0.1) skipped — inference semantics only.

    @pl.when(ki == pl.num_programs(2) - 1)
    def _finalize():
        inv_l = pl.reciprocal(l_scr[...], approx=True)               # EUP slot
        attn = acc_scr[...] * inv_l                                  # (H, tq, dh)
        attn = pltpu.einshape("hqd->qhd", attn)                      # (tq, H, dh)
        attn = attn.reshape(attn.shape[0], n_heads * d_head)         # (tq, D) lane-dense
        out = jnp.dot(attn.astype(jnp.bfloat16), wo_ref[...],
                      preferred_element_type=jnp.float32) + bo_ref[...]
        out_ref[0] = out.astype(out_ref.dtype)


def _pick_tile(s: int, pref: int = 128) -> int:
    # Block dims must be multiples of (8, 128) on the last two axes OR span the
    # full dimension; fall back to the full length for small / ragged sizes.
    return pref if (s >= pref and s % pref == 0) else s


def _build_call(B, Sq, Skv, D, n_heads, tq, tk, out_dtype, single_buffer_consts):
    d_head = D // n_heads
    n_q, n_kv = Sq // tq, Skv // tk
    scale = 1.0 / math.sqrt(d_head)

    const_kw = {"pipeline_mode": pl.Buffered(1)} if single_buffer_consts else {}
    w_spec = pl.BlockSpec((D, D), lambda b, qi, ki: (0, 0), **const_kw)
    b_spec = pl.BlockSpec((1, D), lambda b, qi, ki: (0, 0), **const_kw)

    grid_spec = pltpu.PrefetchScalarGridSpec(
        num_scalar_prefetch=0,
        grid=(B, n_q, n_kv),
        in_specs=[
            pl.BlockSpec((1, tq, D), lambda b, qi, ki: (b, qi, 0)),   # q_input
            pl.BlockSpec((1, tk, D), lambda b, qi, ki: (b, ki, 0)),   # kv_input
            w_spec, b_spec,   # Wq, bq
            w_spec, b_spec,   # Wk, bk
            w_spec, b_spec,   # Wv, bv
            w_spec, b_spec,   # Wo, bo
            pl.BlockSpec((tq, tk), lambda b, qi, ki: (qi, ki)),       # mask bias
        ],
        out_specs=pl.BlockSpec((1, tq, D), lambda b, qi, ki: (b, qi, 0)),
        scratch_shapes=[
            pltpu.VMEM((n_heads, tq, d_head), jnp.bfloat16),          # q_scr
            pltpu.VMEM((n_heads, tq, 1), jnp.float32),                # m_scr
            pltpu.VMEM((n_heads, tq, 1), jnp.float32),                # l_scr
            pltpu.VMEM((n_heads, tq, d_head), jnp.float32),           # acc_scr
        ],
    )

    out_itemsize = jnp.dtype(out_dtype).itemsize
    # Explicit VMEM budget (v7x: 64 MiB physical, 32 MiB scoped default).
    est = (
        4 * D * D * 2 * (1 if single_buffer_consts else 2)            # bf16 weights
        + 4 * D * 4 * 2                                               # f32 biases
        + 2 * (tq * D * 2 + tk * D * 2 + tq * tk * 4 + tq * D * out_itemsize)
        + n_heads * tq * (d_head * 6 + 2 * 128 * 4)                   # scratch (m/l lane-pad)
        + 3 * n_heads * tq * tk * 4                                   # live f32 score tiles
    )
    vmem_limit = max(32 << 20, min(2 * est + (4 << 20), 64 << 20))

    flops = 2 * B * n_q * (
        tq * D * D                        # q projection
        + n_kv * (2 * tk * D * D          # k / v projections (per kv tile)
                  + 2 * tq * tk * D)      # scores + p@v (summed over heads)
        + tq * D * D)                     # output projection
    cost = pl.CostEstimate(
        flops=int(flops),
        transcendentals=int(B * n_heads * Sq * Skv),
        bytes_accessed=int(2 * B * Sq * D + 2 * B * n_q * Skv * D
                           + 8 * D * D + 16 * D + 4 * Sq * Skv
                           + out_itemsize * B * Sq * D),
    )

    return pl.pallas_call(
        partial(_mha_kernel, n_heads=n_heads, d_head=d_head, scale=scale),
        out_shape=jax.ShapeDtypeStruct((B, Sq, D), out_dtype),
        grid_spec=grid_spec,
        compiler_params=pltpu.CompilerParams(
            dimension_semantics=("parallel", "parallel", "arbitrary"),
            vmem_limit_bytes=int(vmem_limit),
        ),
        cost_estimate=cost,
    )


def multihead_attention(kv_input, q_input, params, n_heads, mask=None):
    """kv_input, q_input: (B, S, D); mask: (1, 1, Sq, Skv) with 1=keep or None."""
    B, Sq, D = q_input.shape
    Skv = kv_input.shape[1]
    assert D % n_heads == 0

    wq, bq, wk, bk, wv, bv, wo, bo = params
    # bf16 operands for the MXU; accumulation / softmax stay in f32 in-kernel.
    q_in = q_input.astype(jnp.bfloat16)
    kv_in = kv_input.astype(jnp.bfloat16)
    wq, wk, wv, wo = (w.astype(jnp.bfloat16) for w in (wq, wk, wv, wo))
    bq, bk, bv, bo = (b.reshape(1, D).astype(jnp.float32) for b in (bq, bk, bv, bo))
    # TODO(synk): when kv_input is q_input (self-attention) Wq/Wk/Wv could be fused
    # into one (D, 3D) projection; kept separate to support cross-attention generically.

    # masked_fill(-1e30) semantics as a precomputed additive f32 bias.
    if mask is None:
        bias = jnp.zeros((Sq, Skv), jnp.float32)
    else:
        bias = jnp.where(mask.reshape(Sq, Skv) > 0, 0.0, -1e30).astype(jnp.float32)

    tq = _pick_tile(Sq)
    tk = _pick_tile(Skv)
    args = (q_in, kv_in, wq, bq, wk, bk, wv, bv, wo, bo, bias)
    try:
        call = _build_call(B, Sq, Skv, D, n_heads, tq, tk, q_input.dtype, True)
        return call(*args)
    except Exception:
        # Some Pallas versions reject single-buffered (pl.Buffered(1)) constant
        # blocks — retry with default double buffering (correctness identical).
        call = _build_call(B, Sq, Skv, D, n_heads, tq, tk, q_input.dtype, False)
        return call(*args)


def init_params(key, d_model):
    """Parameter init mirroring the module: xavier_uniform weights, small-uniform
    biases.  Weights are stored pre-transposed as (D_in, D_out) so the kernel
    computes y = x @ W + b directly."""
    keys = jax.random.split(key, 8)
    limit_w = math.sqrt(6.0 / (d_model + d_model))
    limit_b = 1.0 / math.sqrt(d_model)

    def w(k):
        return jax.random.uniform(k, (d_model, d_model), jnp.float32,
                                  -limit_w, limit_w)

    def b(k):
        return jax.random.uniform(k, (d_model,), jnp.float32,
                                  -limit_b, limit_b)

    return (w(keys[0]), b(keys[1]),   # q_proj
            w(keys[2]), b(keys[3]),   # k_proj
            w(keys[4]), b(keys[5]),   # v_proj
            w(keys[6]), b(keys[7]))   # out_proj


def _reference(kv_input, q_input, params, n_heads, mask=None,
               operand_dtype=jnp.float32):
    """Pure-JAX reference.  operand_dtype=bf16 mirrors the kernel's MXU operand
    precision (accumulation stays f32) for a tight numerical check."""
    wq, bq, wk, bk, wv, bv, wo, bo = params
    B, Sq, D = q_input.shape
    Skv = kv_input.shape[1]
    dh = D // n_heads
    c = lambda a: a.astype(operand_dtype)

    def proj(x, w, b, S):
        y = jnp.dot(c(x), c(w), preferred_element_type=jnp.float32) + b
        return y.reshape(B, S, n_heads, dh).transpose(0, 2, 1, 3)

    q = proj(q_input, wq, bq, Sq)
    k = proj(kv_input, wk, bk, Skv)
    v = proj(kv_input, wv, bv, Skv)

    scores = jnp.einsum("bhqd,bhkd->bhqk", q, k) / math.sqrt(dh)
    if mask is not None:
        scores = jnp.where(mask > 0, scores, -1e30)
    p = jax.nn.softmax(scores, axis=-1)
    attn = jnp.einsum("bhqk,bhkd->bhqd", p, v)
    attn = attn.transpose(0, 2, 1, 3).reshape(B, Sq, D)
    return jnp.dot(c(attn), c(wo), preferred_element_type=jnp.float32) + bo


if __name__ == "__main__":
    B, S, D, H = 2, 8, 32, 4

    key = jax.random.PRNGKey(0)
    k_params, k_q, k_kv = jax.random.split(key, 3)

    params = init_params(k_params, D)
    q_input = jax.random.normal(k_q, (B, S, D), jnp.float32)
    kv_input = jax.random.normal(k_kv, (B, S, D), jnp.float32)
    # causal mask, shape (1, 1, S, S): 1 = attend, 0 = masked
    mask = jnp.tril(jnp.ones((S, S), jnp.float32)).reshape(1, 1, S, S)

    out = multihead_attention(kv_input, q_input, params, H, mask=mask)
    out = jax.block_until_ready(out)
    assert out.shape == (B, S, D)
    assert bool(jnp.isfinite(out).all())

    # Tight check vs a reference with matched (bf16) MXU operand precision.
    ref_bf16 = _reference(kv_input, q_input, params, H, mask=mask,
                          operand_dtype=jnp.bfloat16)
    assert jnp.allclose(out, ref_bf16, atol=2e-2, rtol=2e-2), "mismatch vs bf16 reference"

    # Loose sanity check vs full-f32 module semantics (bf16 rounding headroom).
    ref_f32 = _reference(kv_input, q_input, params, H, mask=mask)
    assert jnp.allclose(out, ref_f32, atol=1e-1, rtol=1e-1), "mismatch vs f32 reference"

    print("KERNEL_OK")
</pallas_src>

<mosaic_0001>
module attributes {stable_mosaic.version = 11 : i64} {
  func.func @_mha_kernel(%arg0: i32, %arg1: i32, %arg2: i32, %arg3: memref<1x8x32xbf16, #tpu.memory_space<vmem>>, %arg4: memref<1x8x32xbf16, #tpu.memory_space<vmem>>, %arg5: memref<32x32xbf16, #tpu.memory_space<vmem>>, %arg6: memref<1x32xf32, #tpu.memory_space<vmem>>, %arg7: memref<32x32xbf16, #tpu.memory_space<vmem>>, %arg8: memref<1x32xf32, #tpu.memory_space<vmem>>, %arg9: memref<32x32xbf16, #tpu.memory_space<vmem>>, %arg10: memref<1x32xf32, #tpu.memory_space<vmem>>, %arg11: memref<32x32xbf16, #tpu.memory_space<vmem>>, %arg12: memref<1x32xf32, #tpu.memory_space<vmem>>, %arg13: memref<8x8xf32, #tpu.memory_space<vmem>>, %arg14: memref<1x8x32xf32, #tpu.memory_space<vmem>>, %arg15: memref<4x8x8xbf16, #tpu.memory_space<vmem>>, %arg16: memref<4x8x1xf32, #tpu.memory_space<vmem>>, %arg17: memref<4x8x1xf32, #tpu.memory_space<vmem>>, %arg18: memref<4x8x8xf32, #tpu.memory_space<vmem>>) attributes {dimension_semantics = [#tpu.dimension_semantics<parallel>, #tpu.dimension_semantics<parallel>, #tpu.dimension_semantics<arbitrary>], iteration_bounds = array<i64: 2, 1, 1>, scalar_prefetch = 0 : i64, scratch_operands = 4 : i64, tpu.core_type = #tpu.core_type<tc>, window_params = [{transform_indices = @transform_0, window_bounds = array<i64: 1, 8, 32>}, {transform_indices = @transform_1, window_bounds = array<i64: 1, 8, 32>}, {pipeline_mode = #tpu.pipeline_mode<synchronous>, transform_indices = @transform_2, window_bounds = array<i64: 32, 32>}, {pipeline_mode = #tpu.pipeline_mode<synchronous>, transform_indices = @transform_3, window_bounds = array<i64: 1, 32>}, {pipeline_mode = #tpu.pipeline_mode<synchronous>, transform_indices = @transform_4, window_bounds = array<i64: 32, 32>}, {pipeline_mode = #tpu.pipeline_mode<synchronous>, transform_indices = @transform_5, window_bounds = array<i64: 1, 32>}, {pipeline_mode = #tpu.pipeline_mode<synchronous>, transform_indices = @transform_6, window_bounds = array<i64: 32, 32>}, {pipeline_mode = #tpu.pipeline_mode<synchronous>, transform_indices = @transform_7, window_bounds = array<i64: 1, 32>}, {pipeline_mode = #tpu.pipeline_mode<synchronous>, transform_indices = @transform_8, window_bounds = array<i64: 32, 32>}, {pipeline_mode = #tpu.pipeline_mode<synchronous>, transform_indices = @transform_9, window_bounds = array<i64: 1, 32>}, {transform_indices = @transform_10, window_bounds = array<i64: 8, 8>}, {transform_indices = @transform_11, window_bounds = array<i64: 1, 8, 32>}]} {
    %c0_i32 = arith.constant 0 : i32
    %0 = arith.cmpi eq, %arg2, %c0_i32 : i32
    %1 = arith.extui %0 : i1 to i32
    %c0_i32_0 = arith.constant 0 : i32
    %2 = arith.cmpi ne, %1, %c0_i32_0 : i32
    scf.if %2 {
      %c0_41 = arith.constant 0 : index
      %c0_42 = arith.constant 0 : index
      %c0_43 = arith.constant 0 : index
      %53 = vector.load %arg3[%c0_41, %c0_42, %c0_43] : memref<1x8x32xbf16, #tpu.memory_space<vmem>>, vector<1x8x32xbf16>
      %54 = vector.shape_cast %53 : vector<1x8x32xbf16> to vector<8x32xbf16>
      %c0_44 = arith.constant 0 : index
      %c0_45 = arith.constant 0 : index
      %55 = vector.load %arg5[%c0_44, %c0_45] : memref<32x32xbf16, #tpu.memory_space<vmem>>, vector<32x32xbf16>
      %cst_46 = arith.constant dense<0.000000e+00> : vector<8x32xf32>
      %56 = tpu.matmul %54, %55, %cst_46 {dimension_numbers = #tpu.dot_dimension_numbers<[1], [0], [0], [1], [0, 0, 1, 1], [], []>} : vector<8x32xbf16>, vector<32x32xbf16>, vector<8x32xf32> -> vector<8x32xf32>
      %c0_47 = arith.constant 0 : index
      %c0_48 = arith.constant 0 : index
      %57 = vector.load %arg6[%c0_47, %c0_48] : memref<1x32xf32, #tpu.memory_space<vmem>>, vector<1x32xf32>
      %58 = vector.broadcast %57 : vector<1x32xf32> to vector<8x32xf32>
      %59 = arith.addf %56, %58 : vector<8x32xf32>
      %cst_49 = arith.constant 0.353553385 : f32
      %60 = vector.broadcast %cst_49 : f32 to vector<8x32xf32>
      %61 = arith.mulf %59, %60 : vector<8x32xf32>
      %62 = vector.shape_cast %61 : vector<8x32xf32> to vector<8x4x8xf32>
      %63 = tpu.transpose %62, [1, 0, 2] : vector<8x4x8xf32> -> vector<4x8x8xf32>
      %64 = arith.truncf %63 : vector<4x8x8xf32> to vector<4x8x8xbf16>
      %c0_50 = arith.constant 0 : index
      %c0_51 = arith.constant 0 : index
      %c0_52 = arith.constant 0 : index
      %65 = vector.load %arg15[%c0_50, %c0_51, %c0_52] : memref<4x8x8xbf16, #tpu.memory_space<vmem>>, vector<4x8x8xbf16>
      tpu.vector_store %arg15[%c0_50, %c0_51, %c0_52], %64 {strides = array<i32>} : memref<4x8x8xbf16, #tpu.memory_space<vmem>>, vector<4x8x8xbf16>,
      %cst_53 = arith.constant 0xFF800000 : f32
      %66 = vector.broadcast %cst_53 : f32 to vector<4x8x1xf32>
      %c0_54 = arith.constant 0 : index
      %c0_55 = arith.constant 0 : index
      %c0_56 = arith.constant 0 : index
      %67 = vector.load %arg16[%c0_54, %c0_55, %c0_56] : memref<4x8x1xf32, #tpu.memory_space<vmem>>, vector<4x8x1xf32>
      tpu.vector_store %arg16[%c0_54, %c0_55, %c0_56], %66 {strides = array<i32>} : memref<4x8x1xf32, #tpu.memory_space<vmem>>, vector<4x8x1xf32>,
      %cst_57 = arith.constant 0.000000e+00 : f32
      %68 = vector.broadcast %cst_57 : f32 to vector<4x8x1xf32>
      %c0_58 = arith.constant 0 : index
      %c0_59 = arith.constant 0 : index
      %c0_60 = arith.constant 0 : index
      %69 = vector.load %arg17[%c0_58, %c0_59, %c0_60] : memref<4x8x1xf32, #tpu.memory_space<vmem>>, vector<4x8x1xf32>
      tpu.vector_store %arg17[%c0_58, %c0_59, %c0_60], %68 {strides = array<i32>} : memref<4x8x1xf32, #tpu.memory_space<vmem>>, vector<4x8x1xf32>,
      %cst_61 = arith.constant 0.000000e+00 : f32
      %70 = vector.broadcast %cst_61 : f32 to vector<4x8x8xf32>
      %c0_62 = arith.constant 0 : index
      %c0_63 = arith.constant 0 : index
      %c0_64 = arith.constant 0 : index
      %71 = vector.load %arg18[%c0_62, %c0_63, %c0_64] : memref<4x8x8xf32, #tpu.memory_space<vmem>>, vector<4x8x8xf32>
      tpu.vector_store %arg18[%c0_62, %c0_63, %c0_64], %70 {strides = array<i32>} : memref<4x8x8xf32, #tpu.memory_space<vmem>>, vector<4x8x8xf32>,
    } else {
    }
    %c0 = arith.constant 0 : index
    %c0_1 = arith.constant 0 : index
    %c0_2 = arith.constant 0 : index
    %3 = vector.load %arg4[%c0, %c0_1, %c0_2] : memref<1x8x32xbf16, #tpu.memory_space<vmem>>, vector<1x8x32xbf16>
    %4 = vector.shape_cast %3 : vector<1x8x32xbf16> to vector<8x32xbf16>
    %c0_3 = arith.constant 0 : index
    %c0_4 = arith.constant 0 : index
    %5 = vector.load %arg7[%c0_3, %c0_4] : memref<32x32xbf16, #tpu.memory_space<vmem>>, vector<32x32xbf16>
    %cst = arith.constant dense<0.000000e+00> : vector<8x32xf32>
    %6 = tpu.matmul %4, %5, %cst {dimension_numbers = #tpu.dot_dimension_numbers<[1], [0], [0], [1], [0, 0, 1, 1], [], []>} : vector<8x32xbf16>, vector<32x32xbf16>, vector<8x32xf32> -> vector<8x32xf32>
    %c0_5 = arith.constant 0 : index
    %c0_6 = arith.constant 0 : index
    %7 = vector.load %arg8[%c0_5, %c0_6] : memref<1x32xf32, #tpu.memory_space<vmem>>, vector<1x32xf32>
    %8 = vector.broadcast %7 : vector<1x32xf32> to vector<8x32xf32>
    %9 = arith.addf %6, %8 : vector<8x32xf32>
    %c0_7 = arith.constant 0 : index
    %c0_8 = arith.constant 0 : index
    %10 = vector.load %arg9[%c0_7, %c0_8] : memref<32x32xbf16, #tpu.memory_space<vmem>>, vector<32x32xbf16>
    %cst_9 = arith.constant dense<0.000000e+00> : vector<8x32xf32>
    %11 = tpu.matmul %4, %10, %cst_9 {dimension_numbers = #tpu.dot_dimension_numbers<[1], [0], [0], [1], [0, 0, 1, 1], [], []>} : vector<8x32xbf16>, vector<32x32xbf16>, vector<8x32xf32> -> vector<8x32xf32>
    %c0_10 = arith.constant 0 : index
    %c0_11 = arith.constant 0 : index
    %12 = vector.load %arg10[%c0_10, %c0_11] : memref<1x32xf32, #tpu.memory_space<vmem>>, vector<1x32xf32>
    %13 = vector.broadcast %12 : vector<1x32xf32> to vector<8x32xf32>
    %14 = arith.addf %11, %13 : vector<8x32xf32>
    %15 = vector.shape_cast %9 : vector<8x32xf32> to vector<8x4x8xf32>
    %16 = tpu.transpose %15, [1, 0, 2] : vector<8x4x8xf32> -> vector<4x8x8xf32>
    %17 = vector.shape_cast %14 : vector<8x32xf32> to vector<8x4x8xf32>
    %18 = tpu.transpose %17, [1, 0, 2] : vector<8x4x8xf32> -> vector<4x8x8xf32>
    %19 = arith.truncf %16 : vector<4x8x8xf32> to vector<4x8x8xbf16>
    %20 = arith.truncf %18 : vector<4x8x8xf32> to vector<4x8x8xbf16>
    %c0_12 = arith.constant 0 : index
    %c0_13 = arith.constant 0 : index
    %c0_14 = arith.constant 0 : index
    %21 = vector.load %arg15[%c0_12, %c0_13, %c0_14] : memref<4x8x8xbf16, #tpu.memory_space<vmem>>, vector<4x8x8xbf16>
    "tpu.trace_start"() <{level = 10 : i32, message = "hqd,hkd->hqk"}> : () -> ()
    %cst_15 = arith.constant dense<0.000000e+00> : vector<4x8x8xf32>
    %22 = tpu.matmul %21, %19, %cst_15 {dimension_numbers = #tpu.dot_dimension_numbers<[2], [2], [1], [1], [0, 0, 0, 1, 1, 1], [0], [0]>} : vector<4x8x8xbf16>, vector<4x8x8xbf16>, vector<4x8x8xf32> -> vector<4x8x8xf32>
    "tpu.trace_stop"() : () -> ()
    %c0_16 = arith.constant 0 : index
    %c0_17 = arith.constant 0 : index
    %23 = vector.load %arg13[%c0_16, %c0_17] : memref<8x8xf32, #tpu.memory_space<vmem>>, vector<8x8xf32>
    %24 = vector.shape_cast %23 : vector<8x8xf32> to vector<1x8x8xf32>
    %25 = vector.broadcast %24 : vector<1x8x8xf32> to vector<4x8x8xf32>
    %26 = arith.addf %22, %25 : vector<4x8x8xf32>
    %c0_18 = arith.constant 0 : index
    %c0_19 = arith.constant 0 : index
    %c0_20 = arith.constant 0 : index
    %27 = vector.load %arg16[%c0_18, %c0_19, %c0_20] : memref<4x8x1xf32, #tpu.memory_space<vmem>>, vector<4x8x1xf32>
    %cst_21 = arith.constant dense<0xFF800000> : vector<4x8xf32>
    %28 = vector.multi_reduction <maximumf>, %26, %cst_21 [2] : vector<4x8x8xf32> to vector<4x8xf32>
    %29 = vector.shape_cast %28 : vector<4x8xf32> to vector<4x8x1xf32>
    %30 = arith.maximumf %27, %29 : vector<4x8x1xf32>
    %31 = arith.subf %27, %30 : vector<4x8x1xf32>
    %32 = math.exp %31 : vector<4x8x1xf32>
    %33 = vector.broadcast %30 : vector<4x8x1xf32> to vector<4x8x8xf32>
    %34 = arith.subf %26, %33 : vector<4x8x8xf32>
    %35 = math.exp %34 : vector<4x8x8xf32>
    %c0_22 = arith.constant 0 : index
    %c0_23 = arith.constant 0 : index
    %c0_24 = arith.constant 0 : index
    %36 = vector.load %arg17[%c0_22, %c0_23, %c0_24] : memref<4x8x1xf32, #tpu.memory_space<vmem>>, vector<4x8x1xf32>
    %37 = arith.mulf %32, %36 : vector<4x8x1xf32>
    %cst_25 = arith.constant dense<0.000000e+00> : vector<4x8xf32>
    %38 = vector.multi_reduction <add>, %35, %cst_25 [2] : vector<4x8x8xf32> to vector<4x8xf32>
    %39 = vector.shape_cast %38 : vector<4x8xf32> to vector<4x8x1xf32>
    %40 = arith.addf %37, %39 : vector<4x8x1xf32>
    %c0_26 = arith.constant 0 : index
    %c0_27 = arith.constant 0 : index
    %c0_28 = arith.constant 0 : index
    %41 = vector.load %arg17[%c0_26, %c0_27, %c0_28] : memref<4x8x1xf32, #tpu.memory_space<vmem>>, vector<4x8x1xf32>
    tpu.vector_store %arg17[%c0_26, %c0_27, %c0_28], %40 {strides = array<i32>} : memref<4x8x1xf32, #tpu.memory_space<vmem>>, vector<4x8x1xf32>,
    %42 = arith.truncf %35 : vector<4x8x8xf32> to vector<4x8x8xbf16>
    "tpu.trace_start"() <{level = 10 : i32, message = "hqk,hkd->hqd"}> : () -> ()
    %cst_29 = arith.constant dense<0.000000e+00> : vector<4x8x8xf32>
    %43 = tpu.matmul %42, %20, %cst_29 {dimension_numbers = #tpu.dot_dimension_numbers<[2], [1], [1], [2], [0, 0, 0, 1, 1, 2], [0], [0]>} : vector<4x8x8xbf16>, vector<4x8x8xbf16>, vector<4x8x8xf32> -> vector<4x8x8xf32>
    "tpu.trace_stop"() : () -> ()
    %c0_30 = arith.constant 0 : index
    %c0_31 = arith.constant 0 : index
    %c0_32 = arith.constant 0 : index
    %44 = vector.load %arg18[%c0_30, %c0_31, %c0_32] : memref<4x8x8xf32, #tpu.memory_space<vmem>>, vector<4x8x8xf32>
    %45 = vector.broadcast %32 : vector<4x8x1xf32> to vector<4x8x8xf32>
    %46 = arith.mulf %45, %44 : vector<4x8x8xf32>
    %47 = arith.addf %46, %43 : vector<4x8x8xf32>
    %c0_33 = arith.constant 0 : index
    %c0_34 = arith.constant 0 : index
    %c0_35 = arith.constant 0 : index
    %48 = vector.load %arg18[%c0_33, %c0_34, %c0_35] : memref<4x8x8xf32, #tpu.memory_space<vmem>>, vector<4x8x8xf32>
    tpu.vector_store %arg18[%c0_33, %c0_34, %c0_35], %47 {strides = array<i32>} : memref<4x8x8xf32, #tpu.memory_space<vmem>>, vector<4x8x8xf32>,
    %c0_36 = arith.constant 0 : index
    %c0_37 = arith.constant 0 : index
    %c0_38 = arith.constant 0 : index
    %49 = vector.load %arg16[%c0_36, %c0_37, %c0_38] : memref<4x8x1xf32, #tpu.memory_space<vmem>>, vector<4x8x1xf32>
    tpu.vector_store %arg16[%c0_36, %c0_37, %c0_38], %30 {strides = array<i32>} : memref<4x8x1xf32, #tpu.memory_space<vmem>>, vector<4x8x1xf32>,
    %c0_i32_39 = arith.constant 0 : i32
    %50 = arith.cmpi eq, %arg2, %c0_i32_39 : i32
    %51 = arith.extui %50 : i1 to i32
    %c0_i32_40 = arith.constant 0 : i32
    %52 = arith.cmpi ne, %51, %c0_i32_40 : i32
    scf.if %52 {
      %c0_41 = arith.constant 0 : index
      %c0_42 = arith.constant 0 : index
      %c0_43 = arith.constant 0 : index
      %53 = vector.load %arg17[%c0_41, %c0_42, %c0_43] : memref<4x8x1xf32, #tpu.memory_space<vmem>>, vector<4x8x1xf32>
      %54 = tpu.reciprocal %53 {approx = true} : vector<4x8x1xf32> -> vector<4x8x1xf32>
      %c0_44 = arith.constant 0 : index
      %c0_45 = arith.constant 0 : index
      %c0_46 = arith.constant 0 : index
      %55 = vector.load %arg18[%c0_44, %c0_45, %c0_46] : memref<4x8x8xf32, #tpu.memory_space<vmem>>, vector<4x8x8xf32>
      %56 = vector.broadcast %54 : vector<4x8x1xf32> to vector<4x8x8xf32>
      %57 = arith.mulf %55, %56 : vector<4x8x8xf32>
      %58 = tpu.transpose %57, [1, 0, 2] : vector<4x8x8xf32> -> vector<8x4x8xf32>
      %59 = vector.shape_cast %58 : vector<8x4x8xf32> to vector<8x32xf32>
      %60 = arith.truncf %59 : vector<8x32xf32> to vector<8x32xbf16>
      %c0_47 = arith.constant 0 : index
      %c0_48 = arith.constant 0 : index
      %61 = vector.load %arg11[%c0_47, %c0_48] : memref<32x32xbf16, #tpu.memory_space<vmem>>, vector<32x32xbf16>
      %cst_49 = arith.constant dense<0.000000e+00> : vector<8x32xf32>
      %62 = tpu.matmul %60, %61, %cst_49 {dimension_numbers = #tpu.dot_dimension_numbers<[1], [0], [0], [1], [0, 0, 1, 1], [], []>} : vector<8x32xbf16>, vector<32x32xbf16>, vector<8x32xf32> -> vector<8x32xf32>
      %c0_50 = arith.constant 0 : index
      %c0_51 = arith.constant 0 : index
      %63 = vector.load %arg12[%c0_50, %c0_51] : memref<1x32xf32, #tpu.memory_space<vmem>>, vector<1x32xf32>
      %64 = vector.broadcast %63 : vector<1x32xf32> to vector<8x32xf32>
      %65 = arith.addf %62, %64 : vector<8x32xf32>
      %c0_52 = arith.constant 0 : index
      %c0_53 = arith.constant 0 : index
      %c0_54 = arith.constant 0 : index
      %66 = vector.load %arg14[%c0_52, %c0_53, %c0_54] : memref<1x8x32xf32, #tpu.memory_space<vmem>>, vector<1x8x32xf32>
      %67 = vector.shape_cast %66 : vector<1x8x32xf32> to vector<8x32xf32>
      %68 = vector.shape_cast %65 : vector<8x32xf32> to vector<1x8x32xf32>
      tpu.vector_store %arg14[%c0_52, %c0_53, %c0_54], %68 {strides = array<i32>} : memref<1x8x32xf32, #tpu.memory_space<vmem>>, vector<1x8x32xf32>,
    } else {
    }
    return
  }
  func.func @transform_0(%arg0: i32, %arg1: i32, %arg2: i32) -> (i32, i32, i32) {
    %c0_i32 = arith.constant 0 : i32
    %c0_i32_0 = arith.constant 0 : i32
    return %arg0, %arg1, %c0_i32 : i32, i32, i32
  }
  func.func @transform_1(%arg0: i32, %arg1: i32, %arg2: i32) -> (i32, i32, i32) {
    %c0_i32 = arith.constant 0 : i32
    %c0_i32_0 = arith.constant 0 : i32
    return %arg0, %arg2, %c0_i32 : i32, i32, i32
  }
  func.func @transform_2(%arg0: i32, %arg1: i32, %arg2: i32) -> (i32, i32) {
    %c0_i32 = arith.constant 0 : i32
    %c0_i32_0 = arith.constant 0 : i32
    %c0_i32_1 = arith.constant 0 : i32
    return %c0_i32, %c0_i32_0 : i32, i32
  }
  func.func @transform_3(%arg0: i32, %arg1: i32, %arg2: i32) -> (i32, i32) {
    %c0_i32 = arith.constant 0 : i32
    %c0_i32_0 = arith.constant 0 : i32
    %c0_i32_1 = arith.constant 0 : i32
    return %c0_i32, %c0_i32_0 : i32, i32
  }
  func.func @transform_4(%arg0: i32, %arg1: i32, %arg2: i32) -> (i32, i32) {
    %c0_i32 = arith.constant 0 : i32
    %c0_i32_0 = arith.constant 0 : i32
    %c0_i32_1 = arith.constant 0 : i32
    return %c0_i32, %c0_i32_0 : i32, i32
  }
  func.func @transform_5(%arg0: i32, %arg1: i32, %arg2: i32) -> (i32, i32) {
    %c0_i32 = arith.constant 0 : i32
    %c0_i32_0 = arith.constant 0 : i32
    %c0_i32_1 = arith.constant 0 : i32
    return %c0_i32, %c0_i32_0 : i32, i32
  }
  func.func @transform_6(%arg0: i32, %arg1: i32, %arg2: i32) -> (i32, i32) {
    %c0_i32 = arith.constant 0 : i32
    %c0_i32_0 = arith.constant 0 : i32
    %c0_i32_1 = arith.constant 0 : i32
    return %c0_i32, %c0_i32_0 : i32, i32
  }
  func.func @transform_7(%arg0: i32, %arg1: i32, %arg2: i32) -> (i32, i32) {
    %c0_i32 = arith.constant 0 : i32
    %c0_i32_0 = arith.constant 0 : i32
    %c0_i32_1 = arith.constant 0 : i32
    return %c0_i32, %c0_i32_0 : i32, i32
  }
  func.func @transform_8(%arg0: i32, %arg1: i32, %arg2: i32) -> (i32, i32) {
    %c0_i32 = arith.constant 0 : i32
    %c0_i32_0 = arith.constant 0 : i32
    %c0_i32_1 = arith.constant 0 : i32
    return %c0_i32, %c0_i32_0 : i32, i32
  }
  func.func @transform_9(%arg0: i32, %arg1: i32, %arg2: i32) -> (i32, i32) {
    %c0_i32 = arith.constant 0 : i32
    %c0_i32_0 = arith.constant 0 : i32
    %c0_i32_1 = arith.constant 0 : i32
    return %c0_i32, %c0_i32_0 : i32, i32
  }
  func.func @transform_10(%arg0: i32, %arg1: i32, %arg2: i32) -> (i32, i32) {
    %c0_i32 = arith.constant 0 : i32
    return %arg1, %arg2 : i32, i32
  }
  func.func @transform_11(%arg0: i32, %arg1: i32, %arg2: i32) -> (i32, i32, i32) {
    %c0_i32 = arith.constant 0 : i32
    %c0_i32_0 = arith.constant 0 : i32
    return %arg0, %arg1, %c0_i32 : i32, i32, i32
  }
}

module attributes {stable_mosaic.version = 11 : i64} {
  func.func @_mha_kernel(%arg0: i32, %arg1: i32, %arg2: i32, %arg3: memref<1x8x32xbf16, #tpu.memory_space<vmem>>, %arg4: memref<1x8x32xbf16, #tpu.memory_space<vmem>>, %arg5: memref<32x32xbf16, #tpu.memory_space<vmem>>, %arg6: memref<1x32xf32, #tpu.memory_space<vmem>>, %arg7: memref<32x32xbf16, #tpu.memory_space<vmem>>, %arg8: memref<1x32xf32, #tpu.memory_space<vmem>>, %arg9: memref<32x32xbf16, #tpu.memory_space<vmem>>, %arg10: memref<1x32xf32, #tpu.memory_space<vmem>>, %arg11: memref<32x32xbf16, #tpu.memory_space<vmem>>, %arg12: memref<1x32xf32, #tpu.memory_space<vmem>>, %arg13: memref<8x8xf32, #tpu.memory_space<vmem>>, %arg14: memref<1x8x32xf32, #tpu.memory_space<vmem>>, %arg15: memref<4x8x8xbf16, #tpu.memory_space<vmem>>, %arg16: memref<4x8x1xf32, #tpu.memory_space<vmem>>, %arg17: memref<4x8x1xf32, #tpu.memory_space<vmem>>, %arg18: memref<4x8x8xf32, #tpu.memory_space<vmem>>) attributes {dimension_semantics = [#tpu.dimension_semantics<parallel>, #tpu.dimension_semantics<parallel>, #tpu.dimension_semantics<arbitrary>], iteration_bounds = array<i64: 2, 1, 1>, scalar_prefetch = 0 : i64, scratch_operands = 4 : i64, tpu.core_type = #tpu.core_type<tc>, window_params = [{transform_indices = @transform_0, window_bounds = array<i64: 1, 8, 32>}, {transform_indices = @transform_1, window_bounds = array<i64: 1, 8, 32>}, {pipeline_mode = #tpu.pipeline_mode<synchronous>, transform_indices = @transform_2, window_bounds = array<i64: 32, 32>}, {pipeline_mode = #tpu.pipeline_mode<synchronous>, transform_indices = @transform_3, window_bounds = array<i64: 1, 32>}, {pipeline_mode = #tpu.pipeline_mode<synchronous>, transform_indices = @transform_4, window_bounds = array<i64: 32, 32>}, {pipeline_mode = #tpu.pipeline_mode<synchronous>, transform_indices = @transform_5, window_bounds = array<i64: 1, 32>}, {pipeline_mode = #tpu.pipeline_mode<synchronous>, transform_indices = @transform_6, window_bounds = array<i64: 32, 32>}, {pipeline_mode = #tpu.pipeline_mode<synchronous>, transform_indices = @transform_7, window_bounds = array<i64: 1, 32>}, {pipeline_mode = #tpu.pipeline_mode<synchronous>, transform_indices = @transform_8, window_bounds = array<i64: 32, 32>}, {pipeline_mode = #tpu.pipeline_mode<synchronous>, transform_indices = @transform_9, window_bounds = array<i64: 1, 32>}, {transform_indices = @transform_10, window_bounds = array<i64: 8, 8>}, {transform_indices = @transform_11, window_bounds = array<i64: 1, 8, 32>}]} {
    %c0_i32 = arith.constant 0 : i32
    %0 = arith.cmpi eq, %arg2, %c0_i32 : i32
    %1 = arith.extui %0 : i1 to i32
    %c0_i32_0 = arith.constant 0 : i32
    %2 = arith.cmpi ne, %1, %c0_i32_0 : i32
    scf.if %2 {
      %c0_41 = arith.constant 0 : index
      %c0_42 = arith.constant 0 : index
      %c0_43 = arith.constant 0 : index
      %53 = vector.load %arg3[%c0_41, %c0_42, %c0_43] : memref<1x8x32xbf16, #tpu.memory_space<vmem>>, vector<1x8x32xbf16>
      %54 = vector.shape_cast %53 : vector<1x8x32xbf16> to vector<8x32xbf16>
      %c0_44 = arith.constant 0 : index
      %c0_45 = arith.constant 0 : index
      %55 = vector.load %arg5[%c0_44, %c0_45] : memref<32x32xbf16, #tpu.memory_space<vmem>>, vector<32x32xbf16>
      %cst_46 = arith.constant dense<0.000000e+00> : vector<8x32xf32>
      %56 = tpu.matmul %54, %55, %cst_46 {dimension_numbers = #tpu.dot_dimension_numbers<[1], [0], [0], [1], [0, 0, 1, 1], [], []>} : vector<8x32xbf16>, vector<32x32xbf16>, vector<8x32xf32> -> vector<8x32xf32>
      %c0_47 = arith.constant 0 : index
      %c0_48 = arith.constant 0 : index
      %57 = vector.load %arg6[%c0_47, %c0_48] : memref<1x32xf32, #tpu.memory_space<vmem>>, vector<1x32xf32>
      %58 = vector.broadcast %57 : vector<1x32xf32> to vector<8x32xf32>
      %59 = arith.addf %56, %58 : vector<8x32xf32>
      %cst_49 = arith.constant 0.353553385 : f32
      %60 = vector.broadcast %cst_49 : f32 to vector<8x32xf32>
      %61 = arith.mulf %59, %60 : vector<8x32xf32>
      %62 = vector.shape_cast %61 : vector<8x32xf32> to vector<8x4x8xf32>
      %63 = tpu.transpose %62, [1, 0, 2] : vector<8x4x8xf32> -> vector<4x8x8xf32>
      %64 = arith.truncf %63 : vector<4x8x8xf32> to vector<4x8x8xbf16>
      %c0_50 = arith.constant 0 : index
      %c0_51 = arith.constant 0 : index
      %c0_52 = arith.constant 0 : index
      %65 = vector.load %arg15[%c0_50, %c0_51, %c0_52] : memref<4x8x8xbf16, #tpu.memory_space<vmem>>, vector<4x8x8xbf16>
      tpu.vector_store %arg15[%c0_50, %c0_51, %c0_52], %64 {strides = array<i32>} : memref<4x8x8xbf16, #tpu.memory_space<vmem>>, vector<4x8x8xbf16>,
      %cst_53 = arith.constant 0xFF800000 : f32
      %66 = vector.broadcast %cst_53 : f32 to vector<4x8x1xf32>
      %c0_54 = arith.constant 0 : index
      %c0_55 = arith.constant 0 : index
      %c0_56 = arith.constant 0 : index
      %67 = vector.load %arg16[%c0_54, %c0_55, %c0_56] : memref<4x8x1xf32, #tpu.memory_space<vmem>>, vector<4x8x1xf32>
      tpu.vector_store %arg16[%c0_54, %c0_55, %c0_56], %66 {strides = array<i32>} : memref<4x8x1xf32, #tpu.memory_space<vmem>>, vector<4x8x1xf32>,
      %cst_57 = arith.constant 0.000000e+00 : f32
      %68 = vector.broadcast %cst_57 : f32 to vector<4x8x1xf32>
      %c0_58 = arith.constant 0 : index
      %c0_59 = arith.constant 0 : index
      %c0_60 = arith.constant 0 : index
      %69 = vector.load %arg17[%c0_58, %c0_59, %c0_60] : memref<4x8x1xf32, #tpu.memory_space<vmem>>, vector<4x8x1xf32>
      tpu.vector_store %arg17[%c0_58, %c0_59, %c0_60], %68 {strides = array<i32>} : memref<4x8x1xf32, #tpu.memory_space<vmem>>, vector<4x8x1xf32>,
      %cst_61 = arith.constant 0.000000e+00 : f32
      %70 = vector.broadcast %cst_61 : f32 to vector<4x8x8xf32>
      %c0_62 = arith.constant 0 : index
      %c0_63 = arith.constant 0 : index
      %c0_64 = arith.constant 0 : index
      %71 = vector.load %arg18[%c0_62, %c0_63, %c0_64] : memref<4x8x8xf32, #tpu.memory_space<vmem>>, vector<4x8x8xf32>
      tpu.vector_store %arg18[%c0_62, %c0_63, %c0_64], %70 {strides = array<i32>} : memref<4x8x8xf32, #tpu.memory_space<vmem>>, vector<4x8x8xf32>,
    } else {
    }
    %c0 = arith.constant 0 : index
    %c0_1 = arith.constant 0 : index
    %c0_2 = arith.constant 0 : index
    %3 = vector.load %arg4[%c0, %c0_1, %c0_2] : memref<1x8x32xbf16, #tpu.memory_space<vmem>>, vector<1x8x32xbf16>
    %4 = vector.shape_cast %3 : vector<1x8x32xbf16> to vector<8x32xbf16>
    %c0_3 = arith.constant 0 : index
    %c0_4 = arith.constant 0 : index
    %5 = vector.load %arg7[%c0_3, %c0_4] : memref<32x32xbf16, #tpu.memory_space<vmem>>, vector<32x32xbf16>
    %cst = arith.constant dense<0.000000e+00> : vector<8x32xf32>
    %6 = tpu.matmul %4, %5, %cst {dimension_numbers = #tpu.dot_dimension_numbers<[1], [0], [0], [1], [0, 0, 1, 1], [], []>} : vector<8x32xbf16>, vector<32x32xbf16>, vector<8x32xf32> -> vector<8x32xf32>
    %c0_5 = arith.constant 0 : index
    %c0_6 = arith.constant 0 : index
    %7 = vector.load %arg8[%c0_5, %c0_6] : memref<1x32xf32, #tpu.memory_space<vmem>>, vector<1x32xf32>
    %8 = vector.broadcast %7 : vector<1x32xf32> to vector<8x32xf32>
    %9 = arith.addf %6, %8 : vector<8x32xf32>
    %c0_7 = arith.constant 0 : index
    %c0_8 = arith.constant 0 : index
    %10 = vector.load %arg9[%c0_7, %c0_8] : memref<32x32xbf16, #tpu.memory_space<vmem>>, vector<32x32xbf16>
    %cst_9 = arith.constant dense<0.000000e+00> : vector<8x32xf32>
    %11 = tpu.matmul %4, %10, %cst_9 {dimension_numbers = #tpu.dot_dimension_numbers<[1], [0], [0], [1], [0, 0, 1, 1], [], []>} : vector<8x32xbf16>, vector<32x32xbf16>, vector<8x32xf32> -> vector<8x32xf32>
    %c0_10 = arith.constant 0 : index
    %c0_11 = arith.constant 0 : index
    %12 = vector.load %arg10[%c0_10, %c0_11] : memref<1x32xf32, #tpu.memory_space<vmem>>, vector<1x32xf32>
    %13 = vector.broadcast %12 : vector<1x32xf32> to vector<8x32xf32>
    %14 = arith.addf %11, %13 : vector<8x32xf32>
    %15 = vector.shape_cast %9 : vector<8x32xf32> to vector<8x4x8xf32>
    %16 = tpu.transpose %15, [1, 0, 2] : vector<8x4x8xf32> -> vector<4x8x8xf32>
    %17 = vector.shape_cast %14 : vector<8x32xf32> to vector<8x4x8xf32>
    %18 = tpu.transpose %17, [1, 0, 2] : vector<8x4x8xf32> -> vector<4x8x8xf32>
    %19 = arith.truncf %16 : vector<4x8x8xf32> to vector<4x8x8xbf16>
    %20 = arith.truncf %18 : vector<4x8x8xf32> to vector<4x8x8xbf16>
    %c0_12 = arith.constant 0 : index
    %c0_13 = arith.constant 0 : index
    %c0_14 = arith.constant 0 : index
    %21 = vector.load %arg15[%c0_12, %c0_13, %c0_14] : memref<4x8x8xbf16, #tpu.memory_space<vmem>>, vector<4x8x8xbf16>
    "tpu.trace_start"() <{level = 10 : i32, message = "hqd,hkd->hqk"}> : () -> ()
    %cst_15 = arith.constant dense<0.000000e+00> : vector<4x8x8xf32>
    %22 = tpu.matmul %21, %19, %cst_15 {dimension_numbers = #tpu.dot_dimension_numbers<[2], [2], [1], [1], [0, 0, 0, 1, 1, 1], [0], [0]>} : vector<4x8x8xbf16>, vector<4x8x8xbf16>, vector<4x8x8xf32> -> vector<4x8x8xf32>
    "tpu.trace_stop"() : () -> ()
    %c0_16 = arith.constant 0 : index
    %c0_17 = arith.constant 0 : index
    %23 = vector.load %arg13[%c0_16, %c0_17] : memref<8x8xf32, #tpu.memory_space<vmem>>, vector<8x8xf32>
    %24 = vector.shape_cast %23 : vector<8x8xf32> to vector<1x8x8xf32>
    %25 = vector.broadcast %24 : vector<1x8x8xf32> to vector<4x8x8xf32>
    %26 = arith.addf %22, %25 : vector<4x8x8xf32>
    %c0_18 = arith.constant 0 : index
    %c0_19 = arith.constant 0 : index
    %c0_20 = arith.constant 0 : index
    %27 = vector.load %arg16[%c0_18, %c0_19, %c0_20] : memref<4x8x1xf32, #tpu.memory_space<vmem>>, vector<4x8x1xf32>
    %cst_21 = arith.constant dense<0xFF800000> : vector<4x8xf32>
    %28 = vector.multi_reduction <maximumf>, %26, %cst_21 [2] : vector<4x8x8xf32> to vector<4x8xf32>
    %29 = vector.shape_cast %28 : vector<4x8xf32> to vector<4x8x1xf32>
    %30 = arith.maximumf %27, %29 : vector<4x8x1xf32>
    %31 = arith.subf %27, %30 : vector<4x8x1xf32>
    %32 = math.exp %31 : vector<4x8x1xf32>
    %33 = vector.broadcast %30 : vector<4x8x1xf32> to vector<4x8x8xf32>
    %34 = arith.subf %26, %33 : vector<4x8x8xf32>
    %35 = math.exp %34 : vector<4x8x8xf32>
    %c0_22 = arith.constant 0 : index
    %c0_23 = arith.constant 0 : index
    %c0_24 = arith.constant 0 : index
    %36 = vector.load %arg17[%c0_22, %c0_23, %c0_24] : memref<4x8x1xf32, #tpu.memory_space<vmem>>, vector<4x8x1xf32>
    %37 = arith.mulf %32, %36 : vector<4x8x1xf32>
    %cst_25 = arith.constant dense<0.000000e+00> : vector<4x8xf32>
    %38 = vector.multi_reduction <add>, %35, %cst_25 [2] : vector<4x8x8xf32> to vector<4x8xf32>
    %39 = vector.shape_cast %38 : vector<4x8xf32> to vector<4x8x1xf32>
    %40 = arith.addf %37, %39 : vector<4x8x1xf32>
    %c0_26 = arith.constant 0 : index
    %c0_27 = arith.constant 0 : index
    %c0_28 = arith.constant 0 : index
    %41 = vector.load %arg17[%c0_26, %c0_27, %c0_28] : memref<4x8x1xf32, #tpu.memory_space<vmem>>, vector<4x8x1xf32>
    tpu.vector_store %arg17[%c0_26, %c0_27, %c0_28], %40 {strides = array<i32>} : memref<4x8x1xf32, #tpu.memory_space<vmem>>, vector<4x8x1xf32>,
    %42 = arith.truncf %35 : vector<4x8x8xf32> to vector<4x8x8xbf16>
    "tpu.trace_start"() <{level = 10 : i32, message = "hqk,hkd->hqd"}> : () -> ()
    %cst_29 = arith.constant dense<0.000000e+00> : vector<4x8x8xf32>
    %43 = tpu.matmul %42, %20, %cst_29 {dimension_numbers = #tpu.dot_dimension_numbers<[2], [1], [1], [2], [0, 0, 0, 1, 1, 2], [0], [0]>} : vector<4x8x8xbf16>, vector<4x8x8xbf16>, vector<4x8x8xf32> -> vector<4x8x8xf32>
    "tpu.trace_stop"() : () -> ()
    %c0_30 = arith.constant 0 : index
    %c0_31 = arith.constant 0 : index
    %c0_32 = arith.constant 0 : index
    %44 = vector.load %arg18[%c0_30, %c0_31, %c0_32] : memref<4x8x8xf32, #tpu.memory_space<vmem>>, vector<4x8x8xf32>
    %45 = vector.broadcast %32 : vector<4x8x1xf32> to vector<4x8x8xf32>
    %46 = arith.mulf %45, %44 : vector<4x8x8xf32>
    %47 = arith.addf %46, %43 : vector<4x8x8xf32>
    %c0_33 = arith.constant 0 : index
    %c0_34 = arith.constant 0 : index
    %c0_35 = arith.constant 0 : index
    %48 = vector.load %arg18[%c0_33, %c0_34, %c0_35] : memref<4x8x8xf32, #tpu.memory_space<vmem>>, vector<4x8x8xf32>
    tpu.vector_store %arg18[%c0_33, %c0_34, %c0_35], %47 {strides = array<i32>} : memref<4x8x8xf32, #tpu.memory_space<vmem>>, vector<4x8x8xf32>,
    %c0_36 = arith.constant 0 : index
    %c0_37 = arith.constant 0 : index
    %c0_38 = arith.constant 0 : index
    %49 = vector.load %arg16[%c0_36, %c0_37, %c0_38] : memref<4x8x1xf32, #tpu.memory_space<vmem>>, vector<4x8x1xf32>
    tpu.vector_store %arg16[%c0_36, %c0_37, %c0_38], %30 {strides = array<i32>} : memref<4x8x1xf32, #tpu.memory_space<vmem>>, vector<4x8x1xf32>,
    %c0_i32_39 = arith.constant 0 : i32
    %50 = arith.cmpi eq, %arg2, %c0_i32_39 : i32
    %51 = arith.extui %50 : i1 to i32
    %c0_i32_40 = arith.constant 0 : i32
    %52 = arith.cmpi ne, %51, %c0_i32_40 : i32
    scf.if %52 {
      %c0_41 = arith.constant 0 : index
      %c0_42 = arith.constant 0 : index
      %c0_43 = arith.constant 0 : index
      %53 = vector.load %arg17[%c0_41, %c0_42, %c0_43] : memref<4x8x1xf32, #tpu.memory_space<vmem>>, vector<4x8x1xf32>
      %54 = tpu.reciprocal %53 {approx = true} : vector<4x8x1xf32> -> vector<4x8x1xf32>
      %c0_44 = arith.constant 0 : index
      %c0_45 = arith.constant 0 : index
      %c0_46 = arith.constant 0 : index
      %55 = vector.load %arg18[%c0_44, %c0_45, %c0_46] : memref<4x8x8xf32, #tpu.memory_space<vmem>>, vector<4x8x8xf32>
      %56 = vector.broadcast %54 : vector<4x8x1xf32> to vector<4x8x8xf32>
      %57 = arith.mulf %55, %56 : vector<4x8x8xf32>
      %58 = tpu.transpose %57, [1, 0, 2] : vector<4x8x8xf32> -> vector<8x4x8xf32>
      %59 = vector.shape_cast %58 : vector<8x4x8xf32> to vector<8x32xf32>
      %60 = arith.truncf %59 : vector<8x32xf32> to vector<8x32xbf16>
      %c0_47 = arith.constant 0 : index
      %c0_48 = arith.constant 0 : index
      %61 = vector.load %arg11[%c0_47, %c0_48] : memref<32x32xbf16, #tpu.memory_space<vmem>>, vector<32x32xbf16>
      %cst_49 = arith.constant dense<0.000000e+00> : vector<8x32xf32>
      %62 = tpu.matmul %60, %61, %cst_49 {dimension_numbers = #tpu.dot_dimension_numbers<[1], [0], [0], [1], [0, 0, 1, 1], [], []>} : vector<8x32xbf16>, vector<32x32xbf16>, vector<8x32xf32> -> vector<8x32xf32>
      %c0_50 = arith.constant 0 : index
      %c0_51 = arith.constant 0 : index
      %63 = vector.load %arg12[%c0_50, %c0_51] : memref<1x32xf32, #tpu.memory_space<vmem>>, vector<1x32xf32>
      %64 = vector.broadcast %63 : vector<1x32xf32> to vector<8x32xf32>
      %65 = arith.addf %62, %64 : vector<8x32xf32>
      %c0_52 = arith.constant 0 : index
      %c0_53 = arith.constant 0 : index
      %c0_54 = arith.constant 0 : index
      %66 = vector.load %arg14[%c0_52, %c0_53, %c0_54] : memref<1x8x32xf32, #tpu.memory_space<vmem>>, vector<1x8x32xf32>
      %67 = vector.shape_cast %66 : vector<1x8x32xf32> to vector<8x32xf32>
      %68 = vector.shape_cast %65 : vector<8x32xf32> to vector<1x8x32xf32>
      tpu.vector_store %arg14[%c0_52, %c0_53, %c0_54], %68 {strides = array<i32>} : memref<1x8x32xf32, #tpu.memory_space<vmem>>, vector<1x8x32xf32>,
    } else {
    }
    return
  }
  func.func @transform_0(%arg0: i32, %arg1: i32, %arg2: i32) -> (i32, i32, i32) {
    %c0_i32 = arith.constant 0 : i32
    %c0_i32_0 = arith.constant 0 : i32
    return %arg0, %arg1, %c0_i32 : i32, i32, i32
  }
  func.func @transform_1(%arg0: i32, %arg1: i32, %arg2: i32) -> (i32, i32, i32) {
    %c0_i32 = arith.constant 0 : i32
    %c0_i32_0 = arith.constant 0 : i32
    return %arg0, %arg2, %c0_i32 : i32, i32, i32
  }
  func.func @transform_2(%arg0: i32, %arg1: i32, %arg2: i32) -> (i32, i32) {
    %c0_i32 = arith.constant 0 : i32
    %c0_i32_0 = arith.constant 0 : i32
    %c0_i32_1 = arith.constant 0 : i32
    return %c0_i32, %c0_i32_0 : i32, i32
  }
  func.func @transform_3(%arg0: i32, %arg1: i32, %arg2: i32) -> (i32, i32) {
    %c0_i32 = arith.constant 0 : i32
    %c0_i32_0 = arith.constant 0 : i32
    %c0_i32_1 = arith.constant 0 : i32
    return %c0_i32, %c0_i32_0 : i32, i32
  }
  func.func @transform_4(%arg0: i32, %arg1: i32, %arg2: i32) -> (i32, i32) {
    %c0_i32 = arith.constant 0 : i32
    %c0_i32_0 = arith.constant 0 : i32
    %c0_i32_1 = arith.constant 0 : i32
    return %c0_i32, %c0_i32_0 : i32, i32
  }
  func.func @transform_5(%arg0: i32, %arg1: i32, %arg2: i32) -> (i32, i32) {
    %c0_i32 = arith.constant 0 : i32
    %c0_i32_0 = arith.constant 0 : i32
    %c0_i32_1 = arith.constant 0 : i32
    return %c0_i32, %c0_i32_0 : i32, i32
  }
  func.func @transform_6(%arg0: i32, %arg1: i32, %arg2: i32) -> (i32, i32) {
    %c0_i32 = arith.constant 0 : i32
    %c0_i32_0 = arith.constant 0 : i32
    %c0_i32_1 = arith.constant 0 : i32
    return %c0_i32, %c0_i32_0 : i32, i32
  }
  func.func @transform_7(%arg0: i32, %arg1: i32, %arg2: i32) -> (i32, i32) {
    %c0_i32 = arith.constant 0 : i32
    %c0_i32_0 = arith.constant 0 : i32
    %c0_i32_1 = arith.constant 0 : i32
    return %c0_i32, %c0_i32_0 : i32, i32
  }
  func.func @transform_8(%arg0: i32, %arg1: i32, %arg2: i32) -> (i32, i32) {
    %c0_i32 = arith.constant 0 : i32
    %c0_i32_0 = arith.constant 0 : i32
    %c0_i32_1 = arith.constant 0 : i32
    return %c0_i32, %c0_i32_0 : i32, i32
  }
  func.func @transform_9(%arg0: i32, %arg1: i32, %arg2: i32) -> (i32, i32) {
    %c0_i32 = arith.constant 0 : i32
    %c0_i32_0 = arith.constant 0 : i32
    %c0_i32_1 = arith.constant 0 : i32
    return %c0_i32, %c0_i32_0 : i32, i32
  }
  func.func @transform_10(%arg0: i32, %arg1: i32, %arg2: i32) -> (i32, i32) {
    %c0_i32 = arith.constant 0 : i32
    return %arg1, %arg2 : i32, i32
  }
  func.func @transform_11(%arg0: i32, %arg1: i32, %arg2: i32) -> (i32, i32, i32) {
    %c0_i32 = arith.constant 0 : i32
    %c0_i32_0 = arith.constant 0 : i32
    return %arg0, %arg1, %c0_i32 : i32, i32, i32
  }
}

</mosaic_0001>

<llo_original>
// kernel: tpu_custom_call.1
$region0: #{tpu_custom_call.1}
  #allocation0 [shape = 'u32[]', space=smem, size = 0x4, offset = 0x4, fixed_abs, tag = 'smem constant byte address 0x4 - core index']
  #allocation1 [shape = 'u32[144,128]{1,0:T(1,128)}', space=vmem, size = 0x12000, scoped, tag = 'internal scratch']
  #allocation2 [shape = 'bf16[4,8,8]{2,1,0:T(8,128)(2,1)}', space=vmem, size = 0x2000, scoped, tag = 'scratch operand']
  #allocation3 [shape = 'f32[4,8,1]{2,1,0:T(8,128)}', space=vmem, size = 0x4000, scoped, tag = 'scratch operand']
  #allocation4 [shape = 'f32[4,8,1]{2,1,0:T(8,128)}', space=vmem, size = 0x4000, scoped, tag = 'scratch operand']
  #allocation5 [shape = 'f32[4,8,8]{2,1,0:T(8,128)}', space=vmem, size = 0x4000, scoped, tag = 'scratch operand']
  %s0 = inlined_call_operand.hbm [shape: bf16[2,8,32], index: 0, kind: input, shape index: {}]
  %s1 = inlined_call_operand.hbm [shape: bf16[2,8,32], index: 1, kind: input, shape index: {}]
  %s2 = inlined_call_operand.hbm [shape: bf16[32,32], index: 2, kind: input, shape index: {}]
  %s3 = inlined_call_operand.vmem [shape: f32[1,32], index: 3, kind: input, shape index: {}]
  %s4 = inlined_call_operand.hbm [shape: bf16[32,32], index: 4, kind: input, shape index: {}]
  %s5 = inlined_call_operand.vmem [shape: f32[1,32], index: 5, kind: input, shape index: {}]
  %s6 = inlined_call_operand.vmem [shape: bf16[32,32], index: 6, kind: input, shape index: {}]
  %s7 = inlined_call_operand.hbm [shape: f32[1,32], index: 7, kind: input, shape index: {}]
  %s8 = inlined_call_operand.hbm [shape: bf16[32,32], index: 8, kind: input, shape index: {}]
  %s9 = inlined_call_operand.vmem [shape: f32[1,32], index: 9, kind: input, shape index: {}]
  %s10 = inlined_call_operand.vmem [shape: f32[8,8], index: 10, kind: input, shape index: {}]
  %s11 = inlined_call_operand.hbm [shape: f32[2,8,32], index: 11, kind: output, shape index: {}]
  %s12 = sld [smem:[#allocation0]]
  $region109: #{tpu_custom_call.1} parent=0
    _
  %s14 = ssub.s32 1, %s12
  %s15 = scalar_select 0, %s14, %s12
  $region1: #{tpu_custom_call.1} parent=0
    #allocation6 [shape = 'u8[4096]{0}', space=vmem, size = 0x1000, scoped, tag = 'input window, operand 0']
    #allocation7 [shape = 's32[2]{0}', space=sflag, size = 0x8, scoped, tag = 'scoped memory for tpu_custom_call.1']
    #allocation8 [shape = 's32[2]{0}', space=sflag, size = 0x8, scoped, tag = 'scoped memory for tpu_custom_call.1']
    #allocation9 [shape = 'u8[4096]{0}', space=vmem, size = 0x1000, scoped, tag = 'input window, operand 1']
    #allocation10 [shape = 's32[2]{0}', space=sflag, size = 0x8, scoped, tag = 'scoped memory for tpu_custom_call.1']
    #allocation11 [shape = 'u8[8192]{0}', space=vmem, size = 0x2000, scoped, tag = 'input window, operand 2, single buffered']
    #allocation12 [shape = 'u8[8192]{0}', space=vmem, size = 0x2000, scoped, tag = 'input window, operand 4, single buffered']
    #allocation13 [shape = 's32[1]{0}', space=sflag, size = 0x4, scoped, tag = 'scoped memory for tpu_custom_call.1']
    #allocation14 [shape = 'u8[512]{0}', space=vmem, size = 0x400, scoped, tag = 'input window, operand 7, single buffered']
    #allocation15 [shape = 'u8[8192]{0}', space=vmem, size = 0x2000, scoped, tag = 'input window, operand 8, single buffered']
    #allocation16 [shape = 's32[1]{0}', space=sflag, size = 0x4, scoped, tag = 'scoped memory for tpu_custom_call.1']
    #allocation17 [shape = 'u8[8192]{0}', space=vmem, size = 0x2000, scoped, tag = 'output window, operand 0']
    %16 = vsyncpa [#allocation7], 0
    %s17 = scalar_lea.sflag [#allocation7], 1
    %18 = vsyncpa %s17, 0
    %19 = vsyncpa [#allocation10], 0
    %s20 = scalar_lea.sflag [#allocation10], 1
    %21 = vsyncpa %s20, 0
    %22 = vsyncpa [#allocation13], 0
    %23 = vsyncpa [#allocation16], 0
    %24 = vsyncpa [#allocation8], 0
    %s25 = scalar_lea.sflag [#allocation8], 1
    %26 = vsyncpa %s25, 0
    loop: start=0, step=1, limit=4
    $region2: #{tpu_custom_call.1} parent=1 // loop_pre_header
      _
    $region3: #{tpu_custom_call.1} parent=1 // loop_header
      %s28 = sphi 0, %s32
      %p29 = scmp.ge.s32.totalorder %s28, 4
      %s35 = sphi 0, %s54
      %s36 = sphi 0, %s50
      %s37 = sphi 0, %s46
      %s38 = sphi 0, %s35
      %s39 = sphi 0, %s36
      %s40 = sphi 0, %s37
      %s41 = sphi 0, %s38
      %s42 = sphi 0, %s39
      %s43 = sphi 0, %s40
      %s59 = sphi 0, %s61
      %s62 = sphi 0, %s59
      %s63 = sphi 0, %s62
      %s79 = sphi 0, %s63
      %s87 = sphi 0, %s89
      %s90 = sphi 0, %s87
      %s91 = sphi 0, %s90
      %s107 = sphi 0, %s91
      %s111 = sphi 0, %s111
      %s113 = sphi 0, %s111
      %s114 = sphi 0, %s113
      %s128 = sphi 0, %s114
      %s132 = sphi 0, %s132
      %s134 = sphi 0, %s132
      %s135 = sphi 0, %s134
      %s149 = sphi 0, %s135
      %s153 = sphi 0, %s153
      %s155 = sphi 0, %s153
      %s156 = sphi 0, %s155
      %s170 = sphi 0, %s156
      %s174 = sphi 0, %s174
      %s176 = sphi 0, %s174
      %s177 = sphi 0, %s176
      %s191 = sphi 0, %s177
      %s195 = sphi 0, %s195
      %s197 = sphi 0, %s195
      %s198 = sphi 0, %s197
      %s212 = sphi 0, %s198
      %s216 = sphi 0, %s216
      %s218 = sphi 0, %s216
      %s219 = sphi 0, %s218
      %s233 = sphi 0, %s219
      %s237 = sphi 0, %s237
      %s239 = sphi 0, %s237
      %s240 = sphi 0, %s239
      %s254 = sphi 0, %s240
      %s258 = sphi 0, %s258
      %s260 = sphi 0, %s258
      %s261 = sphi 0, %s260
      %s275 = sphi 0, %s261
      %s283 = sphi 0, %s285
      %s286 = sphi 0, %s283
      %s287 = sphi 0, %s286
      %s303 = sphi 0, %s287
      %s311 = sphi 0, %s313
      %s314 = sphi 0, %s311
      %s315 = sphi 0, %s314
      %s331 = sphi 0, %s315
    $region4: #{tpu_custom_call.1} parent=1 // loop_header_branch
      %31 = sbr.rel (%p29) target = $region8
    $region5: #{tpu_custom_call.1} parent=1 // loop_body
      %s33 = ssub.s32 %s28, 1
      %s34 = ssub.s32 %s28, 2
      %s44 = sadd.s32 1, %s37
      %p45 = scmp.ge.s32.totalorder %s44, 1
      %s46 = scalar_select %p45, 0, %s44
      %s47 = sadd.s32 1, %s36
      %s48 = scalar_select %p45, %s47, %s36
      %p49 = scmp.ge.s32.totalorder %s48, 1
      %s50 = scalar_select %p49, 0, %s48
      %s51 = sadd.s32 1, %s35
      %s52 = scalar_select %p49, %s51, %s35
      %p53 = scmp.ge.s32.totalorder %s52, 2
      %s54 = scalar_select %p53, 0, %s52
      %s55 = ssub.s32 %s35, %s54
      %s56 = ssub.s32 %s36, %s50
      %s57 = sor.u32 %s55, %s56
      %p58 = scmp.eq.s32.totalorder %s57, 0
      %s60 = sadd.s32 %s59, 1
      %s61 = scalar_select %p58, %s59, %s60
      %p64 = pneg %p58
      %p65 = scmp.eq.s32.totalorder %s28, 1
      %p66 = por %p64, %p65
      %p67 = scmp.ne.s32.totalorder %s59, %s62
      %p68 = scmp.eq.s32.totalorder %s28, 0
      %p69 = por %p67, %p68
      %p70 = scmp.ne.s32.totalorder %s59, %s62
      %p71 = scmp.eq.s32.totalorder %s33, 1
      %p72 = por %p70, %p71
      %p73 = scmp.ne.s32.totalorder %s62, %s63
      %p74 = scmp.eq.s32.totalorder %s33, 0
      %p75 = por %p73, %p74
      %p76 = scmp.ne.s32.totalorder %s62, %s63
      %p77 = scmp.eq.s32.totalorder %s34, 1
      %p78 = por %p76, %p77
      %p80 = scmp.ne.s32.totalorder %s63, %s79
      %p81 = scmp.eq.s32.totalorder %s34, 0
      %p82 = por %p80, %p81
      %s83 = ssub.s32 %s35, %s54
      %s84 = ssub.s32 %s37, %s46
      %s85 = sor.u32 %s83, %s84
      %p86 = scmp.eq.s32.totalorder %s85, 0
      %s88 = sadd.s32 %s87, 1
      %s89 = scalar_select %p86, %s87, %s88
      %p92 = pneg %p86
      %p93 = scmp.eq.s32.totalorder %s28, 1
      %p94 = por %p92, %p93
      %p95 = scmp.ne.s32.totalorder %s87, %s90
      %p96 = scmp.eq.s32.totalorder %s28, 0
      %p97 = por %p95, %p96
      %p98 = scmp.ne.s32.totalorder %s87, %s90
      %p99 = scmp.eq.s32.totalorder %s33, 1
      %p100 = por %p98, %p99
      %p101 = scmp.ne.s32.totalorder %s90, %s91
      %p102 = scmp.eq.s32.totalorder %s33, 0
      %p103 = por %p101, %p102
      %p104 = scmp.ne.s32.totalorder %s90, %s91
      %p105 = scmp.eq.s32.totalorder %s34, 1
      %p106 = por %p104, %p105
      %p108 = scmp.ne.s32.totalorder %s91, %s107
      %p109 = scmp.eq.s32.totalorder %s34, 0
      %p110 = por %p108, %p109
      %s112 = sadd.s32 %s111, 1
      %p115 = scmp.eq.s32.totalorder %s28, 1
      %p116 = scmp.ne.s32.totalorder %s111, %s113
      %p117 = scmp.eq.s32.totalorder %s28, 0
      %p118 = por %p116, %p117
      %p119 = scmp.ne.s32.totalorder %s111, %s113
      %p120 = scmp.eq.s32.totalorder %s33, 1
      %p121 = por %p119, %p120
      %p122 = scmp.ne.s32.totalorder %s113, %s114
      %p123 = scmp.eq.s32.totalorder %s33, 0
      %p124 = por %p122, %p123
      %p125 = scmp.ne.s32.totalorder %s113, %s114
      %p126 = scmp.eq.s32.totalorder %s34, 1
      %p127 = por %p125, %p126
      %p129 = scmp.ne.s32.totalorder %s114, %s128
      %p130 = scmp.eq.s32.totalorder %s34, 0
      %p131 = por %p129, %p130
      %s133 = sadd.s32 %s132, 1
      %p136 = scmp.eq.s32.totalorder %s28, 1
      %p137 = scmp.ne.s32.totalorder %s132, %s134
      %p138 = scmp.eq.s32.totalorder %s28, 0
      %p139 = por %p137, %p138
      %p140 = scmp.ne.s32.totalorder %s132, %s134
      %p141 = scmp.eq.s32.totalorder %s33, 1
      %p142 = por %p140, %p141
      %p143 = scmp.ne.s32.totalorder %s134, %s135
      %p144 = scmp.eq.s32.totalorder %s33, 0
      %p145 = por %p143, %p144
      %p146 = scmp.ne.s32.totalorder %s134, %s135
      %p147 = scmp.eq.s32.totalorder %s34, 1
      %p148 = por %p146, %p147
      %p150 = scmp.ne.s32.totalorder %s135, %s149
      %p151 = scmp.eq.s32.totalorder %s34, 0
      %p152 = por %p150, %p151
      %s154 = sadd.s32 %s153, 1
      %p157 = scmp.eq.s32.totalorder %s28, 1
      %p158 = scmp.ne.s32.totalorder %s153, %s155
      %p159 = scmp.eq.s32.totalorder %s28, 0
      %p160 = por %p158, %p159
      %p161 = scmp.ne.s32.totalorder %s153, %s155
      %p162 = scmp.eq.s32.totalorder %s33, 1
      %p163 = por %p161, %p162
      %p164 = scmp.ne.s32.totalorder %s155, %s156
      %p165 = scmp.eq.s32.totalorder %s33, 0
      %p166 = por %p164, %p165
      %p167 = scmp.ne.s32.totalorder %s155, %s156
      %p168 = scmp.eq.s32.totalorder %s34, 1
      %p169 = por %p167, %p168
      %p171 = scmp.ne.s32.totalorder %s156, %s170
      %p172 = scmp.eq.s32.totalorder %s34, 0
      %p173 = por %p171, %p172
      %s175 = sadd.s32 %s174, 1
      %p178 = scmp.eq.s32.totalorder %s28, 1
      %p179 = scmp.ne.s32.totalorder %s174, %s176
      %p180 = scmp.eq.s32.totalorder %s28, 0
      %p181 = por %p179, %p180
      %p182 = scmp.ne.s32.totalorder %s174, %s176
      %p183 = scmp.eq.s32.totalorder %s33, 1
      %p184 = por %p182, %p183
      %p185 = scmp.ne.s32.totalorder %s176, %s177
      %p186 = scmp.eq.s32.totalorder %s33, 0
      %p187 = por %p185, %p186
      %p188 = scmp.ne.s32.totalorder %s176, %s177
      %p189 = scmp.eq.s32.totalorder %s34, 1
      %p190 = por %p188, %p189
      %p192 = scmp.ne.s32.totalorder %s177, %s191
      %p193 = scmp.eq.s32.totalorder %s34, 0
      %p194 = por %p192, %p193
      %s196 = sadd.s32 %s195, 1
      %p199 = scmp.eq.s32.totalorder %s28, 1
      %p200 = scmp.ne.s32.totalorder %s195, %s197
      %p201 = scmp.eq.s32.totalorder %s28, 0
      %p202 = por %p200, %p201
      %p203 = scmp.ne.s32.totalorder %s195, %s197
      %p204 = scmp.eq.s32.totalorder %s33, 1
      %p205 = por %p203, %p204
      %p206 = scmp.ne.s32.totalorder %s197, %s198
      %p207 = scmp.eq.s32.totalorder %s33, 0
      %p208 = por %p206, %p207
      %p209 = scmp.ne.s32.totalorder %s197, %s198
      %p210 = scmp.eq.s32.totalorder %s34, 1
      %p211 = por %p209, %p210
      %p213 = scmp.ne.s32.totalorder %s198, %s212
      %p214 = scmp.eq.s32.totalorder %s34, 0
      %p215 = por %p213, %p214
      %s217 = sadd.s32 %s216, 1
      %p220 = scmp.eq.s32.totalorder %s28, 1
      %p221 = scmp.ne.s32.totalorder %s216, %s218
      %p222 = scmp.eq.s32.totalorder %s28, 0
      %p223 = por %p221, %p222
      %p224 = scmp.ne.s32.totalorder %s216, %s218
      %p225 = scmp.eq.s32.totalorder %s33, 1
      %p226 = por %p224, %p225
      %p227 = scmp.ne.s32.totalorder %s218, %s219
      %p228 = scmp.eq.s32.totalorder %s33, 0
      %p229 = por %p227, %p228
      %p230 = scmp.ne.s32.totalorder %s218, %s219
      %p231 = scmp.eq.s32.totalorder %s34, 1
      %p232 = por %p230, %p231
      %p234 = scmp.ne.s32.totalorder %s219, %s233
      %p235 = scmp.eq.s32.totalorder %s34, 0
      %p236 = por %p234, %p235
      %s238 = sadd.s32 %s237, 1
      %p241 = scmp.eq.s32.totalorder %s28, 1
      %p242 = scmp.ne.s32.totalorder %s237, %s239
      %p243 = scmp.eq.s32.totalorder %s28, 0
      %p244 = por %p242, %p243
      %p245 = scmp.ne.s32.totalorder %s237, %s239
      %p246 = scmp.eq.s32.totalorder %s33, 1
      %p247 = por %p245, %p246
      %p248 = scmp.ne.s32.totalorder %s239, %s240
      %p249 = scmp.eq.s32.totalorder %s33, 0
      %p250 = por %p248, %p249
      %p251 = scmp.ne.s32.totalorder %s239, %s240
      %p252 = scmp.eq.s32.totalorder %s34, 1
      %p253 = por %p251, %p252
      %p255 = scmp.ne.s32.totalorder %s240, %s254
      %p256 = scmp.eq.s32.totalorder %s34, 0
      %p257 = por %p255, %p256
      %s259 = sadd.s32 %s258, 1
      %p262 = scmp.eq.s32.totalorder %s28, 1
      %p263 = scmp.ne.s32.totalorder %s258, %s260
      %p264 = scmp.eq.s32.totalorder %s28, 0
      %p265 = por %p263, %p264
      %p266 = scmp.ne.s32.totalorder %s258, %s260
      %p267 = scmp.eq.s32.totalorder %s33, 1
      %p268 = por %p266, %p267
      %p269 = scmp.ne.s32.totalorder %s260, %s261
      %p270 = scmp.eq.s32.totalorder %s33, 0
      %p271 = por %p269, %p270
      %p272 = scmp.ne.s32.totalorder %s260, %s261
      %p273 = scmp.eq.s32.totalorder %s34, 1
      %p274 = por %p272, %p273
      %p276 = scmp.ne.s32.totalorder %s261, %s275
      %p277 = scmp.eq.s32.totalorder %s34, 0
      %p278 = por %p276, %p277
      %s279 = ssub.s32 %s36, %s50
      %s280 = ssub.s32 %s37, %s46
      %s281 = sor.u32 %s279, %s280
      %p282 = scmp.eq.s32.totalorder %s281, 0
      %s284 = sadd.s32 %s283, 1
      %s285 = scalar_select %p282, %s283, %s284
      %p288 = pneg %p282
      %p289 = scmp.eq.s32.totalorder %s28, 1
      %p290 = por %p288, %p289
      %p291 = scmp.ne.s32.totalorder %s283, %s286
      %p292 = scmp.eq.s32.totalorder %s28, 0
      %p293 = por %p291, %p292
      %p294 = scmp.ne.s32.totalorder %s283, %s286
      %p295 = scmp.eq.s32.totalorder %s33, 1
      %p296 = por %p294, %p295
      %p297 = scmp.ne.s32.totalorder %s286, %s287
      %p298 = scmp.eq.s32.totalorder %s33, 0
      %p299 = por %p297, %p298
      %p300 = scmp.ne.s32.totalorder %s286, %s287
      %p301 = scmp.eq.s32.totalorder %s34, 1
      %p302 = por %p300, %p301
      %p304 = scmp.ne.s32.totalorder %s287, %s303
      %p305 = scmp.eq.s32.totalorder %s34, 0
      %p306 = por %p304, %p305
      %s307 = ssub.s32 %s35, %s54
      %s308 = ssub.s32 %s36, %s50
      %s309 = sor.u32 %s307, %s308
      %p310 = scmp.eq.s32.totalorder %s309, 0
      %s312 = sadd.s32 %s311, 1
      %s313 = scalar_select %p310, %s311, %s312
      %p316 = pneg %p310
      %p317 = scmp.eq.s32.totalorder %s28, 1
      %p318 = por %p316, %p317
      %p319 = scmp.ne.s32.totalorder %s311, %s314
      %p320 = scmp.eq.s32.totalorder %s28, 0
      %p321 = por %p319, %p320
      %p322 = scmp.ne.s32.totalorder %s311, %s314
      %p323 = scmp.eq.s32.totalorder %s33, 1
      %p324 = por %p322, %p323
      %p325 = scmp.ne.s32.totalorder %s314, %s315
      %p326 = scmp.eq.s32.totalorder %s33, 0
      %p327 = por %p325, %p326
      %p328 = scmp.ne.s32.totalorder %s314, %s315
      %p329 = scmp.eq.s32.totalorder %s34, 1
      %p330 = por %p328, %p329
      %p332 = scmp.ne.s32.totalorder %s315, %s331
      %p333 = scmp.eq.s32.totalorder %s34, 0
      %p334 = por %p332, %p333
      %p335 = scmp.le.s32.totalorder 1, %s28
      %p336 = scmp.lt.s32.totalorder %s28, 3
      %p337 = pnand %p335, %p336
      %p338 = pneg %p337
      // Predicated region
      $region9: #{tpu_custom_call.1} parent=5 // pred_check
        _
      $region10: #{tpu_custom_call.1} parent=5 // pred_check_branch
        %340 = sbr.rel (%p337) target = $region12
      $region11: #{tpu_custom_call.1} parent=5 // pred_region
        %s341 = ssub.s32 %s28, 1
        // Predicated region
        $region13: #{tpu_custom_call.1} parent=11 // pred_check
          %p342 = pneg %p124
        $region14: #{tpu_custom_call.1} parent=11 // pred_check_branch
          %344 = sbr.rel (%p342) target = $region16
        $region15: #{tpu_custom_call.1} parent=11 // pred_region
          %s346 = ssub.s32 256, 256
          %347 = vsyncadd [#allocation10], %s346
          %s348 = sshll.u32 [#allocation11], 4
          %s349 = int_to_ptr.vmem [resolvable:$true] %s348
          %354 = dma.hbm_to_vmem [thread:$0]  %s2, 256, %s349, [#allocation10], 64, 64, 4
        $region16: #{tpu_custom_call.1} parent=11 // pred_fallthru
          _
        // Predicated region
        $region17: #{tpu_custom_call.1} parent=11 // pred_check
          %p355 = pneg %p145
        $region18: #{tpu_custom_call.1} parent=11 // pred_check_branch
          %357 = sbr.rel (%p355) target = $region20
        $region19: #{tpu_custom_call.1} parent=11 // pred_region
          _
        $region20: #{tpu_custom_call.1} parent=11 // pred_fallthru
          _
        // Predicated region
        $region21: #{tpu_custom_call.1} parent=11 // pred_check
          %p358 = pneg %p166
        $region22: #{tpu_custom_call.1} parent=11 // pred_check_branch
          %360 = sbr.rel (%p358) target = $region24
        $region23: #{tpu_custom_call.1} parent=11 // pred_region
          %s362 = ssub.s32 256, 256
          %363 = vsyncadd [#allocation13], %s362
          %s364 = sshll.u32 [#allocation12], 4
          %s365 = int_to_ptr.vmem [resolvable:$true] %s364
          %370 = dma.hbm_to_vmem [thread:$0]  %s4, 256, %s365, [#allocation13], 64, 64, 4
        $region24: #{tpu_custom_call.1} parent=11 // pred_fallthru
          _
        // Predicated region
        $region25: #{tpu_custom_call.1} parent=11 // pred_check
          %p371 = pneg %p187
        $region26: #{tpu_custom_call.1} parent=11 // pred_check_branch
          %373 = sbr.rel (%p371) target = $region28
        $region27: #{tpu_custom_call.1} parent=11 // pred_region
          _
        $region28: #{tpu_custom_call.1} parent=11 // pred_fallthru
          _
        // Predicated region
        $region29: #{tpu_custom_call.1} parent=11 // pred_check
          %p374 = pneg %p208
        $region30: #{tpu_custom_call.1} parent=11 // pred_check_branch
          %376 = sbr.rel (%p374) target = $region32
        $region31: #{tpu_custom_call.1} parent=11 // pred_region
          _
        $region32: #{tpu_custom_call.1} parent=11 // pred_fallthru
          _
        // Predicated region
        $region33: #{tpu_custom_call.1} parent=11 // pred_check
          %p377 = pneg %p229
        $region34: #{tpu_custom_call.1} parent=11 // pred_check_branch
          %379 = sbr.rel (%p377) target = $region36
        $region35: #{tpu_custom_call.1} parent=11 // pred_region
          %s381 = ssub.s32 16, 16
          %382 = vsyncadd [#allocation13], %s381
          %s384 = sshll.u32 [#allocation14], 4
          %s385 = int_to_ptr.vmem [resolvable:$true] %s384
          %387 = dma.hbm_to_vmem [thread:$0]  %s7, 16, %s385, [#allocation13]
        $region36: #{tpu_custom_call.1} parent=11 // pred_fallthru
          _
        // Predicated region
        $region37: #{tpu_custom_call.1} parent=11 // pred_check
          %p388 = pneg %p250
        $region38: #{tpu_custom_call.1} parent=11 // pred_check_branch
          %390 = sbr.rel (%p388) target = $region40
        $region39: #{tpu_custom_call.1} parent=11 // pred_region
          %s392 = ssub.s32 256, 256
          %393 = vsyncadd [#allocation16], %s392
          %s394 = sshll.u32 [#allocation15], 4
          %s395 = int_to_ptr.vmem [resolvable:$true] %s394
          %400 = dma.hbm_to_vmem [thread:$0]  %s8, 256, %s395, [#allocation16], 64, 64, 4
        $region40: #{tpu_custom_call.1} parent=11 // pred_fallthru
          _
        // Predicated region
        $region41: #{tpu_custom_call.1} parent=11 // pred_check
          %p401 = pneg %p271
        $region42: #{tpu_custom_call.1} parent=11 // pred_check_branch
          %403 = sbr.rel (%p401) target = $region44
        $region43: #{tpu_custom_call.1} parent=11 // pred_region
          _
        $region44: #{tpu_custom_call.1} parent=11 // pred_fallthru
          _
        // Predicated region
        $region45: #{tpu_custom_call.1} parent=11 // pred_check
          %p404 = pneg %p299
        $region46: #{tpu_custom_call.1} parent=11 // pred_check_branch
          %406 = sbr.rel (%p404) target = $region48
        $region47: #{tpu_custom_call.1} parent=11 // pred_region
          %p407 = scmp.lt.s32.totalorder %s39, 0
          %s408 = scalar_select %p407, %s39, 0
          %p409 = scmp.lt.s32.totalorder %s40, 0
          %s410 = scalar_select %p409, %s40, 0
          %s411 = sadd.s32 %s410, %s408
          %s412 = smul.addr %s411, 8
          %s413 = scalar_lea.vmem %s10, %s412
        $region48: #{tpu_custom_call.1} parent=11 // pred_fallthru
          _
      $region12: #{tpu_custom_call.1} parent=5 // pred_fallthru
        _
      %p414 = scmp.lt.s32.totalorder %s28, 2
      // Predicated region
      $region49: #{tpu_custom_call.1} parent=5 // pred_check
        %p415 = pneg %p414
      $region50: #{tpu_custom_call.1} parent=5 // pred_check_branch
        %417 = sbr.rel (%p415) target = $region52
      $region51: #{tpu_custom_call.1} parent=5 // pred_region
        // Predicated region
        $region53: #{tpu_custom_call.1} parent=51 // pred_check
          %p418 = pneg %p69
        $region54: #{tpu_custom_call.1} parent=51 // pred_check_branch
          %420 = sbr.rel (%p418) target = $region56
        $region55: #{tpu_custom_call.1} parent=51 // pred_region
          %s421 = sand.u32 %s59, 1
          %s422 = scalar_lea.sflag [#allocation7], %s421
          %s423 = sand.u32 %s59, 1
          %s424 = smul.addr %s423, 4
          %s425 = scalar_lea.vmem [#allocation6], %s424
          %s427 = ssub.s32 64, 64
          %428 = vsyncadd %s422, %s427
          %s429 = sadd.s32 %s36, %s35
          %s430 = smul.addr %s429, 64
          %s431 = scalar_lea.hbm %s0, %s430
          %s433 = sshll.u32 %s425, 4
          %s434 = int_to_ptr.vmem [resolvable:$true] %s433
          %436 = dma.hbm_to_vmem [thread:$0]  %s431, 64, %s434, %s422
        $region56: #{tpu_custom_call.1} parent=51 // pred_fallthru
          _
        // Predicated region
        $region57: #{tpu_custom_call.1} parent=51 // pred_check
          %p437 = pneg %p97
        $region58: #{tpu_custom_call.1} parent=51 // pred_check_branch
          %439 = sbr.rel (%p437) target = $region60
        $region59: #{tpu_custom_call.1} parent=51 // pred_region
          %s440 = sand.u32 %s28, 1
          %s441 = scalar_lea.sflag [#allocation10], %s440
          %s442 = sand.u32 %s87, 1
          %s443 = smul.addr %s442, 4
          %s444 = scalar_lea.vmem [#allocation9], %s443
          %s446 = ssub.s32 64, 64
          %447 = vsyncadd %s441, %s446
          %s448 = sadd.s32 %s37, %s35
          %s449 = smul.addr %s448, 64
          %s450 = scalar_lea.hbm %s1, %s449
          %s452 = sshll.u32 %s444, 4
          %s453 = int_to_ptr.vmem [resolvable:$true] %s452
          %455 = dma.hbm_to_vmem [thread:$0]  %s450, 64, %s453, %s441
        $region60: #{tpu_custom_call.1} parent=51 // pred_fallthru
          _
      $region52: #{tpu_custom_call.1} parent=5 // pred_fallthru
        _
      %p456 = scmp.le.s32.totalorder 1, %s28
      %p457 = scmp.lt.s32.totalorder %s28, 3
      %p458 = pnand %p456, %p457
      %p459 = pneg %p458
      // Predicated region
      $region61: #{tpu_custom_call.1} parent=5 // pred_check
        _
      $region62: #{tpu_custom_call.1} parent=5 // pred_check_branch
        %461 = sbr.rel (%p458) target = $region64
      $region63: #{tpu_custom_call.1} parent=5 // pred_region
        %s462 = ssub.s32 %s28, 1
        %s463 = sand.u32 %s62, 1
        %s464 = scalar_lea.sflag [#allocation7], %s463
        %s465 = sand.u32 %s62, 1
        %s466 = smul.addr %s465, 4
        %s467 = scalar_lea.vmem [#allocation6], %s466
        // Predicated region
        $region65: #{tpu_custom_call.1} parent=63 // pred_check
          %p468 = pneg %p75
        $region66: #{tpu_custom_call.1} parent=63 // pred_check_branch
          %470 = sbr.rel (%p468) target = $region68
        $region67: #{tpu_custom_call.1} parent=63 // pred_region
          %471 = dma.done %s464, 64
        $region68: #{tpu_custom_call.1} parent=63 // pred_fallthru
          _
        %s472 = sand.u32 %s33, 1
        %s473 = scalar_lea.sflag [#allocation10], %s472
        %s474 = sand.u32 %s90, 1
        %s475 = smul.addr %s474, 4
        %s476 = scalar_lea.vmem [#allocation9], %s475
        // Predicated region
        $region69: #{tpu_custom_call.1} parent=63 // pred_check
          %p477 = pneg %p103
        $region70: #{tpu_custom_call.1} parent=63 // pred_check_branch
          %479 = sbr.rel (%p477) target = $region72
        $region71: #{tpu_custom_call.1} parent=63 // pred_region
          %480 = dma.done %s473, 64
        $region72: #{tpu_custom_call.1} parent=63 // pred_fallthru
          _
        // Predicated region
        $region73: #{tpu_custom_call.1} parent=63 // pred_check
          %p481 = pneg %p124
        $region74: #{tpu_custom_call.1} parent=63 // pred_check_branch
          %483 = sbr.rel (%p481) target = $region76
        $region75: #{tpu_custom_call.1} parent=63 // pred_region
          %484 = dma.done [#allocation10], 256
        $region76: #{tpu_custom_call.1} parent=63 // pred_fallthru
          _
        // Predicated region
        $region77: #{tpu_custom_call.1} parent=63 // pred_check
          %p485 = pneg %p166
        $region78: #{tpu_custom_call.1} parent=63 // pred_check_branch
          %487 = sbr.rel (%p485) target = $region80
        $region79: #{tpu_custom_call.1} parent=63 // pred_region
          %488 = dma.done [#allocation13], 256
        $region80: #{tpu_custom_call.1} parent=63 // pred_fallthru
          _
        // Predicated region
        $region81: #{tpu_custom_call.1} parent=63 // pred_check
          %p489 = pneg %p229
        $region82: #{tpu_custom_call.1} parent=63 // pred_check_branch
          %491 = sbr.rel (%p489) target = $region84
        $region83: #{tpu_custom_call.1} parent=63 // pred_region
          %492 = dma.done [#allocation13], 16
        $region84: #{tpu_custom_call.1} parent=63 // pred_fallthru
          _
        // Predicated region
        $region85: #{tpu_custom_call.1} parent=63 // pred_check
          %p493 = pneg %p250
        $region86: #{tpu_custom_call.1} parent=63 // pred_check_branch
          %495 = sbr.rel (%p493) target = $region88
        $region87: #{tpu_custom_call.1} parent=63 // pred_region
          %496 = dma.done [#allocation16], 256
        $region88: #{tpu_custom_call.1} parent=63 // pred_fallthru
          _
        %s497 = sand.u32 %s62, 1
        %s498 = scalar_lea.sflag [#allocation7], %s497
        %s499 = sand.u32 %s62, 1
        %s500 = smul.addr %s499, 4
        %s501 = scalar_lea.vmem [#allocation6], %s500
        %p502 = pneg %p75
        %p503 = pneg %p72
        %s504 = sand.u32 %s33, 1
        %s505 = scalar_lea.sflag [#allocation10], %s504
        %s506 = sand.u32 %s90, 1
        %s507 = smul.addr %s506, 4
        %s508 = scalar_lea.vmem [#allocation9], %s507
        %p509 = pneg %p103
        %p510 = pneg %p100
        %p511 = pneg %p124
        %p512 = pneg %p121
        %p513 = pneg %p145
        %p514 = pneg %p142
        %p515 = pneg %p166
        %p516 = pneg %p163
        %p517 = pneg %p187
        %p518 = pneg %p184
        %p519 = pneg %p208
        %p520 = pneg %p205
        %p521 = pneg %p229
        %p522 = pneg %p226
        %p523 = pneg %p250
        %p524 = pneg %p247
        %p525 = pneg %p271
        %p526 = pneg %p268
        %p527 = scmp.lt.s32.totalorder %s39, 0
        %s528 = scalar_select %p527, %s39, 0
        %p529 = scmp.lt.s32.totalorder %s40, 0
        %s530 = scalar_select %p529, %s40, 0
        %s531 = sadd.s32 %s530, %s528
        %s532 = smul.addr %s531, 8
        %s533 = scalar_lea.vmem %s10, %s532
        %p534 = pneg %p299
        %p535 = pneg %p296
        %p536 = pneg %p327
        %p537 = pneg %p324
        %s538 = sand.u32 %s314, 1
        %s539 = scalar_lea.sflag [#allocation8], %s538
        %s540 = sand.u32 %s314, 1
        %s541 = smul.addr %s540, 8
        %s542 = scalar_lea.vmem [#allocation17], %s541
        %p543 = scmp.lt.s32.totalorder %s39, 0
        %s544 = scalar_select %p543, %s39, 0
        %p545 = scmp.lt.s32.totalorder %s40, 0
        %s546 = scalar_select %p545, %s40, 0
        %s547 = sadd.s32 %s546, %s544
        %s548 = smul.addr %s547, 8
        %s549 = scalar_lea.vmem %s10, %s548
        %p551 = scmp.eq.s32.totalorder %s40, 0
        // Predicated region
        $region89: #{tpu_custom_call.1} parent=63 // pred_check
          %p552 = pneg %p551
        $region90: #{tpu_custom_call.1} parent=63 // pred_check_branch
          %554 = sbr.rel (%p552) target = $region92
        $region91: #{tpu_custom_call.1} parent=63 // pred_region
          %v555 = vld [vmem:[%s467] sm:$0xf]
          %v556 = vld [vmem:[#allocation11] sm:$0xf]
          %v557 = vld [vmem:[#allocation11 + $0x4] sm:$0xf]
          %v558 = vld [vmem:[#allocation11 + $0x8] sm:$0xf]
          %v559 = vld [vmem:[#allocation11 + $0xc] sm:$0xf]
          %v560 = vld [vmem:[%s3] sm:$0x1]
          %v562 = vlaneseq
          %v563 = vshrl.u32 %v562, 7
          %v564 = vsub.s32 0, %v563
          %v565 = vrot.slane %v560, %v564
          %v571 = vunpack.c.l.b16 %v556
          %v572 = vunpack.c.l.b16 %v557
          %v573 = vunpack.c.l.b16 %v558
          %v574 = vunpack.c.l.b16 %v559
          %v575 = vpack.c.b16 %v572, %v571
          %v576 = vpack.c.b16 %v574, %v573
          %vm579 = vcmask 261120
          %v581 = vsel %vm579, %v555, 0
          %583 = vmatprep.subr.bf16.mxu0 0
          %584 = vmatpush1.bf16.msra.mxu0 %v575
          %585 = vmatprep.subr.bf16.mxu0 0
          %586 = vmatpush1.bf16.msra.mxu0 %v576
          %587 = vmatprep.subr.bf16.mxu0 0
          %588 = vmatpush1.bf16.msra.mxu0 0
          %589 = vmatprep.subr.bf16.mxu0 0
          %590 = vmatpush1.bf16.msra.mxu0 0
          %591 = vmatprep.subr.bf16.mxu0 0
          %592 = vmatpush1.bf16.msra.mxu0 0
          %593 = vmatprep.subr.bf16.mxu0 0
          %594 = vmatpush1.bf16.msra.mxu0 0
          %595 = vmatprep.subr.bf16.mxu0 0
          %596 = vmatpush1.bf16.msra.mxu0 0
          %597 = vmatprep.subr.bf16.mxu0 0
          %598 = vmatpush1.bf16.msra.mxu0 0
          %599 = vmatprep.subr.bf16.mxu0 0
          %600 = vmatpush1.bf16.msra.mxu0 0
          %601 = vmatprep.subr.bf16.mxu0 0
          %602 = vmatpush1.bf16.msra.mxu0 0
          %603 = vmatprep.subr.bf16.mxu0 0
          %604 = vmatpush1.bf16.msra.mxu0 0
          %605 = vmatprep.subr.bf16.mxu0 0
          %606 = vmatpush1.bf16.msra.mxu0 0
          %607 = vmatprep.subr.bf16.mxu0 0
          %608 = vmatpush1.bf16.msra.mxu0 0
          %609 = vmatprep.subr.bf16.mxu0 0
          %610 = vmatpush1.bf16.msra.mxu0 0
          %611 = vmatprep.subr.bf16.mxu0 0
          %612 = vmatpush1.bf16.msra.mxu0 0
          %613 = vmatprep.subr.bf16.mxu0 0
          %614 = vmatpush1.bf16.msra.mxu0 0
          %615 = vmatprep.mubr.bf16.mxu0 0
          %616 = vmatmul.mubr.bf16.gmra.mrb[0].mxu0 %v581
          %v617 = vpop.f32.mrb[0].mxu0
          %v618 = vadd.f32 %v565, %v617
          %v619 = vpop.f32.mrb[0].mxu0
          %v620 = vpop.f32.mrb[0].mxu0
          %v621 = vpop.f32.mrb[0].mxu0
          %622 = vdwg.mxu0
          %v623 = vmul.f32 %v618, 0.35355338
          %625 = vrot.lane.b32.xlu0 %v623, 120
          %v626 = vpop.permute.xlu0 %625
          %628 = vrot.lane.b32.xlu0 %v623, 112
          %v629 = vpop.permute.xlu0 %628
          %631 = vrot.lane.b32.xlu0 %v623, 104
          %v632 = vpop.permute.xlu0 %631
          %v634 = vcombine.low %v623, %v629
          %v635 = vcombine.high %v623, %v629
          %v637 = vunpack.c.l.s4 1983009808
          %v638 = vunpack.c.0.s8 %v637
          %v639 = vlaneseq
          %v640 = vshrl.u32 %v639, 7
          %v641 = vsub.s32 %v638, %v640
          %v642 = vrot.slane %v634, %v641
          %v644 = vunpack.c.l.s4 1983009808
          %v645 = vunpack.c.0.s8 %v644
          %v646 = vlaneseq
          %v647 = vshrl.u32 %v646, 7
          %v648 = vsub.s32 %v645, %v647
          %v649 = vrot.slane %v635, %v648
          %v650 = vcombine.low %v626, %v632
          %v651 = vcombine.high %v626, %v632
          %v653 = vunpack.c.l.s4 1983009808
          %v654 = vunpack.c.0.s8 %v653
          %v655 = vlaneseq
          %v656 = vshrl.u32 %v655, 7
          %v657 = vsub.s32 %v654, %v656
          %v658 = vrot.slane %v650, %v657
          %v660 = vunpack.c.l.s4 1983009808
          %v661 = vunpack.c.0.s8 %v660
          %v662 = vlaneseq
          %v663 = vshrl.u32 %v662, 7
          %v664 = vsub.s32 %v661, %v663
          %v665 = vrot.slane %v651, %v664
          %v666 = vcombine.low %v642, %v658
          %v667 = vcombine.high %v642, %v658
          %v669 = vunpack.c.l.s4 1934713408
          %v670 = vunpack.c.0.s8 %v669
          %v671 = vlaneseq
          %v672 = vshrl.u32 %v671, 7
          %v673 = vsub.s32 %v670, %v672
          %v674 = vrot.slane %v666, %v673
          %v676 = vunpack.c.l.s4 1934713408
          %v677 = vunpack.c.0.s8 %v676
          %v678 = vlaneseq
          %v679 = vshrl.u32 %v678, 7
          %v680 = vsub.s32 %v677, %v679
          %v681 = vrot.slane %v667, %v680
          %v682 = vcombine.low %v649, %v665
          %v683 = vcombine.high %v649, %v665
          %v685 = vunpack.c.l.s4 1934713408
          %v686 = vunpack.c.0.s8 %v685
          %v687 = vlaneseq
          %v688 = vshrl.u32 %v687, 7
          %v689 = vsub.s32 %v686, %v688
          %v690 = vrot.slane %v682, %v689
          %v692 = vunpack.c.l.s4 1934713408
          %v693 = vunpack.c.0.s8 %v692
          %v694 = vlaneseq
          %v695 = vshrl.u32 %v694, 7
          %v696 = vsub.s32 %v693, %v695
          %v697 = vrot.slane %v683, %v696
          %v698 = vcombine.high %v674, 0.0
          %v699 = vcombine.high %v681, 0.0
          %v700 = vcombine.high %v690, 0.0
          %v701 = vcombine.high %v697, 0.0
          %v702 = vcombine.low %v674, %v681
          %v704 = vunpack.c.l.s4 1983009808
          %v705 = vunpack.c.0.s8 %v704
          %v706 = vlaneseq
          %v707 = vshrl.u32 %v706, 7
          %v708 = vsub.s32 %v705, %v707
          %v709 = vrot.slane %v702, %v708
          %v710 = vcombine.low %v698, %v699
          %v712 = vunpack.c.l.s4 1983009808
          %v713 = vunpack.c.0.s8 %v712
          %v714 = vlaneseq
          %v715 = vshrl.u32 %v714, 7
          %v716 = vsub.s32 %v713, %v715
          %v717 = vrot.slane %v710, %v716
          %v718 = vcombine.low %v690, %v697
          %v720 = vunpack.c.l.s4 1983009808
          %v721 = vunpack.c.0.s8 %v720
          %v722 = vlaneseq
          %v723 = vshrl.u32 %v722, 7
          %v724 = vsub.s32 %v721, %v723
          %v725 = vrot.slane %v718, %v724
          %v726 = vcombine.low %v700, %v701
          %v728 = vunpack.c.l.s4 1983009808
          %v729 = vunpack.c.0.s8 %v728
          %v730 = vlaneseq
          %v731 = vshrl.u32 %v730, 7
          %v732 = vsub.s32 %v729, %v731
          %v733 = vrot.slane %v726, %v732
          %v734 = vcombine.low %v709, %v717
          %v735 = vcombine.high %v709, %v717
          %v737 = vunpack.c.l.s4 1934713408
          %v738 = vunpack.c.0.s8 %v737
          %v739 = vlaneseq
          %v740 = vshrl.u32 %v739, 7
          %v741 = vsub.s32 %v738, %v740
          %v742 = vrot.slane %v734, %v741
          %v744 = vunpack.c.l.s4 1934713408
          %v745 = vunpack.c.0.s8 %v744
          %v746 = vlaneseq
          %v747 = vshrl.u32 %v746, 7
          %v748 = vsub.s32 %v745, %v747
          %v749 = vrot.slane %v735, %v748
          %v750 = vcombine.low %v725, %v733
          %v751 = vcombine.high %v725, %v733
          %v753 = vunpack.c.l.s4 1934713408
          %v754 = vunpack.c.0.s8 %v753
          %v755 = vlaneseq
          %v756 = vshrl.u32 %v755, 7
          %v757 = vsub.s32 %v754, %v756
          %v758 = vrot.slane %v750, %v757
          %v760 = vunpack.c.l.s4 1934713408
          %v761 = vunpack.c.0.s8 %v760
          %v762 = vlaneseq
          %v763 = vshrl.u32 %v762, 7
          %v764 = vsub.s32 %v761, %v763
          %v765 = vrot.slane %v751, %v764
          %v766 = vcombine.low %v742, %v758
          %v767 = vcombine.high %v742, %v758
          %v768 = vcombine.low %v749, %v765
          %v769 = vcombine.high %v749, %v765
          %v770 = vpack.c.bf16 %v766, %v766
          %v771 = vpack.c.bf16 %v767, %v767
          %v772 = vpack.c.bf16 %v768, %v768
          %v773 = vpack.c.bf16 %v769, %v769
          %vm774 = vcmask 60416
          %775 = vst.msk [vmem:[#allocation2] sm:$0xf] %vm774, %v770
          %776 = vst.msk [vmem:[#allocation2 + $0x4] sm:$0xf] %vm774, %v771
          %777 = vst.msk [vmem:[#allocation2 + $0x8] sm:$0xf] %vm774, %v772
          %778 = vst.msk [vmem:[#allocation2 + $0xc] sm:$0xf] %vm774, %v773
          %vm779 = vcmask 7168
          %780 = vst.msk [vmem:[#allocation3] sm:$0xff] %vm779, -inf
          %781 = vst.msk [vmem:[#allocation3 + $0x8] sm:$0xff] %vm779, -inf
          %782 = vst.msk [vmem:[#allocation3 + $0x10] sm:$0xff] %vm779, -inf
          %783 = vst.msk [vmem:[#allocation3 + $0x18] sm:$0xff] %vm779, -inf
          %784 = vst.msk [vmem:[#allocation4] sm:$0xff] %vm779, 0.0
          %785 = vst.msk [vmem:[#allocation4 + $0x8] sm:$0xff] %vm779, 0.0
          %786 = vst.msk [vmem:[#allocation4 + $0x10] sm:$0xff] %vm779, 0.0
          %787 = vst.msk [vmem:[#allocation4 + $0x18] sm:$0xff] %vm779, 0.0
          %vm788 = vcmask 64512
          %789 = vst.msk [vmem:[#allocation5] sm:$0xff] %vm788, 0.0
          %790 = vst.msk [vmem:[#allocation5 + $0x8] sm:$0xff] %vm788, 0.0
          %791 = vst.msk [vmem:[#allocation5 + $0x10] sm:$0xff] %vm788, 0.0
          %792 = vst.msk [vmem:[#allocation5 + $0x18] sm:$0xff] %vm788, 0.0
        $region92: #{tpu_custom_call.1} parent=63 // pred_fallthru
          _
        %v793 = vld [vmem:[%s476] sm:$0xf]
        %v794 = vld [vmem:[#allocation12] sm:$0xf]
        %v795 = vld [vmem:[#allocation12 + $0x4] sm:$0xf]
        %v796 = vld [vmem:[#allocation12 + $0x8] sm:$0xf]
        %v797 = vld [vmem:[#allocation12 + $0xc] sm:$0xf]
        %v798 = vld [vmem:[%s5] sm:$0x1]
        %v800 = vlaneseq
        %v801 = vshrl.u32 %v800, 7
        %v802 = vsub.s32 0, %v801
        %v803 = vrot.slane %v798, %v802
        %v809 = vunpack.c.l.b16 %v794
        %v810 = vunpack.c.l.b16 %v795
        %v811 = vunpack.c.l.b16 %v796
        %v812 = vunpack.c.l.b16 %v797
        %v813 = vpack.c.b16 %v810, %v809
        %v814 = vpack.c.b16 %v812, %v811
        %vm817 = vcmask 261120
        %v819 = vsel %vm817, %v793, 0
        %821 = vmatprep.subr.bf16.mxu0 0
        %822 = vmatpush1.bf16.msra.mxu0 %v813
        %823 = vmatprep.subr.bf16.mxu0 0
        %824 = vmatpush1.bf16.msra.mxu0 %v814
        %825 = vmatprep.subr.bf16.mxu0 0
        %826 = vmatpush1.bf16.msra.mxu0 0
        %827 = vmatprep.subr.bf16.mxu0 0
        %828 = vmatpush1.bf16.msra.mxu0 0
        %829 = vmatprep.subr.bf16.mxu0 0
        %830 = vmatpush1.bf16.msra.mxu0 0
        %831 = vmatprep.subr.bf16.mxu0 0
        %832 = vmatpush1.bf16.msra.mxu0 0
        %833 = vmatprep.subr.bf16.mxu0 0
        %834 = vmatpush1.bf16.msra.mxu0 0
        %835 = vmatprep.subr.bf16.mxu0 0
        %836 = vmatpush1.bf16.msra.mxu0 0
        %837 = vmatprep.subr.bf16.mxu0 0
        %838 = vmatpush1.bf16.msra.mxu0 0
        %839 = vmatprep.subr.bf16.mxu0 0
        %840 = vmatpush1.bf16.msra.mxu0 0
        %841 = vmatprep.subr.bf16.mxu0 0
        %842 = vmatpush1.bf16.msra.mxu0 0
        %843 = vmatprep.subr.bf16.mxu0 0
        %844 = vmatpush1.bf16.msra.mxu0 0
        %845 = vmatprep.subr.bf16.mxu0 0
        %846 = vmatpush1.bf16.msra.mxu0 0
        %847 = vmatprep.subr.bf16.mxu0 0
        %848 = vmatpush1.bf16.msra.mxu0 0
        %849 = vmatprep.subr.bf16.mxu0 0
        %850 = vmatpush1.bf16.msra.mxu0 0
        %851 = vmatprep.subr.bf16.mxu0 0
        %852 = vmatpush1.bf16.msra.mxu0 0
        %853 = vmatprep.mubr.bf16.mxu0 0
        %854 = vmatmul.mubr.bf16.gmra.mrb[0].mxu0 %v819
        %v855 = vpop.f32.mrb[0].mxu0
        %v856 = vadd.f32 %v803, %v855
        %v857 = vpop.f32.mrb[0].mxu0
        %v858 = vpop.f32.mrb[0].mxu0
        %v859 = vpop.f32.mrb[0].mxu0
        %860 = vdwg.mxu0
        %v861 = vld [vmem:[%s6] sm:$0xf]
        %v862 = vld [vmem:[%s6 + $0x4] sm:$0xf]
        %v863 = vld [vmem:[%s6 + $0x8] sm:$0xf]
        %v864 = vld [vmem:[%s6 + $0xc] sm:$0xf]
        %v865 = vld [vmem:[#allocation14] sm:$0x1]
        %v867 = vlaneseq
        %v868 = vshrl.u32 %v867, 7
        %v869 = vsub.s32 0, %v868
        %v870 = vrot.slane %v865, %v869
        %v876 = vunpack.c.l.b16 %v861
        %v877 = vunpack.c.l.b16 %v862
        %v878 = vunpack.c.l.b16 %v863
        %v879 = vunpack.c.l.b16 %v864
        %v880 = vpack.c.b16 %v877, %v876
        %v881 = vpack.c.b16 %v879, %v878
        %884 = vmatprep.subr.bf16.mxu0 0
        %885 = vmatpush1.bf16.msra.mxu0 %v880
        %886 = vmatprep.subr.bf16.mxu0 0
        %887 = vmatpush1.bf16.msra.mxu0 %v881
        %888 = vmatprep.subr.bf16.mxu0 0
        %889 = vmatpush1.bf16.msra.mxu0 0
        %890 = vmatprep.subr.bf16.mxu0 0
        %891 = vmatpush1.bf16.msra.mxu0 0
        %892 = vmatprep.subr.bf16.mxu0 0
        %893 = vmatpush1.bf16.msra.mxu0 0
        %894 = vmatprep.subr.bf16.mxu0 0
        %895 = vmatpush1.bf16.msra.mxu0 0
        %896 = vmatprep.subr.bf16.mxu0 0
        %897 = vmatpush1.bf16.msra.mxu0 0
        %898 = vmatprep.subr.bf16.mxu0 0
        %899 = vmatpush1.bf16.msra.mxu0 0
        %900 = vmatprep.subr.bf16.mxu0 0
        %901 = vmatpush1.bf16.msra.mxu0 0
        %902 = vmatprep.subr.bf16.mxu0 0
        %903 = vmatpush1.bf16.msra.mxu0 0
        %904 = vmatprep.subr.bf16.mxu0 0
        %905 = vmatpush1.bf16.msra.mxu0 0
        %906 = vmatprep.subr.bf16.mxu0 0
        %907 = vmatpush1.bf16.msra.mxu0 0
        %908 = vmatprep.subr.bf16.mxu0 0
        %909 = vmatpush1.bf16.msra.mxu0 0
        %910 = vmatprep.subr.bf16.mxu0 0
        %911 = vmatpush1.bf16.msra.mxu0 0
        %912 = vmatprep.subr.bf16.mxu0 0
        %913 = vmatpush1.bf16.msra.mxu0 0
        %914 = vmatprep.subr.bf16.mxu0 0
        %915 = vmatpush1.bf16.msra.mxu0 0
        %916 = vmatprep.mubr.bf16.mxu0 0
        %917 = vmatmul.mubr.bf16.gmra.mrb[0].mxu0 %v819
        %v918 = vpop.f32.mrb[0].mxu0
        %v919 = vadd.f32 %v870, %v918
        %v920 = vpop.f32.mrb[0].mxu0
        %v921 = vpop.f32.mrb[0].mxu0
        %v922 = vpop.f32.mrb[0].mxu0
        %923 = vdwg.mxu0
        %925 = vrot.lane.b32.xlu0 %v856, 120
        %v926 = vpop.permute.xlu0 %925
        %928 = vrot.lane.b32.xlu0 %v856, 112
        %v929 = vpop.permute.xlu0 %928
        %931 = vrot.lane.b32.xlu0 %v856, 104
        %v932 = vpop.permute.xlu0 %931
        %v934 = vcombine.low %v856, %v929
        %v935 = vcombine.high %v856, %v929
        %v937 = vunpack.c.l.s4 1983009808
        %v938 = vunpack.c.0.s8 %v937
        %v939 = vlaneseq
        %v940 = vshrl.u32 %v939, 7
        %v941 = vsub.s32 %v938, %v940
        %v942 = vrot.slane %v934, %v941
        %v944 = vunpack.c.l.s4 1983009808
        %v945 = vunpack.c.0.s8 %v944
        %v946 = vlaneseq
        %v947 = vshrl.u32 %v946, 7
        %v948 = vsub.s32 %v945, %v947
        %v949 = vrot.slane %v935, %v948
        %v950 = vcombine.low %v926, %v932
        %v951 = vcombine.high %v926, %v932
        %v953 = vunpack.c.l.s4 1983009808
        %v954 = vunpack.c.0.s8 %v953
        %v955 = vlaneseq
        %v956 = vshrl.u32 %v955, 7
        %v957 = vsub.s32 %v954, %v956
        %v958 = vrot.slane %v950, %v957
        %v960 = vunpack.c.l.s4 1983009808
        %v961 = vunpack.c.0.s8 %v960
        %v962 = vlaneseq
        %v963 = vshrl.u32 %v962, 7
        %v964 = vsub.s32 %v961, %v963
        %v965 = vrot.slane %v951, %v964
        %v966 = vcombine.low %v942, %v958
        %v967 = vcombine.high %v942, %v958
        %v969 = vunpack.c.l.s4 1934713408
        %v970 = vunpack.c.0.s8 %v969
        %v971 = vlaneseq
        %v972 = vshrl.u32 %v971, 7
        %v973 = vsub.s32 %v970, %v972
        %v974 = vrot.slane %v966, %v973
        %v976 = vunpack.c.l.s4 1934713408
        %v977 = vunpack.c.0.s8 %v976
        %v978 = vlaneseq
        %v979 = vshrl.u32 %v978, 7
        %v980 = vsub.s32 %v977, %v979
        %v981 = vrot.slane %v967, %v980
        %v982 = vcombine.low %v949, %v965
        %v983 = vcombine.high %v949, %v965
        %v985 = vunpack.c.l.s4 1934713408
        %v986 = vunpack.c.0.s8 %v985
        %v987 = vlaneseq
        %v988 = vshrl.u32 %v987, 7
        %v989 = vsub.s32 %v986, %v988
        %v990 = vrot.slane %v982, %v989
        %v992 = vunpack.c.l.s4 1934713408
        %v993 = vunpack.c.0.s8 %v992
        %v994 = vlaneseq
        %v995 = vshrl.u32 %v994, 7
        %v996 = vsub.s32 %v993, %v995
        %v997 = vrot.slane %v983, %v996
        %v998 = vcombine.high %v974, 0.0
        %v999 = vcombine.high %v981, 0.0
        %v1000 = vcombine.high %v990, 0.0
        %v1001 = vcombine.high %v997, 0.0
        %v1002 = vcombine.low %v974, %v981
        %v1004 = vunpack.c.l.s4 1983009808
        %v1005 = vunpack.c.0.s8 %v1004
        %v1006 = vlaneseq
        %v1007 = vshrl.u32 %v1006, 7
        %v1008 = vsub.s32 %v1005, %v1007
        %v1009 = vrot.slane %v1002, %v1008
        %v1010 = vcombine.low %v998, %v999
        %v1012 = vunpack.c.l.s4 1983009808
        %v1013 = vunpack.c.0.s8 %v1012
        %v1014 = vlaneseq
        %v1015 = vshrl.u32 %v1014, 7
        %v1016 = vsub.s32 %v1013, %v1015
        %v1017 = vrot.slane %v1010, %v1016
        %v1018 = vcombine.low %v990, %v997
        %v1020 = vunpack.c.l.s4 1983009808
        %v1021 = vunpack.c.0.s8 %v1020
        %v1022 = vlaneseq
        %v1023 = vshrl.u32 %v1022, 7
        %v1024 = vsub.s32 %v1021, %v1023
        %v1025 = vrot.slane %v1018, %v1024
        %v1026 = vcombine.low %v1000, %v1001
        %v1028 = vunpack.c.l.s4 1983009808
        %v1029 = vunpack.c.0.s8 %v1028
        %v1030 = vlaneseq
        %v1031 = vshrl.u32 %v1030, 7
        %v1032 = vsub.s32 %v1029, %v1031
        %v1033 = vrot.slane %v1026, %v1032
        %v1034 = vcombine.low %v1009, %v1017
        %v1035 = vcombine.high %v1009, %v1017
        %v1037 = vunpack.c.l.s4 1934713408
        %v1038 = vunpack.c.0.s8 %v1037
        %v1039 = vlaneseq
        %v1040 = vshrl.u32 %v1039, 7
        %v1041 = vsub.s32 %v1038, %v1040
        %v1042 = vrot.slane %v1034, %v1041
        %v1044 = vunpack.c.l.s4 1934713408
        %v1045 = vunpack.c.0.s8 %v1044
        %v1046 = vlaneseq
        %v1047 = vshrl.u32 %v1046, 7
        %v1048 = vsub.s32 %v1045, %v1047
        %v1049 = vrot.slane %v1035, %v1048
        %v1050 = vcombine.low %v1025, %v1033
        %v1051 = vcombine.high %v1025, %v1033
        %v1053 = vunpack.c.l.s4 1934713408
        %v1054 = vunpack.c.0.s8 %v1053
        %v1055 = vlaneseq
        %v1056 = vshrl.u32 %v1055, 7
        %v1057 = vsub.s32 %v1054, %v1056
        %v1058 = vrot.slane %v1050, %v1057
        %v1060 = vunpack.c.l.s4 1934713408
        %v1061 = vunpack.c.0.s8 %v1060
        %v1062 = vlaneseq
        %v1063 = vshrl.u32 %v1062, 7
        %v1064 = vsub.s32 %v1061, %v1063
        %v1065 = vrot.slane %v1051, %v1064
        %v1066 = vcombine.low %v1042, %v1058
        %v1067 = vcombine.high %v1042, %v1058
        %v1068 = vcombine.low %v1049, %v1065
        %v1069 = vcombine.high %v1049, %v1065
        %1071 = vrot.lane.b32.xlu0 %v919, 120
        %v1072 = vpop.permute.xlu0 %1071
        %1074 = vrot.lane.b32.xlu0 %v919, 112
        %v1075 = vpop.permute.xlu0 %1074
        %1077 = vrot.lane.b32.xlu0 %v919, 104
        %v1078 = vpop.permute.xlu0 %1077
        %v1080 = vcombine.low %v919, %v1075
        %v1081 = vcombine.high %v919, %v1075
        %v1083 = vunpack.c.l.s4 1983009808
        %v1084 = vunpack.c.0.s8 %v1083
        %v1085 = vlaneseq
        %v1086 = vshrl.u32 %v1085, 7
        %v1087 = vsub.s32 %v1084, %v1086
        %v1088 = vrot.slane %v1080, %v1087
        %v1090 = vunpack.c.l.s4 1983009808
        %v1091 = vunpack.c.0.s8 %v1090
        %v1092 = vlaneseq
        %v1093 = vshrl.u32 %v1092, 7
        %v1094 = vsub.s32 %v1091, %v1093
        %v1095 = vrot.slane %v1081, %v1094
        %v1096 = vcombine.low %v1072, %v1078
        %v1097 = vcombine.high %v1072, %v1078
        %v1099 = vunpack.c.l.s4 1983009808
        %v1100 = vunpack.c.0.s8 %v1099
        %v1101 = vlaneseq
        %v1102 = vshrl.u32 %v1101, 7
        %v1103 = vsub.s32 %v1100, %v1102
        %v1104 = vrot.slane %v1096, %v1103
        %v1106 = vunpack.c.l.s4 1983009808
        %v1107 = vunpack.c.0.s8 %v1106
        %v1108 = vlaneseq
        %v1109 = vshrl.u32 %v1108, 7
        %v1110 = vsub.s32 %v1107, %v1109
        %v1111 = vrot.slane %v1097, %v1110
        %v1112 = vcombine.low %v1088, %v1104
        %v1113 = vcombine.high %v1088, %v1104
        %v1115 = vunpack.c.l.s4 1934713408
        %v1116 = vunpack.c.0.s8 %v1115
        %v1117 = vlaneseq
        %v1118 = vshrl.u32 %v1117, 7
        %v1119 = vsub.s32 %v1116, %v1118
        %v1120 = vrot.slane %v1112, %v1119
        %v1122 = vunpack.c.l.s4 1934713408
        %v1123 = vunpack.c.0.s8 %v1122
        %v1124 = vlaneseq
        %v1125 = vshrl.u32 %v1124, 7
        %v1126 = vsub.s32 %v1123, %v1125
        %v1127 = vrot.slane %v1113, %v1126
        %v1128 = vcombine.low %v1095, %v1111
        %v1129 = vcombine.high %v1095, %v1111
        %v1131 = vunpack.c.l.s4 1934713408
        %v1132 = vunpack.c.0.s8 %v1131
        %v1133 = vlaneseq
        %v1134 = vshrl.u32 %v1133, 7
        %v1135 = vsub.s32 %v1132, %v1134
        %v1136 = vrot.slane %v1128, %v1135
        %v1138 = vunpack.c.l.s4 1934713408
        %v1139 = vunpack.c.0.s8 %v1138
        %v1140 = vlaneseq
        %v1141 = vshrl.u32 %v1140, 7
        %v1142 = vsub.s32 %v1139, %v1141
        %v1143 = vrot.slane %v1129, %v1142
        %v1144 = vcombine.high %v1120, 0.0
        %v1145 = vcombine.high %v1127, 0.0
        %v1146 = vcombine.high %v1136, 0.0
        %v1147 = vcombine.high %v1143, 0.0
        %v1148 = vcombine.low %v1120, %v1127
        %v1150 = vunpack.c.l.s4 1983009808
        %v1151 = vunpack.c.0.s8 %v1150
        %v1152 = vlaneseq
        %v1153 = vshrl.u32 %v1152, 7
        %v1154 = vsub.s32 %v1151, %v1153
        %v1155 = vrot.slane %v1148, %v1154
        %v1156 = vcombine.low %v1144, %v1145
        %v1158 = vunpack.c.l.s4 1983009808
        %v1159 = vunpack.c.0.s8 %v1158
        %v1160 = vlaneseq
        %v1161 = vshrl.u32 %v1160, 7
        %v1162 = vsub.s32 %v1159, %v1161
        %v1163 = vrot.slane %v1156, %v1162
        %v1164 = vcombine.low %v1136, %v1143
        %v1166 = vunpack.c.l.s4 1983009808
        %v1167 = vunpack.c.0.s8 %v1166
        %v1168 = vlaneseq
        %v1169 = vshrl.u32 %v1168, 7
        %v1170 = vsub.s32 %v1167, %v1169
        %v1171 = vrot.slane %v1164, %v1170
        %v1172 = vcombine.low %v1146, %v1147
        %v1174 = vunpack.c.l.s4 1983009808
        %v1175 = vunpack.c.0.s8 %v1174
        %v1176 = vlaneseq
        %v1177 = vshrl.u32 %v1176, 7
        %v1178 = vsub.s32 %v1175, %v1177
        %v1179 = vrot.slane %v1172, %v1178
        %v1180 = vcombine.low %v1155, %v1163
        %v1181 = vcombine.high %v1155, %v1163
        %v1183 = vunpack.c.l.s4 1934713408
        %v1184 = vunpack.c.0.s8 %v1183
        %v1185 = vlaneseq
        %v1186 = vshrl.u32 %v1185, 7
        %v1187 = vsub.s32 %v1184, %v1186
        %v1188 = vrot.slane %v1180, %v1187
        %v1190 = vunpack.c.l.s4 1934713408
        %v1191 = vunpack.c.0.s8 %v1190
        %v1192 = vlaneseq
        %v1193 = vshrl.u32 %v1192, 7
        %v1194 = vsub.s32 %v1191, %v1193
        %v1195 = vrot.slane %v1181, %v1194
        %v1196 = vcombine.low %v1171, %v1179
        %v1197 = vcombine.high %v1171, %v1179
        %v1199 = vunpack.c.l.s4 1934713408
        %v1200 = vunpack.c.0.s8 %v1199
        %v1201 = vlaneseq
        %v1202 = vshrl.u32 %v1201, 7
        %v1203 = vsub.s32 %v1200, %v1202
        %v1204 = vrot.slane %v1196, %v1203
        %v1206 = vunpack.c.l.s4 1934713408
        %v1207 = vunpack.c.0.s8 %v1206
        %v1208 = vlaneseq
        %v1209 = vshrl.u32 %v1208, 7
        %v1210 = vsub.s32 %v1207, %v1209
        %v1211 = vrot.slane %v1197, %v1210
        %v1212 = vcombine.low %v1188, %v1204
        %v1213 = vcombine.high %v1188, %v1204
        %v1214 = vcombine.low %v1195, %v1211
        %v1215 = vcombine.high %v1195, %v1211
        %v1216 = vpack.c.bf16 %v1066, %v1066
        %v1217 = vpack.c.bf16 %v1067, %v1067
        %v1218 = vpack.c.bf16 %v1068, %v1068
        %v1219 = vpack.c.bf16 %v1069, %v1069
        %v1220 = vpack.c.bf16 %v1212, %v1212
        %v1221 = vpack.c.bf16 %v1213, %v1213
        %v1222 = vpack.c.bf16 %v1214, %v1214
        %v1223 = vpack.c.bf16 %v1215, %v1215
        %v1224 = vld [vmem:[#allocation2] sm:$0xf]
        %v1225 = vld [vmem:[#allocation2 + $0x4] sm:$0xf]
        %v1226 = vld [vmem:[#allocation2 + $0x8] sm:$0xf]
        %v1227 = vld [vmem:[#allocation2 + $0xc] sm:$0xf]
        %v1228 = vld [vmem:[%s549] sm:$0xff]
        %vm1229 = vcmask 64512
        %v1231 = vsel %vm1229, %v1224, 0
        %v1234 = vsel %vm1229, %v1216, 0
        %1236 = vmatprep.subr.bf16.mxu0 0
        %1237 = vmatpush1.bf16.xpose.msra.mxu0 %v1234
        %1238 = vmatprep.subr.bf16.mxu0 0
        %1239 = vmatpush1.bf16.xpose.msra.mxu0 0
        %1240 = vmatprep.subr.bf16.mxu0 0
        %1241 = vmatpush1.bf16.xpose.msra.mxu0 0
        %1242 = vmatprep.subr.bf16.mxu0 0
        %1243 = vmatpush1.bf16.xpose.msra.mxu0 0
        %1244 = vmatprep.subr.bf16.mxu0 0
        %1245 = vmatpush1.bf16.xpose.msra.mxu0 0
        %1246 = vmatprep.subr.bf16.mxu0 0
        %1247 = vmatpush1.bf16.xpose.msra.mxu0 0
        %1248 = vmatprep.subr.bf16.mxu0 0
        %1249 = vmatpush1.bf16.xpose.msra.mxu0 0
        %1250 = vmatprep.subr.bf16.mxu0 0
        %1251 = vmatpush1.bf16.xpose.msra.mxu0 0
        %1252 = vmatprep.subr.bf16.mxu0 0
        %1253 = vmatpush1.bf16.xpose.msra.mxu0 0
        %1254 = vmatprep.subr.bf16.mxu0 0
        %1255 = vmatpush1.bf16.xpose.msra.mxu0 0
        %1256 = vmatprep.subr.bf16.mxu0 0
        %1257 = vmatpush1.bf16.xpose.msra.mxu0 0
        %1258 = vmatprep.subr.bf16.mxu0 0
        %1259 = vmatpush1.bf16.xpose.msra.mxu0 0
        %1260 = vmatprep.subr.bf16.mxu0 0
        %1261 = vmatpush1.bf16.xpose.msra.mxu0 0
        %1262 = vmatprep.subr.bf16.mxu0 0
        %1263 = vmatpush1.bf16.xpose.msra.mxu0 0
        %1264 = vmatprep.subr.bf16.mxu0 0
        %1265 = vmatpush1.bf16.xpose.msra.mxu0 0
        %1266 = vmatprep.subr.bf16.mxu0 0
        %1267 = vmatpush1.bf16.xpose.msra.mxu0 0
        %1268 = vmatprep.mubr.bf16.mxu0 0
        %1269 = vmatmul.mubr.bf16.gmra.mrb[0].mxu0 %v1231
        %v1270 = vpop.f32.mrb[0].mxu0
        %v1271 = vadd.f32 %v1228, %v1270
        %v1272 = vpop.f32.mrb[0].mxu0
        %v1273 = vpop.f32.mrb[0].mxu0
        %v1274 = vpop.f32.mrb[0].mxu0
        %1275 = vdwg.mxu0
        %v1277 = vsel %vm1229, %v1225, 0
        %v1280 = vsel %vm1229, %v1217, 0
        %1282 = vmatprep.subr.bf16.mxu0 0
        %1283 = vmatpush1.bf16.xpose.msra.mxu0 %v1280
        %1284 = vmatprep.subr.bf16.mxu0 0
        %1285 = vmatpush1.bf16.xpose.msra.mxu0 0
        %1286 = vmatprep.subr.bf16.mxu0 0
        %1287 = vmatpush1.bf16.xpose.msra.mxu0 0
        %1288 = vmatprep.subr.bf16.mxu0 0
        %1289 = vmatpush1.bf16.xpose.msra.mxu0 0
        %1290 = vmatprep.subr.bf16.mxu0 0
        %1291 = vmatpush1.bf16.xpose.msra.mxu0 0
        %1292 = vmatprep.subr.bf16.mxu0 0
        %1293 = vmatpush1.bf16.xpose.msra.mxu0 0
        %1294 = vmatprep.subr.bf16.mxu0 0
        %1295 = vmatpush1.bf16.xpose.msra.mxu0 0
        %1296 = vmatprep.subr.bf16.mxu0 0
        %1297 = vmatpush1.bf16.xpose.msra.mxu0 0
        %1298 = vmatprep.subr.bf16.mxu0 0
        %1299 = vmatpush1.bf16.xpose.msra.mxu0 0
        %1300 = vmatprep.subr.bf16.mxu0 0
        %1301 = vmatpush1.bf16.xpose.msra.mxu0 0
        %1302 = vmatprep.subr.bf16.mxu0 0
        %1303 = vmatpush1.bf16.xpose.msra.mxu0 0
        %1304 = vmatprep.subr.bf16.mxu0 0
        %1305 = vmatpush1.bf16.xpose.msra.mxu0 0
        %1306 = vmatprep.subr.bf16.mxu0 0
        %1307 = vmatpush1.bf16.xpose.msra.mxu0 0
        %1308 = vmatprep.subr.bf16.mxu0 0
        %1309 = vmatpush1.bf16.xpose.msra.mxu0 0
        %1310 = vmatprep.subr.bf16.mxu0 0
        %1311 = vmatpush1.bf16.xpose.msra.mxu0 0
        %1312 = vmatprep.subr.bf16.mxu0 0
        %1313 = vmatpush1.bf16.xpose.msra.mxu0 0
        %1314 = vmatprep.mubr.bf16.mxu0 0
        %1315 = vmatmul.mubr.bf16.gmra.mrb[0].mxu0 %v1277
        %v1316 = vpop.f32.mrb[0].mxu0
        %v1317 = vadd.f32 %v1228, %v1316
        %v1318 = vpop.f32.mrb[0].mxu0
        %v1319 = vpop.f32.mrb[0].mxu0
        %v1320 = vpop.f32.mrb[0].mxu0
        %1321 = vdwg.mxu0
        %v1323 = vsel %vm1229, %v1226, 0
        %v1326 = vsel %vm1229, %v1218, 0
        %1328 = vmatprep.subr.bf16.mxu0 0
        %1329 = vmatpush1.bf16.xpose.msra.mxu0 %v1326
        %1330 = vmatprep.subr.bf16.mxu0 0
        %1331 = vmatpush1.bf16.xpose.msra.mxu0 0
        %1332 = vmatprep.subr.bf16.mxu0 0
        %1333 = vmatpush1.bf16.xpose.msra.mxu0 0
        %1334 = vmatprep.subr.bf16.mxu0 0
        %1335 = vmatpush1.bf16.xpose.msra.mxu0 0
        %1336 = vmatprep.subr.bf16.mxu0 0
        %1337 = vmatpush1.bf16.xpose.msra.mxu0 0
        %1338 = vmatprep.subr.bf16.mxu0 0
        %1339 = vmatpush1.bf16.xpose.msra.mxu0 0
        %1340 = vmatprep.subr.bf16.mxu0 0
        %1341 = vmatpush1.bf16.xpose.msra.mxu0 0
        %1342 = vmatprep.subr.bf16.mxu0 0
        %1343 = vmatpush1.bf16.xpose.msra.mxu0 0
        %1344 = vmatprep.subr.bf16.mxu0 0
        %1345 = vmatpush1.bf16.xpose.msra.mxu0 0
        %1346 = vmatprep.subr.bf16.mxu0 0
        %1347 = vmatpush1.bf16.xpose.msra.mxu0 0
        %1348 = vmatprep.subr.bf16.mxu0 0
        %1349 = vmatpush1.bf16.xpose.msra.mxu0 0
        %1350 = vmatprep.subr.bf16.mxu0 0
        %1351 = vmatpush1.bf16.xpose.msra.mxu0 0
        %1352 = vmatprep.subr.bf16.mxu0 0
        %1353 = vmatpush1.bf16.xpose.msra.mxu0 0
        %1354 = vmatprep.subr.bf16.mxu0 0
        %1355 = vmatpush1.bf16.xpose.msra.mxu0 0
        %1356 = vmatprep.subr.bf16.mxu0 0
        %1357 = vmatpush1.bf16.xpose.msra.mxu0 0
        %1358 = vmatprep.subr.bf16.mxu0 0
        %1359 = vmatpush1.bf16.xpose.msra.mxu0 0
        %1360 = vmatprep.mubr.bf16.mxu0 0
        %1361 = vmatmul.mubr.bf16.gmra.mrb[0].mxu0 %v1323
        %v1362 = vpop.f32.mrb[0].mxu0
        %v1363 = vadd.f32 %v1228, %v1362
        %v1364 = vpop.f32.mrb[0].mxu0
        %v1365 = vpop.f32.mrb[0].mxu0
        %v1366 = vpop.f32.mrb[0].mxu0
        %1367 = vdwg.mxu0
        %v1369 = vsel %vm1229, %v1227, 0
        %v1372 = vsel %vm1229, %v1219, 0
        %1374 = vmatprep.subr.bf16.mxu0 0
        %1375 = vmatpush1.bf16.xpose.msra.mxu0 %v1372
        %1376 = vmatprep.subr.bf16.mxu0 0
        %1377 = vmatpush1.bf16.xpose.msra.mxu0 0
        %1378 = vmatprep.subr.bf16.mxu0 0
        %1379 = vmatpush1.bf16.xpose.msra.mxu0 0
        %1380 = vmatprep.subr.bf16.mxu0 0
        %1381 = vmatpush1.bf16.xpose.msra.mxu0 0
        %1382 = vmatprep.subr.bf16.mxu0 0
        %1383 = vmatpush1.bf16.xpose.msra.mxu0 0
        %1384 = vmatprep.subr.bf16.mxu0 0
        %1385 = vmatpush1.bf16.xpose.msra.mxu0 0
        %1386 = vmatprep.subr.bf16.mxu0 0
        %1387 = vmatpush1.bf16.xpose.msra.mxu0 0
        %1388 = vmatprep.subr.bf16.mxu0 0
        %1389 = vmatpush1.bf16.xpose.msra.mxu0 0
        %1390 = vmatprep.subr.bf16.mxu0 0
        %1391 = vmatpush1.bf16.xpose.msra.mxu0 0
        %1392 = vmatprep.subr.bf16.mxu0 0
        %1393 = vmatpush1.bf16.xpose.msra.mxu0 0
        %1394 = vmatprep.subr.bf16.mxu0 0
        %1395 = vmatpush1.bf16.xpose.msra.mxu0 0
        %1396 = vmatprep.subr.bf16.mxu0 0
        %1397 = vmatpush1.bf16.xpose.msra.mxu0 0
        %1398 = vmatprep.subr.bf16.mxu0 0
        %1399 = vmatpush1.bf16.xpose.msra.mxu0 0
        %1400 = vmatprep.subr.bf16.mxu0 0
        %1401 = vmatpush1.bf16.xpose.msra.mxu0 0
        %1402 = vmatprep.subr.bf16.mxu0 0
        %1403 = vmatpush1.bf16.xpose.msra.mxu0 0
        %1404 = vmatprep.subr.bf16.mxu0 0
        %1405 = vmatpush1.bf16.xpose.msra.mxu0 0
        %1406 = vmatprep.mubr.bf16.mxu0 0
        %1407 = vmatmul.mubr.bf16.gmra.mrb[0].mxu0 %v1369
        %v1408 = vpop.f32.mrb[0].mxu0
        %v1409 = vadd.f32 %v1228, %v1408
        %v1410 = vpop.f32.mrb[0].mxu0
        %v1411 = vpop.f32.mrb[0].mxu0
        %v1412 = vpop.f32.mrb[0].mxu0
        %1413 = vdwg.mxu0
        %v1414 = vld [vmem:[#allocation3] sm:$0xff]
        %v1415 = vld [vmem:[#allocation3 + $0x8] sm:$0xff]
        %v1416 = vld [vmem:[#allocation3 + $0x10] sm:$0xff]
        %v1417 = vld [vmem:[#allocation3 + $0x18] sm:$0xff]
        %v1418 = vsel %vm1229, %v1271, -inf
        %1419 = vmax.xlane.f32.xlu0 %v1418
        %v1420 = vpop.xlane.xlu0 %1419
        %v1421 = vsel %vm1229, %v1317, -inf
        %1422 = vmax.xlane.f32.xlu0 %v1421
        %v1423 = vpop.xlane.xlu0 %1422
        %v1424 = vsel %vm1229, %v1363, -inf
        %1425 = vmax.xlane.f32.xlu0 %v1424
        %v1426 = vpop.xlane.xlu0 %1425
        %v1427 = vsel %vm1229, %v1409, -inf
        %1428 = vmax.xlane.f32.xlu0 %v1427
        %v1429 = vpop.xlane.xlu0 %1428
        %v1430 = vmax.f32 %v1414, %v1420
        %v1431 = vmax.f32 %v1415, %v1423
        %v1432 = vmax.f32 %v1416, %v1426
        %v1433 = vmax.f32 %v1417, %v1429
        %v1434 = vsub.f32 %v1414, %v1430
        %v1435 = vsub.f32 %v1415, %v1431
        %v1436 = vsub.f32 %v1416, %v1432
        %v1437 = vsub.f32 %v1417, %v1433
        %v1438 = vmul.f32 %v1434, 1.442695
        %v1439 = vpow.pop %v1438
        %v1440 = vmul.f32 %v1435, 1.442695
        %v1441 = vpow.pop %v1440
        %v1442 = vmul.f32 %v1436, 1.442695
        %v1443 = vpow.pop %v1442
        %v1444 = vmul.f32 %v1437, 1.442695
        %v1445 = vpow.pop %v1444
        %1447 = vset.pattern.permute.xlu0 0
        %1448 = vperm.xlu0 %1447, %v1430
        %v1449 = vpop.permute.xlu0 %1448
        %1452 = vset.pattern.permute.xlu0 0
        %1453 = vperm.xlu0 %1452, %v1431
        %v1454 = vpop.permute.xlu0 %1453
        %1457 = vset.pattern.permute.xlu0 0
        %1458 = vperm.xlu0 %1457, %v1432
        %v1459 = vpop.permute.xlu0 %1458
        %1462 = vset.pattern.permute.xlu0 0
        %1463 = vperm.xlu0 %1462, %v1433
        %v1464 = vpop.permute.xlu0 %1463
        %v1466 = vsub.f32 %v1271, %v1449
        %v1467 = vsub.f32 %v1317, %v1454
        %v1468 = vsub.f32 %v1363, %v1459
        %v1469 = vsub.f32 %v1409, %v1464
        %v1470 = vmul.f32 %v1466, 1.442695
        %v1471 = vpow.pop %v1470
        %v1472 = vmul.f32 %v1467, 1.442695
        %v1473 = vpow.pop %v1472
        %v1474 = vmul.f32 %v1468, 1.442695
        %v1475 = vpow.pop %v1474
        %v1476 = vmul.f32 %v1469, 1.442695
        %v1477 = vpow.pop %v1476
        %v1478 = vld [vmem:[#allocation4] sm:$0xff]
        %v1479 = vld [vmem:[#allocation4 + $0x8] sm:$0xff]
        %v1480 = vld [vmem:[#allocation4 + $0x10] sm:$0xff]
        %v1481 = vld [vmem:[#allocation4 + $0x18] sm:$0xff]
        %v1482 = vmul.f32 %v1439, %v1478
        %v1483 = vmul.f32 %v1441, %v1479
        %v1484 = vmul.f32 %v1443, %v1480
        %v1485 = vmul.f32 %v1445, %v1481
        %v1486 = vsel %vm1229, %v1471, 0.0
        %1487 = vadd.xlane.f32.xlu0 %v1486
        %v1488 = vpop.xlane.xlu0 %1487
        %v1489 = vsel %vm1229, %v1473, 0.0
        %1490 = vadd.xlane.f32.xlu0 %v1489
        %v1491 = vpop.xlane.xlu0 %1490
        %v1492 = vsel %vm1229, %v1475, 0.0
        %1493 = vadd.xlane.f32.xlu0 %v1492
        %v1494 = vpop.xlane.xlu0 %1493
        %v1495 = vsel %vm1229, %v1477, 0.0
        %1496 = vadd.xlane.f32.xlu0 %v1495
        %v1497 = vpop.xlane.xlu0 %1496
        %v1498 = vadd.f32 %v1482, %v1488
        %v1499 = vadd.f32 %v1483, %v1491
        %v1500 = vadd.f32 %v1484, %v1494
        %v1501 = vadd.f32 %v1485, %v1497
        %vm1502 = vcmask 7168
        %1503 = vst.msk [vmem:[#allocation4] sm:$0xff] %vm1502, %v1498
        %1504 = vst.msk [vmem:[#allocation4 + $0x8] sm:$0xff] %vm1502, %v1499
        %1505 = vst.msk [vmem:[#allocation4 + $0x10] sm:$0xff] %vm1502, %v1500
        %1506 = vst.msk [vmem:[#allocation4 + $0x18] sm:$0xff] %vm1502, %v1501
        %v1507 = vpack.c.bf16 %v1471, %v1471
        %v1508 = vpack.c.bf16 %v1473, %v1473
        %v1509 = vpack.c.bf16 %v1475, %v1475
        %v1510 = vpack.c.bf16 %v1477, %v1477
        %v1512 = vsel %vm1229, %v1507, 0
        %vm1514 = vcmask 1043456
        %v1516 = vsel %vm1514, %v1220, 0
        %1518 = vmatprep.subr.bf16.mxu0 0
        %1519 = vmatpush1.bf16.msra.mxu0 %v1516
        %1520 = vmatprep.subr.bf16.mxu0 0
        %1521 = vmatpush1.bf16.msra.mxu0 0
        %1522 = vmatprep.subr.bf16.mxu0 0
        %1523 = vmatpush1.bf16.msra.mxu0 0
        %1524 = vmatprep.subr.bf16.mxu0 0
        %1525 = vmatpush1.bf16.msra.mxu0 0
        %1526 = vmatprep.subr.bf16.mxu0 0
        %1527 = vmatpush1.bf16.msra.mxu0 0
        %1528 = vmatprep.subr.bf16.mxu0 0
        %1529 = vmatpush1.bf16.msra.mxu0 0
        %1530 = vmatprep.subr.bf16.mxu0 0
        %1531 = vmatpush1.bf16.msra.mxu0 0
        %1532 = vmatprep.subr.bf16.mxu0 0
        %1533 = vmatpush1.bf16.msra.mxu0 0
        %1534 = vmatprep.subr.bf16.mxu0 0
        %1535 = vmatpush1.bf16.msra.mxu0 0
        %1536 = vmatprep.subr.bf16.mxu0 0
        %1537 = vmatpush1.bf16.msra.mxu0 0
        %1538 = vmatprep.subr.bf16.mxu0 0
        %1539 = vmatpush1.bf16.msra.mxu0 0
        %1540 = vmatprep.subr.bf16.mxu0 0
        %1541 = vmatpush1.bf16.msra.mxu0 0
        %1542 = vmatprep.subr.bf16.mxu0 0
        %1543 = vmatpush1.bf16.msra.mxu0 0
        %1544 = vmatprep.subr.bf16.mxu0 0
        %1545 = vmatpush1.bf16.msra.mxu0 0
        %1546 = vmatprep.subr.bf16.mxu0 0
        %1547 = vmatpush1.bf16.msra.mxu0 0
        %1548 = vmatprep.subr.bf16.mxu0 0
        %1549 = vmatpush1.bf16.msra.mxu0 0
        %1550 = vmatprep.mubr.bf16.mxu0 0
        %1551 = vmatmul.mubr.bf16.gmra.mrb[0].mxu0 %v1512
        %v1552 = vpop.f32.mrb[0].mxu0
        %v1553 = vadd.f32 0.0, %v1552
        %v1554 = vpop.f32.mrb[0].mxu0
        %v1555 = vpop.f32.mrb[0].mxu0
        %v1556 = vpop.f32.mrb[0].mxu0
        %1557 = vdwg.mxu0
        %v1559 = vsel %vm1229, %v1508, 0
        %v1562 = vsel %vm1514, %v1221, 0
        %1564 = vmatprep.subr.bf16.mxu0 0
        %1565 = vmatpush1.bf16.msra.mxu0 %v1562
        %1566 = vmatprep.subr.bf16.mxu0 0
        %1567 = vmatpush1.bf16.msra.mxu0 0
        %1568 = vmatprep.subr.bf16.mxu0 0
        %1569 = vmatpush1.bf16.msra.mxu0 0
        %1570 = vmatprep.subr.bf16.mxu0 0
        %1571 = vmatpush1.bf16.msra.mxu0 0
        %1572 = vmatprep.subr.bf16.mxu0 0
        %1573 = vmatpush1.bf16.msra.mxu0 0
        %1574 = vmatprep.subr.bf16.mxu0 0
        %1575 = vmatpush1.bf16.msra.mxu0 0
        %1576 = vmatprep.subr.bf16.mxu0 0
        %1577 = vmatpush1.bf16.msra.mxu0 0
        %1578 = vmatprep.subr.bf16.mxu0 0
        %1579 = vmatpush1.bf16.msra.mxu0 0
        %1580 = vmatprep.subr.bf16.mxu0 0
        %1581 = vmatpush1.bf16.msra.mxu0 0
        %1582 = vmatprep.subr.bf16.mxu0 0
        %1583 = vmatpush1.bf16.msra.mxu0 0
        %1584 = vmatprep.subr.bf16.mxu0 0
        %1585 = vmatpush1.bf16.msra.mxu0 0
        %1586 = vmatprep.subr.bf16.mxu0 0
        %1587 = vmatpush1.bf16.msra.mxu0 0
        %1588 = vmatprep.subr.bf16.mxu0 0
        %1589 = vmatpush1.bf16.msra.mxu0 0
        %1590 = vmatprep.subr.bf16.mxu0 0
        %1591 = vmatpush1.bf16.msra.mxu0 0
        %1592 = vmatprep.subr.bf16.mxu0 0
        %1593 = vmatpush1.bf16.msra.mxu0 0
        %1594 = vmatprep.subr.bf16.mxu0 0
        %1595 = vmatpush1.bf16.msra.mxu0 0
        %1596 = vmatprep.mubr.bf16.mxu0 0
        %1597 = vmatmul.mubr.bf16.gmra.mrb[0].mxu0 %v1559
        %v1598 = vpop.f32.mrb[0].mxu0
        %v1599 = vadd.f32 0.0, %v1598
        %v1600 = vpop.f32.mrb[0].mxu0
        %v1601 = vpop.f32.mrb[0].mxu0
        %v1602 = vpop.f32.mrb[0].mxu0
        %1603 = vdwg.mxu0
        %v1605 = vsel %vm1229, %v1509, 0
        %v1608 = vsel %vm1514, %v1222, 0
        %1610 = vmatprep.subr.bf16.mxu0 0
        %1611 = vmatpush1.bf16.msra.mxu0 %v1608
        %1612 = vmatprep.subr.bf16.mxu0 0
        %1613 = vmatpush1.bf16.msra.mxu0 0
        %1614 = vmatprep.subr.bf16.mxu0 0
        %1615 = vmatpush1.bf16.msra.mxu0 0
        %1616 = vmatprep.subr.bf16.mxu0 0
        %1617 = vmatpush1.bf16.msra.mxu0 0
        %1618 = vmatprep.subr.bf16.mxu0 0
        %1619 = vmatpush1.bf16.msra.mxu0 0
        %1620 = vmatprep.subr.bf16.mxu0 0
        %1621 = vmatpush1.bf16.msra.mxu0 0
        %1622 = vmatprep.subr.bf16.mxu0 0
        %1623 = vmatpush1.bf16.msra.mxu0 0
        %1624 = vmatprep.subr.bf16.mxu0 0
        %1625 = vmatpush1.bf16.msra.mxu0 0
        %1626 = vmatprep.subr.bf16.mxu0 0
        %1627 = vmatpush1.bf16.msra.mxu0 0
        %1628 = vmatprep.subr.bf16.mxu0 0
        %1629 = vmatpush1.bf16.msra.mxu0 0
        %1630 = vmatprep.subr.bf16.mxu0 0
        %1631 = vmatpush1.bf16.msra.mxu0 0
        %1632 = vmatprep.subr.bf16.mxu0 0
        %1633 = vmatpush1.bf16.msra.mxu0 0
        %1634 = vmatprep.subr.bf16.mxu0 0
        %1635 = vmatpush1.bf16.msra.mxu0 0
        %1636 = vmatprep.subr.bf16.mxu0 0
        %1637 = vmatpush1.bf16.msra.mxu0 0
        %1638 = vmatprep.subr.bf16.mxu0 0
        %1639 = vmatpush1.bf16.msra.mxu0 0
        %1640 = vmatprep.subr.bf16.mxu0 0
        %1641 = vmatpush1.bf16.msra.mxu0 0
        %1642 = vmatprep.mubr.bf16.mxu0 0
        %1643 = vmatmul.mubr.bf16.gmra.mrb[0].mxu0 %v1605
        %v1644 = vpop.f32.mrb[0].mxu0
        %v1645 = vadd.f32 0.0, %v1644
        %v1646 = vpop.f32.mrb[0].mxu0
        %v1647 = vpop.f32.mrb[0].mxu0
        %v1648 = vpop.f32.mrb[0].mxu0
        %1649 = vdwg.mxu0
        %v1651 = vsel %vm1229, %v1510, 0
        %v1654 = vsel %vm1514, %v1223, 0
        %1656 = vmatprep.subr.bf16.mxu0 0
        %1657 = vmatpush1.bf16.msra.mxu0 %v1654
        %1658 = vmatprep.subr.bf16.mxu0 0
        %1659 = vmatpush1.bf16.msra.mxu0 0
        %1660 = vmatprep.subr.bf16.mxu0 0
        %1661 = vmatpush1.bf16.msra.mxu0 0
        %1662 = vmatprep.subr.bf16.mxu0 0
        %1663 = vmatpush1.bf16.msra.mxu0 0
        %1664 = vmatprep.subr.bf16.mxu0 0
        %1665 = vmatpush1.bf16.msra.mxu0 0
        %1666 = vmatprep.subr.bf16.mxu0 0
        %1667 = vmatpush1.bf16.msra.mxu0 0
        %1668 = vmatprep.subr.bf16.mxu0 0
        %1669 = vmatpush1.bf16.msra.mxu0 0
        %1670 = vmatprep.subr.bf16.mxu0 0
        %1671 = vmatpush1.bf16.msra.mxu0 0
        %1672 = vmatprep.subr.bf16.mxu0 0
        %1673 = vmatpush1.bf16.msra.mxu0 0
        %1674 = vmatprep.subr.bf16.mxu0 0
        %1675 = vmatpush1.bf16.msra.mxu0 0
        %1676 = vmatprep.subr.bf16.mxu0 0
        %1677 = vmatpush1.bf16.msra.mxu0 0
        %1678 = vmatprep.subr.bf16.mxu0 0
        %1679 = vmatpush1.bf16.msra.mxu0 0
        %1680 = vmatprep.subr.bf16.mxu0 0
        %1681 = vmatpush1.bf16.msra.mxu0 0
        %1682 = vmatprep.subr.bf16.mxu0 0
        %1683 = vmatpush1.bf16.msra.mxu0 0
        %1684 = vmatprep.subr.bf16.mxu0 0
        %1685 = vmatpush1.bf16.msra.mxu0 0
        %1686 = vmatprep.subr.bf16.mxu0 0
        %1687 = vmatpush1.bf16.msra.mxu0 0
        %1688 = vmatprep.mubr.bf16.mxu0 0
        %1689 = vmatmul.mubr.bf16.gmra.mrb[0].mxu0 %v1651
        %v1690 = vpop.f32.mrb[0].mxu0
        %v1691 = vadd.f32 0.0, %v1690
        %v1692 = vpop.f32.mrb[0].mxu0
        %v1693 = vpop.f32.mrb[0].mxu0
        %v1694 = vpop.f32.mrb[0].mxu0
        %1695 = vdwg.mxu0
        %v1696 = vld [vmem:[#allocation5] sm:$0xff]
        %v1697 = vld [vmem:[#allocation5 + $0x8] sm:$0xff]
        %v1698 = vld [vmem:[#allocation5 + $0x10] sm:$0xff]
        %v1699 = vld [vmem:[#allocation5 + $0x18] sm:$0xff]
        %1701 = vset.pattern.permute.xlu0 0
        %1702 = vperm.xlu0 %1701, %v1439
        %v1703 = vpop.permute.xlu0 %1702
        %1706 = vset.pattern.permute.xlu0 0
        %1707 = vperm.xlu0 %1706, %v1441
        %v1708 = vpop.permute.xlu0 %1707
        %1711 = vset.pattern.permute.xlu0 0
        %1712 = vperm.xlu0 %1711, %v1443
        %v1713 = vpop.permute.xlu0 %1712
        %1716 = vset.pattern.permute.xlu0 0
        %1717 = vperm.xlu0 %1716, %v1445
        %v1718 = vpop.permute.xlu0 %1717
        %v1720 = vmul.f32 %v1703, %v1696
        %v1721 = vmul.f32 %v1708, %v1697
        %v1722 = vmul.f32 %v1713, %v1698
        %v1723 = vmul.f32 %v1718, %v1699
        %v1724 = vadd.f32 %v1720, %v1553
        %v1725 = vadd.f32 %v1721, %v1599
        %v1726 = vadd.f32 %v1722, %v1645
        %v1727 = vadd.f32 %v1723, %v1691
        %1728 = vst.msk [vmem:[#allocation5] sm:$0xff] %vm1229, %v1724
        %1729 = vst.msk [vmem:[#allocation5 + $0x8] sm:$0xff] %vm1229, %v1725
        %1730 = vst.msk [vmem:[#allocation5 + $0x10] sm:$0xff] %vm1229, %v1726
        %1731 = vst.msk [vmem:[#allocation5 + $0x18] sm:$0xff] %vm1229, %v1727
        %1732 = vst.msk [vmem:[#allocation3] sm:$0xff] %vm1502, %v1430
        %1733 = vst.msk [vmem:[#allocation3 + $0x8] sm:$0xff] %vm1502, %v1431
        %1734 = vst.msk [vmem:[#allocation3 + $0x10] sm:$0xff] %vm1502, %v1432
        %1735 = vst.msk [vmem:[#allocation3 + $0x18] sm:$0xff] %vm1502, %v1433
        // Predicated region
        $region93: #{tpu_custom_call.1} parent=63 // pred_check
          %p1736 = pneg %p551
        $region94: #{tpu_custom_call.1} parent=63 // pred_check_branch
          %1738 = sbr.rel (%p1736) target = $region96
        $region95: #{tpu_custom_call.1} parent=63 // pred_region
          %v1739 = vld [vmem:[#allocation4] sm:$0xff]
          %v1740 = vld [vmem:[#allocation4 + $0x8] sm:$0xff]
          %v1741 = vld [vmem:[#allocation4 + $0x10] sm:$0xff]
          %v1742 = vld [vmem:[#allocation4 + $0x18] sm:$0xff]
          %v1743 = vrcp.pop %v1739
          %v1744 = vrcp.pop %v1740
          %v1745 = vrcp.pop %v1741
          %v1746 = vrcp.pop %v1742
          %v1747 = vld [vmem:[#allocation5] sm:$0xff]
          %v1748 = vld [vmem:[#allocation5 + $0x8] sm:$0xff]
          %v1749 = vld [vmem:[#allocation5 + $0x10] sm:$0xff]
          %v1750 = vld [vmem:[#allocation5 + $0x18] sm:$0xff]
          %1752 = vset.pattern.permute.xlu0 0
          %1753 = vperm.xlu0 %1752, %v1743
          %v1754 = vpop.permute.xlu0 %1753
          %1757 = vset.pattern.permute.xlu0 0
          %1758 = vperm.xlu0 %1757, %v1744
          %v1759 = vpop.permute.xlu0 %1758
          %1762 = vset.pattern.permute.xlu0 0
          %1763 = vperm.xlu0 %1762, %v1745
          %v1764 = vpop.permute.xlu0 %1763
          %1767 = vset.pattern.permute.xlu0 0
          %1768 = vperm.xlu0 %1767, %v1746
          %v1769 = vpop.permute.xlu0 %1768
          %v1771 = vmul.f32 %v1747, %v1754
          %v1772 = vmul.f32 %v1748, %v1759
          %v1773 = vmul.f32 %v1749, %v1764
          %v1774 = vmul.f32 %v1750, %v1769
          %v1775 = vcombine.low %v1771, %v1773
          %v1776 = vcombine.high %v1771, %v1773
          %v1778 = vunpack.c.l.s4 1983009808
          %v1779 = vunpack.c.0.s8 %v1778
          %v1780 = vlaneseq
          %v1781 = vshrl.u32 %v1780, 7
          %v1782 = vsub.s32 %v1779, %v1781
          %v1783 = vrot.slane %v1775, %v1782
          %v1785 = vunpack.c.l.s4 1983009808
          %v1786 = vunpack.c.0.s8 %v1785
          %v1787 = vlaneseq
          %v1788 = vshrl.u32 %v1787, 7
          %v1789 = vsub.s32 %v1786, %v1788
          %v1790 = vrot.slane %v1776, %v1789
          %v1791 = vcombine.low %v1772, %v1774
          %v1792 = vcombine.high %v1772, %v1774
          %v1794 = vunpack.c.l.s4 1983009808
          %v1795 = vunpack.c.0.s8 %v1794
          %v1796 = vlaneseq
          %v1797 = vshrl.u32 %v1796, 7
          %v1798 = vsub.s32 %v1795, %v1797
          %v1799 = vrot.slane %v1791, %v1798
          %v1801 = vunpack.c.l.s4 1983009808
          %v1802 = vunpack.c.0.s8 %v1801
          %v1803 = vlaneseq
          %v1804 = vshrl.u32 %v1803, 7
          %v1805 = vsub.s32 %v1802, %v1804
          %v1806 = vrot.slane %v1792, %v1805
          %v1807 = vcombine.low %v1783, %v1799
          %v1808 = vcombine.high %v1783, %v1799
          %v1810 = vunpack.c.l.s4 1934713408
          %v1811 = vunpack.c.0.s8 %v1810
          %v1812 = vlaneseq
          %v1813 = vshrl.u32 %v1812, 7
          %v1814 = vsub.s32 %v1811, %v1813
          %v1815 = vrot.slane %v1807, %v1814
          %v1817 = vunpack.c.l.s4 1934713408
          %v1818 = vunpack.c.0.s8 %v1817
          %v1819 = vlaneseq
          %v1820 = vshrl.u32 %v1819, 7
          %v1821 = vsub.s32 %v1818, %v1820
          %v1822 = vrot.slane %v1808, %v1821
          %v1823 = vcombine.low %v1790, %v1806
          %v1824 = vcombine.high %v1790, %v1806
          %v1826 = vunpack.c.l.s4 1934713408
          %v1827 = vunpack.c.0.s8 %v1826
          %v1828 = vlaneseq
          %v1829 = vshrl.u32 %v1828, 7
          %v1830 = vsub.s32 %v1827, %v1829
          %v1831 = vrot.slane %v1823, %v1830
          %v1833 = vunpack.c.l.s4 1934713408
          %v1834 = vunpack.c.0.s8 %v1833
          %v1835 = vlaneseq
          %v1836 = vshrl.u32 %v1835, 7
          %v1837 = vsub.s32 %v1834, %v1836
          %v1838 = vrot.slane %v1824, %v1837
          %v1839 = vcombine.high %v1815, 0.0
          %v1840 = vcombine.high %v1822, 0.0
          %v1841 = vcombine.high %v1831, 0.0
          %v1842 = vcombine.high %v1838, 0.0
          %v1843 = vcombine.low %v1815, %v1822
          %v1845 = vunpack.c.l.s4 1983009808
          %v1846 = vunpack.c.0.s8 %v1845
          %v1847 = vlaneseq
          %v1848 = vshrl.u32 %v1847, 7
          %v1849 = vsub.s32 %v1846, %v1848
          %v1850 = vrot.slane %v1843, %v1849
          %v1851 = vcombine.low %v1839, %v1840
          %v1853 = vunpack.c.l.s4 1983009808
          %v1854 = vunpack.c.0.s8 %v1853
          %v1855 = vlaneseq
          %v1856 = vshrl.u32 %v1855, 7
          %v1857 = vsub.s32 %v1854, %v1856
          %v1858 = vrot.slane %v1851, %v1857
          %v1859 = vcombine.low %v1831, %v1838
          %v1861 = vunpack.c.l.s4 1983009808
          %v1862 = vunpack.c.0.s8 %v1861
          %v1863 = vlaneseq
          %v1864 = vshrl.u32 %v1863, 7
          %v1865 = vsub.s32 %v1862, %v1864
          %v1866 = vrot.slane %v1859, %v1865
          %v1867 = vcombine.low %v1841, %v1842
          %v1869 = vunpack.c.l.s4 1983009808
          %v1870 = vunpack.c.0.s8 %v1869
          %v1871 = vlaneseq
          %v1872 = vshrl.u32 %v1871, 7
          %v1873 = vsub.s32 %v1870, %v1872
          %v1874 = vrot.slane %v1867, %v1873
          %v1875 = vcombine.low %v1850, %v1858
          %v1876 = vcombine.high %v1850, %v1858
          %v1878 = vunpack.c.l.s4 1934713408
          %v1879 = vunpack.c.0.s8 %v1878
          %v1880 = vlaneseq
          %v1881 = vshrl.u32 %v1880, 7
          %v1882 = vsub.s32 %v1879, %v1881
          %v1883 = vrot.slane %v1875, %v1882
          %v1885 = vunpack.c.l.s4 1934713408
          %v1886 = vunpack.c.0.s8 %v1885
          %v1887 = vlaneseq
          %v1888 = vshrl.u32 %v1887, 7
          %v1889 = vsub.s32 %v1886, %v1888
          %v1890 = vrot.slane %v1876, %v1889
          %v1891 = vcombine.low %v1866, %v1874
          %v1892 = vcombine.high %v1866, %v1874
          %v1894 = vunpack.c.l.s4 1934713408
          %v1895 = vunpack.c.0.s8 %v1894
          %v1896 = vlaneseq
          %v1897 = vshrl.u32 %v1896, 7
          %v1898 = vsub.s32 %v1895, %v1897
          %v1899 = vrot.slane %v1891, %v1898
          %v1901 = vunpack.c.l.s4 1934713408
          %v1902 = vunpack.c.0.s8 %v1901
          %v1903 = vlaneseq
          %v1904 = vshrl.u32 %v1903, 7
          %v1905 = vsub.s32 %v1902, %v1904
          %v1906 = vrot.slane %v1892, %v1905
          %v1907 = vcombine.low %v1883, %v1899
          %v1908 = vcombine.high %v1883, %v1899
          %v1909 = vcombine.low %v1890, %v1906
          %v1910 = vcombine.high %v1890, %v1906
          %1912 = vrot.lane.b32.xlu0 %v1908, 8
          %v1913 = vpop.permute.xlu0 %1912
          %1916 = vrot.lane.b32.xlu0 %v1909, 16
          %v1917 = vpop.permute.xlu0 %1916
          %1920 = vrot.lane.b32.xlu0 %v1910, 24
          %v1921 = vpop.permute.xlu0 %1920
          %v1923 = vsel %vm1229, %v1907, %v1913
          %vm1924 = vcmask 130048
          %v1925 = vsel %vm1924, %v1923, %v1917
          %vm1926 = vcmask 195584
          %v1927 = vsel %vm1926, %v1925, %v1921
          %v1928 = vpack.c.bf16 %v1927, %v1927
          %v1929 = vld [vmem:[#allocation15] sm:$0xf]
          %v1930 = vld [vmem:[#allocation15 + $0x4] sm:$0xf]
          %v1931 = vld [vmem:[#allocation15 + $0x8] sm:$0xf]
          %v1932 = vld [vmem:[#allocation15 + $0xc] sm:$0xf]
          %v1933 = vld [vmem:[%s9] sm:$0x1]
          %v1935 = vlaneseq
          %v1936 = vshrl.u32 %v1935, 7
          %v1937 = vsub.s32 0, %v1936
          %v1938 = vrot.slane %v1933, %v1937
          %v1944 = vunpack.c.l.b16 %v1929
          %v1945 = vunpack.c.l.b16 %v1930
          %v1946 = vunpack.c.l.b16 %v1931
          %v1947 = vunpack.c.l.b16 %v1932
          %v1948 = vpack.c.b16 %v1945, %v1944
          %v1949 = vpack.c.b16 %v1947, %v1946
          %v1953 = vsel %vm817, %v1928, 0
          %1955 = vmatprep.subr.bf16.mxu0 0
          %1956 = vmatpush1.bf16.msra.mxu0 %v1948
          %1957 = vmatprep.subr.bf16.mxu0 0
          %1958 = vmatpush1.bf16.msra.mxu0 %v1949
          %1959 = vmatprep.subr.bf16.mxu0 0
          %1960 = vmatpush1.bf16.msra.mxu0 0
          %1961 = vmatprep.subr.bf16.mxu0 0
          %1962 = vmatpush1.bf16.msra.mxu0 0
          %1963 = vmatprep.subr.bf16.mxu0 0
          %1964 = vmatpush1.bf16.msra.mxu0 0
          %1965 = vmatprep.subr.bf16.mxu0 0
          %1966 = vmatpush1.bf16.msra.mxu0 0
          %1967 = vmatprep.subr.bf16.mxu0 0
          %1968 = vmatpush1.bf16.msra.mxu0 0
          %1969 = vmatprep.subr.bf16.mxu0 0
          %1970 = vmatpush1.bf16.msra.mxu0 0
          %1971 = vmatprep.subr.bf16.mxu0 0
          %1972 = vmatpush1.bf16.msra.mxu0 0
          %1973 = vmatprep.subr.bf16.mxu0 0
          %1974 = vmatpush1.bf16.msra.mxu0 0
          %1975 = vmatprep.subr.bf16.mxu0 0
          %1976 = vmatpush1.bf16.msra.mxu0 0
          %1977 = vmatprep.subr.bf16.mxu0 0
          %1978 = vmatpush1.bf16.msra.mxu0 0
          %1979 = vmatprep.subr.bf16.mxu0 0
          %1980 = vmatpush1.bf16.msra.mxu0 0
          %1981 = vmatprep.subr.bf16.mxu0 0
          %1982 = vmatpush1.bf16.msra.mxu0 0
          %1983 = vmatprep.subr.bf16.mxu0 0
          %1984 = vmatpush1.bf16.msra.mxu0 0
          %1985 = vmatprep.subr.bf16.mxu0 0
          %1986 = vmatpush1.bf16.msra.mxu0 0
          %1987 = vmatprep.mubr.bf16.mxu0 0
          %1988 = vmatmul.mubr.bf16.gmra.mrb[0].mxu0 %v1953
          %v1989 = vpop.f32.mrb[0].mxu0
          %v1990 = vadd.f32 %v1938, %v1989
          %v1991 = vpop.f32.mrb[0].mxu0
          %v1992 = vpop.f32.mrb[0].mxu0
          %v1993 = vpop.f32.mrb[0].mxu0
          %1994 = vdwg.mxu0
          %1995 = vst.msk [vmem:[%s542] sm:$0xff] %vm817, %v1990
        $region96: #{tpu_custom_call.1} parent=63 // pred_fallthru
          _
        %s1996 = sand.u32 %s314, 1
        %s1997 = scalar_lea.sflag [#allocation8], %s1996
        %s1998 = sand.u32 %s314, 1
        %s1999 = smul.addr %s1998, 8
        %s2000 = scalar_lea.vmem [#allocation17], %s1999
        // Predicated region
        $region97: #{tpu_custom_call.1} parent=63 // pred_check
          %p2001 = pneg %p324
        $region98: #{tpu_custom_call.1} parent=63 // pred_check_branch
          %2003 = sbr.rel (%p2001) target = $region100
        $region99: #{tpu_custom_call.1} parent=63 // pred_region
          %s2005 = ssub.s32 128, 128
          %2006 = vsyncadd %s1997, %s2005
          %s2007 = sadd.s32 %s39, %s38
          %s2008 = smul.addr %s2007, 128
          %s2009 = scalar_lea.hbm %s11, %s2008
          %s2011 = sshll.u32 %s2000, 4
          %s2012 = int_to_ptr.vmem [resolvable:$true] %s2011
          %2014 = dma.vmem_to_hbm [thread:$0]  %s2012, 128, %s2009, %s1997
        $region100: #{tpu_custom_call.1} parent=63 // pred_fallthru
          _
      $region64: #{tpu_custom_call.1} parent=5 // pred_fallthru
        _
      %p2015 = scmp.le.s32.totalorder 2, %s28
      // Predicated region
      $region101: #{tpu_custom_call.1} parent=5 // pred_check
        %p2016 = pneg %p2015
      $region102: #{tpu_custom_call.1} parent=5 // pred_check_branch
        %2018 = sbr.rel (%p2016) target = $region104
      $region103: #{tpu_custom_call.1} parent=5 // pred_region
        %s2019 = ssub.s32 %s28, 2
        // Predicated region
        $region105: #{tpu_custom_call.1} parent=103 // pred_check
          %p2020 = pneg %p330
        $region106: #{tpu_custom_call.1} parent=103 // pred_check_branch
          %2022 = sbr.rel (%p2020) target = $region108
        $region107: #{tpu_custom_call.1} parent=103 // pred_region
          %s2023 = sand.u32 %s315, 1
          %s2024 = scalar_lea.sflag [#allocation8], %s2023
          %s2025 = sand.u32 %s315, 1
          %s2026 = smul.addr %s2025, 8
          %s2027 = scalar_lea.vmem [#allocation17], %s2026
          %2028 = dma.done %s2024, 128
        $region108: #{tpu_custom_call.1} parent=103 // pred_fallthru
          _
      $region104: #{tpu_custom_call.1} parent=5 // pred_fallthru
        _
    $region6: #{tpu_custom_call.1} parent=1 // loop_footer
      %s32 = sadd.s32 1, %s28
    $region7: #{tpu_custom_call.1} parent=1 // loop_footer_branch
      %27 = sbr.rel target = $region3
    $region8: #{tpu_custom_call.1} parent=1 // loop_exit
      _
    %2029 = vsyncpa [#allocation7], 1
    %s2030 = scalar_lea.sflag [#allocation7], 1
    %2031 = vsyncpa %s2030, 1
    %2032 = vsyncpa [#allocation10], 1
    %s2033 = scalar_lea.sflag [#allocation10], 1
    %2034 = vsyncpa %s2033, 1
    %2035 = vsyncpa [#allocation13], 1
    %2036 = vsyncpa [#allocation16], 1
    %2037 = vsyncpa [#allocation8], 1
    %s2038 = scalar_lea.sflag [#allocation8], 1
    %2039 = vsyncpa %s2038, 1

// kernel: tpu_custom_call.1
$region0: #{tpu_custom_call.1}
  #allocation0 [shape = 'u32[]', space=smem, size = 0x4, offset = 0x4, fixed_abs, tag = 'smem constant byte address 0x4 - core index']
  #allocation1 [shape = 'u32[144,128]{1,0:T(1,128)}', space=vmem, size = 0x12000, scoped, tag = 'internal scratch']
  #allocation2 [shape = 'bf16[4,8,8]{2,1,0:T(8,128)(2,1)}', space=vmem, size = 0x2000, scoped, tag = 'scratch operand']
  #allocation3 [shape = 'f32[4,8,1]{2,1,0:T(8,128)}', space=vmem, size = 0x4000, scoped, tag = 'scratch operand']
  #allocation4 [shape = 'f32[4,8,1]{2,1,0:T(8,128)}', space=vmem, size = 0x4000, scoped, tag = 'scratch operand']
  #allocation5 [shape = 'f32[4,8,8]{2,1,0:T(8,128)}', space=vmem, size = 0x4000, scoped, tag = 'scratch operand']
  %s0 = inlined_call_operand.hbm [shape: bf16[2,8,32], index: 0, kind: input, shape index: {}]
  %s1 = inlined_call_operand.hbm [shape: bf16[2,8,32], index: 1, kind: input, shape index: {}]
  %s2 = inlined_call_operand.hbm [shape: bf16[32,32], index: 2, kind: input, shape index: {}]
  %s3 = inlined_call_operand.vmem [shape: f32[1,32], index: 3, kind: input, shape index: {}]
  %s4 = inlined_call_operand.hbm [shape: bf16[32,32], index: 4, kind: input, shape index: {}]
  %s5 = inlined_call_operand.vmem [shape: f32[1,32], index: 5, kind: input, shape index: {}]
  %s6 = inlined_call_operand.vmem [shape: bf16[32,32], index: 6, kind: input, shape index: {}]
  %s7 = inlined_call_operand.hbm [shape: f32[1,32], index: 7, kind: input, shape index: {}]
  %s8 = inlined_call_operand.hbm [shape: bf16[32,32], index: 8, kind: input, shape index: {}]
  %s9 = inlined_call_operand.vmem [shape: f32[1,32], index: 9, kind: input, shape index: {}]
  %s10 = inlined_call_operand.vmem [shape: f32[8,8], index: 10, kind: input, shape index: {}]
  %s11 = inlined_call_operand.hbm [shape: f32[2,8,32], index: 11, kind: output, shape index: {}]
  %s12 = sld [smem:[#allocation0]]
  $region109: #{tpu_custom_call.1} parent=0
    _
  %s14 = ssub.s32 1, %s12
  %s15 = scalar_select 0, %s14, %s12
  $region1: #{tpu_custom_call.1} parent=0
    #allocation6 [shape = 'u8[4096]{0}', space=vmem, size = 0x1000, scoped, tag = 'input window, operand 0']
    #allocation7 [shape = 's32[2]{0}', space=sflag, size = 0x8, scoped, tag = 'scoped memory for tpu_custom_call.1']
    #allocation8 [shape = 's32[2]{0}', space=sflag, size = 0x8, scoped, tag = 'scoped memory for tpu_custom_call.1']
    #allocation9 [shape = 'u8[4096]{0}', space=vmem, size = 0x1000, scoped, tag = 'input window, operand 1']
    #allocation10 [shape = 's32[2]{0}', space=sflag, size = 0x8, scoped, tag = 'scoped memory for tpu_custom_call.1']
    #allocation11 [shape = 'u8[8192]{0}', space=vmem, size = 0x2000, scoped, tag = 'input window, operand 2, single buffered']
    #allocation12 [shape = 'u8[8192]{0}', space=vmem, size = 0x2000, scoped, tag = 'input window, operand 4, single buffered']
    #allocation13 [shape = 's32[1]{0}', space=sflag, size = 0x4, scoped, tag = 'scoped memory for tpu_custom_call.1']
    #allocation14 [shape = 'u8[512]{0}', space=vmem, size = 0x400, scoped, tag = 'input window, operand 7, single buffered']
    #allocation15 [shape = 'u8[8192]{0}', space=vmem, size = 0x2000, scoped, tag = 'input window, operand 8, single buffered']
    #allocation16 [shape = 's32[1]{0}', space=sflag, size = 0x4, scoped, tag = 'scoped memory for tpu_custom_call.1']
    #allocation17 [shape = 'u8[8192]{0}', space=vmem, size = 0x2000, scoped, tag = 'output window, operand 0']
    %16 = vsyncpa [#allocation7], 0
    %s17 = scalar_lea.sflag [#allocation7], 1
    %18 = vsyncpa %s17, 0
    %19 = vsyncpa [#allocation10], 0
    %s20 = scalar_lea.sflag [#allocation10], 1
    %21 = vsyncpa %s20, 0
    %22 = vsyncpa [#allocation13], 0
    %23 = vsyncpa [#allocation16], 0
    %24 = vsyncpa [#allocation8], 0
    %s25 = scalar_lea.sflag [#allocation8], 1
    %26 = vsyncpa %s25, 0
    loop: start=0, step=1, limit=4
    $region2: #{tpu_custom_call.1} parent=1 // loop_pre_header
      _
    $region3: #{tpu_custom_call.1} parent=1 // loop_header
      %s28 = sphi 0, %s32
      %p29 = scmp.ge.s32.totalorder %s28, 4
      %s35 = sphi 0, %s54
      %s36 = sphi 0, %s50
      %s37 = sphi 0, %s46
      %s38 = sphi 0, %s35
      %s39 = sphi 0, %s36
      %s40 = sphi 0, %s37
      %s41 = sphi 0, %s38
      %s42 = sphi 0, %s39
      %s43 = sphi 0, %s40
      %s59 = sphi 0, %s61
      %s62 = sphi 0, %s59
      %s63 = sphi 0, %s62
      %s79 = sphi 0, %s63
      %s87 = sphi 0, %s89
      %s90 = sphi 0, %s87
      %s91 = sphi 0, %s90
      %s107 = sphi 0, %s91
      %s111 = sphi 0, %s111
      %s113 = sphi 0, %s111
      %s114 = sphi 0, %s113
      %s128 = sphi 0, %s114
      %s132 = sphi 0, %s132
      %s134 = sphi 0, %s132
      %s135 = sphi 0, %s134
      %s149 = sphi 0, %s135
      %s153 = sphi 0, %s153
      %s155 = sphi 0, %s153
      %s156 = sphi 0, %s155
      %s170 = sphi 0, %s156
      %s174 = sphi 0, %s174
      %s176 = sphi 0, %s174
      %s177 = sphi 0, %s176
      %s191 = sphi 0, %s177
      %s195 = sphi 0, %s195
      %s197 = sphi 0, %s195
      %s198 = sphi 0, %s197
      %s212 = sphi 0, %s198
      %s216 = sphi 0, %s216
      %s218 = sphi 0, %s216
      %s219 = sphi 0, %s218
      %s233 = sphi 0, %s219
      %s237 = sphi 0, %s237
      %s239 = sphi 0, %s237
      %s240 = sphi 0, %s239
      %s254 = sphi 0, %s240
      %s258 = sphi 0, %s258
      %s260 = sphi 0, %s258
      %s261 = sphi 0, %s260
      %s275 = sphi 0, %s261
      %s283 = sphi 0, %s285
      %s286 = sphi 0, %s283
      %s287 = sphi 0, %s286
      %s303 = sphi 0, %s287
      %s311 = sphi 0, %s313
      %s314 = sphi 0, %s311
      %s315 = sphi 0, %s314
      %s331 = sphi 0, %s315
    $region4: #{tpu_custom_call.1} parent=1 // loop_header_branch
      %31 = sbr.rel (%p29) target = $region8
    $region5: #{tpu_custom_call.1} parent=1 // loop_body
      %s33 = ssub.s32 %s28, 1
      %s34 = ssub.s32 %s28, 2
      %s44 = sadd.s32 1, %s37
      %p45 = scmp.ge.s32.totalorder %s44, 1
      %s46 = scalar_select %p45, 0, %s44
      %s47 = sadd.s32 1, %s36
      %s48 = scalar_select %p45, %s47, %s36
      %p49 = scmp.ge.s32.totalorder %s48, 1
      %s50 = scalar_select %p49, 0, %s48
      %s51 = sadd.s32 1, %s35
      %s52 = scalar_select %p49, %s51, %s35
      %p53 = scmp.ge.s32.totalorder %s52, 2
      %s54 = scalar_select %p53, 0, %s52
      %s55 = ssub.s32 %s35, %s54
      %s56 = ssub.s32 %s36, %s50
      %s57 = sor.u32 %s55, %s56
      %p58 = scmp.eq.s32.totalorder %s57, 0
      %s60 = sadd.s32 %s59, 1
      %s61 = scalar_select %p58, %s59, %s60
      %p64 = pneg %p58
      %p65 = scmp.eq.s32.totalorder %s28, 1
      %p66 = por %p64, %p65
      %p67 = scmp.ne.s32.totalorder %s59, %s62
      %p68 = scmp.eq.s32.totalorder %s28, 0
      %p69 = por %p67, %p68
      %p70 = scmp.ne.s32.totalorder %s59, %s62
      %p71 = scmp.eq.s32.totalorder %s33, 1
      %p72 = por %p70, %p71
      %p73 = scmp.ne.s32.totalorder %s62, %s63
      %p74 = scmp.eq.s32.totalorder %s33, 0
      %p75 = por %p73, %p74
      %p76 = scmp.ne.s32.totalorder %s62, %s63
      %p77 = scmp.eq.s32.totalorder %s34, 1
      %p78 = por %p76, %p77
      %p80 = scmp.ne.s32.totalorder %s63, %s79
      %p81 = scmp.eq.s32.totalorder %s34, 0
      %p82 = por %p80, %p81
      %s83 = ssub.s32 %s35, %s54
      %s84 = ssub.s32 %s37, %s46
      %s85 = sor.u32 %s83, %s84
      %p86 = scmp.eq.s32.totalorder %s85, 0
      %s88 = sadd.s32 %s87, 1
      %s89 = scalar_select %p86, %s87, %s88
      %p92 = pneg %p86
      %p93 = scmp.eq.s32.totalorder %s28, 1
      %p94 = por %p92, %p93
      %p95 = scmp.ne.s32.totalorder %s87, %s90
      %p96 = scmp.eq.s32.totalorder %s28, 0
      %p97 = por %p95, %p96
      %p98 = scmp.ne.s32.totalorder %s87, %s90
      %p99 = scmp.eq.s32.totalorder %s33, 1
      %p100 = por %p98, %p99
      %p101 = scmp.ne.s32.totalorder %s90, %s91
      %p102 = scmp.eq.s32.totalorder %s33, 0
      %p103 = por %p101, %p102
      %p104 = scmp.ne.s32.totalorder %s90, %s91
      %p105 = scmp.eq.s32.totalorder %s34, 1
      %p106 = por %p104, %p105
      %p108 = scmp.ne.s32.totalorder %s91, %s107
      %p109 = scmp.eq.s32.totalorder %s34, 0
      %p110 = por %p108, %p109
      %s112 = sadd.s32 %s111, 1
      %p115 = scmp.eq.s32.totalorder %s28, 1
      %p116 = scmp.ne.s32.totalorder %s111, %s113
      %p117 = scmp.eq.s32.totalorder %s28, 0
      %p118 = por %p116, %p117
      %p119 = scmp.ne.s32.totalorder %s111, %s113
      %p120 = scmp.eq.s32.totalorder %s33, 1
      %p121 = por %p119, %p120
      %p122 = scmp.ne.s32.totalorder %s113, %s114
      %p123 = scmp.eq.s32.totalorder %s33, 0
      %p124 = por %p122, %p123
      %p125 = scmp.ne.s32.totalorder %s113, %s114
      %p126 = scmp.eq.s32.totalorder %s34, 1
      %p127 = por %p125, %p126
      %p129 = scmp.ne.s32.totalorder %s114, %s128
      %p130 = scmp.eq.s32.totalorder %s34, 0
      %p131 = por %p129, %p130
      %s133 = sadd.s32 %s132, 1
      %p136 = scmp.eq.s32.totalorder %s28, 1
      %p137 = scmp.ne.s32.totalorder %s132, %s134
      %p138 = scmp.eq.s32.totalorder %s28, 0
      %p139 = por %p137, %p138
      %p140 = scmp.ne.s32.totalorder %s132, %s134
      %p141 = scmp.eq.s32.totalorder %s33, 1
      %p142 = por %p140, %p141
      %p143 = scmp.ne.s32.totalorder %s134, %s135
      %p144 = scmp.eq.s32.totalorder %s33, 0
      %p145 = por %p143, %p144
      %p146 = scmp.ne.s32.totalorder %s134, %s135
      %p147 = scmp.eq.s32.totalorder %s34, 1
      %p148 = por %p146, %p147
      %p150 = scmp.ne.s32.totalorder %s135, %s149
      %p151 = scmp.eq.s32.totalorder %s34, 0
      %p152 = por %p150, %p151
      %s154 = sadd.s32 %s153, 1
      %p157 = scmp.eq.s32.totalorder %s28, 1
      %p158 = scmp.ne.s32.totalorder %s153, %s155
      %p159 = scmp.eq.s32.totalorder %s28, 0
      %p160 = por %p158, %p159
      %p161 = scmp.ne.s32.totalorder %s153, %s155
      %p162 = scmp.eq.s32.totalorder %s33, 1
      %p163 = por %p161, %p162
      %p164 = scmp.ne.s32.totalorder %s155, %s156
      %p165 = scmp.eq.s32.totalorder %s33, 0
      %p166 = por %p164, %p165
      %p167 = scmp.ne.s32.totalorder %s155, %s156
      %p168 = scmp.eq.s32.totalorder %s34, 1
      %p169 = por %p167, %p168
      %p171 = scmp.ne.s32.totalorder %s156, %s170
      %p172 = scmp.eq.s32.totalorder %s34, 0
      %p173 = por %p171, %p172
      %s175 = sadd.s32 %s174, 1
      %p178 = scmp.eq.s32.totalorder %s28, 1
      %p179 = scmp.ne.s32.totalorder %s174, %s176
      %p180 = scmp.eq.s32.totalorder %s28, 0
      %p181 = por %p179, %p180
      %p182 = scmp.ne.s32.totalorder %s174, %s176
      %p183 = scmp.eq.s32.totalorder %s33, 1
      %p184 = por %p182, %p183
      %p185 = scmp.ne.s32.totalorder %s176, %s177
      %p186 = scmp.eq.s32.totalorder %s33, 0
      %p187 = por %p185, %p186
      %p188 = scmp.ne.s32.totalorder %s176, %s177
      %p189 = scmp.eq.s32.totalorder %s34, 1
      %p190 = por %p188, %p189
      %p192 = scmp.ne.s32.totalorder %s177, %s191
      %p193 = scmp.eq.s32.totalorder %s34, 0
      %p194 = por %p192, %p193
      %s196 = sadd.s32 %s195, 1
      %p199 = scmp.eq.s32.totalorder %s28, 1
      %p200 = scmp.ne.s32.totalorder %s195, %s197
      %p201 = scmp.eq.s32.totalorder %s28, 0
      %p202 = por %p200, %p201
      %p203 = scmp.ne.s32.totalorder %s195, %s197
      %p204 = scmp.eq.s32.totalorder %s33, 1
      %p205 = por %p203, %p204
      %p206 = scmp.ne.s32.totalorder %s197, %s198
      %p207 = scmp.eq.s32.totalorder %s33, 0
      %p208 = por %p206, %p207
      %p209 = scmp.ne.s32.totalorder %s197, %s198
      %p210 = scmp.eq.s32.totalorder %s34, 1
      %p211 = por %p209, %p210
      %p213 = scmp.ne.s32.totalorder %s198, %s212
      %p214 = scmp.eq.s32.totalorder %s34, 0
      %p215 = por %p213, %p214
      %s217 = sadd.s32 %s216, 1
      %p220 = scmp.eq.s32.totalorder %s28, 1
      %p221 = scmp.ne.s32.totalorder %s216, %s218
      %p222 = scmp.eq.s32.totalorder %s28, 0
      %p223 = por %p221, %p222
      %p224 = scmp.ne.s32.totalorder %s216, %s218
      %p225 = scmp.eq.s32.totalorder %s33, 1
      %p226 = por %p224, %p225
      %p227 = scmp.ne.s32.totalorder %s218, %s219
      %p228 = scmp.eq.s32.totalorder %s33, 0
      %p229 = por %p227, %p228
      %p230 = scmp.ne.s32.totalorder %s218, %s219
      %p231 = scmp.eq.s32.totalorder %s34, 1
      %p232 = por %p230, %p231
      %p234 = scmp.ne.s32.totalorder %s219, %s233
      %p235 = scmp.eq.s32.totalorder %s34, 0
      %p236 = por %p234, %p235
      %s238 = sadd.s32 %s237, 1
      %p241 = scmp.eq.s32.totalorder %s28, 1
      %p242 = scmp.ne.s32.totalorder %s237, %s239
      %p243 = scmp.eq.s32.totalorder %s28, 0
      %p244 = por %p242, %p243
      %p245 = scmp.ne.s32.totalorder %s237, %s239
      %p246 = scmp.eq.s32.totalorder %s33, 1
      %p247 = por %p245, %p246
      %p248 = scmp.ne.s32.totalorder %s239, %s240
      %p249 = scmp.eq.s32.totalorder %s33, 0
      %p250 = por %p248, %p249
      %p251 = scmp.ne.s32.totalorder %s239, %s240
      %p252 = scmp.eq.s32.totalorder %s34, 1
      %p253 = por %p251, %p252
      %p255 = scmp.ne.s32.totalorder %s240, %s254
      %p256 = scmp.eq.s32.totalorder %s34, 0
      %p257 = por %p255, %p256
      %s259 = sadd.s32 %s258, 1
      %p262 = scmp.eq.s32.totalorder %s28, 1
      %p263 = scmp.ne.s32.totalorder %s258, %s260
      %p264 = scmp.eq.s32.totalorder %s28, 0
      %p265 = por %p263, %p264
      %p266 = scmp.ne.s32.totalorder %s258, %s260
      %p267 = scmp.eq.s32.totalorder %s33, 1
      %p268 = por %p266, %p267
      %p269 = scmp.ne.s32.totalorder %s260, %s261
      %p270 = scmp.eq.s32.totalorder %s33, 0
      %p271 = por %p269, %p270
      %p272 = scmp.ne.s32.totalorder %s260, %s261
      %p273 = scmp.eq.s32.totalorder %s34, 1
      %p274 = por %p272, %p273
      %p276 = scmp.ne.s32.totalorder %s261, %s275
      %p277 = scmp.eq.s32.totalorder %s34, 0
      %p278 = por %p276, %p277
      %s279 = ssub.s32 %s36, %s50
      %s280 = ssub.s32 %s37, %s46
      %s281 = sor.u32 %s279, %s280
      %p282 = scmp.eq.s32.totalorder %s281, 0
      %s284 = sadd.s32 %s283, 1
      %s285 = scalar_select %p282, %s283, %s284
      %p288 = pneg %p282
      %p289 = scmp.eq.s32.totalorder %s28, 1
      %p290 = por %p288, %p289
      %p291 = scmp.ne.s32.totalorder %s283, %s286
      %p292 = scmp.eq.s32.totalorder %s28, 0
      %p293 = por %p291, %p292
      %p294 = scmp.ne.s32.totalorder %s283, %s286
      %p295 = scmp.eq.s32.totalorder %s33, 1
      %p296 = por %p294, %p295
      %p297 = scmp.ne.s32.totalorder %s286, %s287
      %p298 = scmp.eq.s32.totalorder %s33, 0
      %p299 = por %p297, %p298
      %p300 = scmp.ne.s32.totalorder %s286, %s287
      %p301 = scmp.eq.s32.totalorder %s34, 1
      %p302 = por %p300, %p301
      %p304 = scmp.ne.s32.totalorder %s287, %s303
      %p305 = scmp.eq.s32.totalorder %s34, 0
      %p306 = por %p304, %p305
      %s307 = ssub.s32 %s35, %s54
      %s308 = ssub.s32 %s36, %s50
      %s309 = sor.u32 %s307, %s308
      %p310 = scmp.eq.s32.totalorder %s309, 0
      %s312 = sadd.s32 %s311, 1
      %s313 = scalar_select %p310, %s311, %s312
      %p316 = pneg %p310
      %p317 = scmp.eq.s32.totalorder %s28, 1
      %p318 = por %p316, %p317
      %p319 = scmp.ne.s32.totalorder %s311, %s314
      %p320 = scmp.eq.s32.totalorder %s28, 0
      %p321 = por %p319, %p320
      %p322 = scmp.ne.s32.totalorder %s311, %s314
      %p323 = scmp.eq.s32.totalorder %s33, 1
      %p324 = por %p322, %p323
      %p325 = scmp.ne.s32.totalorder %s314, %s315
      %p326 = scmp.eq.s32.totalorder %s33, 0
      %p327 = por %p325, %p326
      %p328 = scmp.ne.s32.totalorder %s314, %s315
      %p329 = scmp.eq.s32.totalorder %s34, 1
      %p330 = por %p328, %p329
      %p332 = scmp.ne.s32.totalorder %s315, %s331
      %p333 = scmp.eq.s32.totalorder %s34, 0
      %p334 = por %p332, %p333
      %p335 = scmp.le.s32.totalorder 1, %s28
      %p336 = scmp.lt.s32.totalorder %s28, 3
      %p337 = pnand %p335, %p336
      %p338 = pneg %p337
      // Predicated region
      $region9: #{tpu_custom_call.1} parent=5 // pred_check
        _
      $region10: #{tpu_custom_call.1} parent=5 // pred_check_branch
        %340 = sbr.rel (%p337) target = $region12
      $region11: #{tpu_custom_call.1} parent=5 // pred_region
        %s341 = ssub.s32 %s28, 1
        // Predicated region
        $region13: #{tpu_custom_call.1} parent=11 // pred_check
          %p342 = pneg %p124
        $region14: #{tpu_custom_call.1} parent=11 // pred_check_branch
          %344 = sbr.rel (%p342) target = $region16
        $region15: #{tpu_custom_call.1} parent=11 // pred_region
          %s346 = ssub.s32 256, 256
          %347 = vsyncadd [#allocation10], %s346
          %s348 = sshll.u32 [#allocation11], 4
          %s349 = int_to_ptr.vmem [resolvable:$true] %s348
          %354 = dma.hbm_to_vmem [thread:$0]  %s2, 256, %s349, [#allocation10], 64, 64, 4
        $region16: #{tpu_custom_call.1} parent=11 // pred_fallthru
          _
        // Predicated region
        $region17: #{tpu_custom_call.1} parent=11 // pred_check
          %p355 = pneg %p145
        $region18: #{tpu_custom_call.1} parent=11 // pred_check_branch
          %357 = sbr.rel (%p355) target = $region20
        $region19: #{tpu_custom_call.1} parent=11 // pred_region
          _
        $region20: #{tpu_custom_call.1} parent=11 // pred_fallthru
          _
        // Predicated region
        $region21: #{tpu_custom_call.1} parent=11 // pred_check
          %p358 = pneg %p166
        $region22: #{tpu_custom_call.1} parent=11 // pred_check_branch
          %360 = sbr.rel (%p358) target = $region24
        $region23: #{tpu_custom_call.1} parent=11 // pred_region
          %s362 = ssub.s32 256, 256
          %363 = vsyncadd [#allocation13], %s362
          %s364 = sshll.u32 [#allocation12], 4
          %s365 = int_to_ptr.vmem [resolvable:$true] %s364
          %370 = dma.hbm_to_vmem [thread:$0]  %s4, 256, %s365, [#allocation13], 64, 64, 4
        $region24: #{tpu_custom_call.1} parent=11 // pred_fallthru
          _
        // Predicated region
        $region25: #{tpu_custom_call.1} parent=11 // pred_check
          %p371 = pneg %p187
        $region26: #{tpu_custom_call.1} parent=11 // pred_check_branch
          %373 = sbr.rel (%p371) target = $region28
        $region27: #{tpu_custom_call.1} parent=11 // pred_region
          _
        $region28: #{tpu_custom_call.1} parent=11 // pred_fallthru
          _
        // Predicated region
        $region29: #{tpu_custom_call.1} parent=11 // pred_check
          %p374 = pneg %p208
        $region30: #{tpu_custom_call.1} parent=11 // pred_check_branch
          %376 = sbr.rel (%p374) target = $region32
        $region31: #{tpu_custom_call.1} parent=11 // pred_region
          _
        $region32: #{tpu_custom_call.1} parent=11 // pred_fallthru
          _
        // Predicated region
        $region33: #{tpu_custom_call.1} parent=11 // pred_check
          %p377 = pneg %p229
        $region34: #{tpu_custom_call.1} parent=11 // pred_check_branch
          %379 = sbr.rel (%p377) target = $region36
        $region35: #{tpu_custom_call.1} parent=11 // pred_region
          %s381 = ssub.s32 16, 16
          %382 = vsyncadd [#allocation13], %s381
          %s384 = sshll.u32 [#allocation14], 4
          %s385 = int_to_ptr.vmem [resolvable:$true] %s384
          %387 = dma.hbm_to_vmem [thread:$0]  %s7, 16, %s385, [#allocation13]
        $region36: #{tpu_custom_call.1} parent=11 // pred_fallthru
          _
        // Predicated region
        $region37: #{tpu_custom_call.1} parent=11 // pred_check
          %p388 = pneg %p250
        $region38: #{tpu_custom_call.1} parent=11 // pred_check_branch
          %390 = sbr.rel (%p388) target = $region40
        $region39: #{tpu_custom_call.1} parent=11 // pred_region
          %s392 = ssub.s32 256, 256
          %393 = vsyncadd [#allocation16], %s392
          %s394 = sshll.u32 [#allocation15], 4
          %s395 = int_to_ptr.vmem [resolvable:$true] %s394
          %400 = dma.hbm_to_vmem [thread:$0]  %s8, 256, %s395, [#allocation16], 64, 64, 4
        $region40: #{tpu_custom_call.1} parent=11 // pred_fallthru
          _
        // Predicated region
        $region41: #{tpu_custom_call.1} parent=11 // pred_check
          %p401 = pneg %p271
        $region42: #{tpu_custom_call.1} parent=11 // pred_check_branch
          %403 = sbr.rel (%p401) target = $region44
        $region43: #{tpu_custom_call.1} parent=11 // pred_region
          _
        $region44: #{tpu_custom_call.1} parent=11 // pred_fallthru
          _
        // Predicated region
        $region45: #{tpu_custom_call.1} parent=11 // pred_check
          %p404 = pneg %p299
        $region46: #{tpu_custom_call.1} parent=11 // pred_check_branch
          %406 = sbr.rel (%p404) target = $region48
        $region47: #{tpu_custom_call.1} parent=11 // pred_region
          %p407 = scmp.lt.s32.totalorder %s39, 0
          %s408 = scalar_select %p407, %s39, 0
          %p409 = scmp.lt.s32.totalorder %s40, 0
          %s410 = scalar_select %p409, %s40, 0
          %s411 = sadd.s32 %s410, %s408
          %s412 = smul.addr %s411, 8
          %s413 = scalar_lea.vmem %s10, %s412
        $region48: #{tpu_custom_call.1} parent=11 // pred_fallthru
          _
      $region12: #{tpu_custom_call.1} parent=5 // pred_fallthru
        _
      %p414 = scmp.lt.s32.totalorder %s28, 2
      // Predicated region
      $region49: #{tpu_custom_call.1} parent=5 // pred_check
        %p415 = pneg %p414
      $region50: #{tpu_custom_call.1} parent=5 // pred_check_branch
        %417 = sbr.rel (%p415) target = $region52
      $region51: #{tpu_custom_call.1} parent=5 // pred_region
        // Predicated region
        $region53: #{tpu_custom_call.1} parent=51 // pred_check
          %p418 = pneg %p69
        $region54: #{tpu_custom_call.1} parent=51 // pred_check_branch
          %420 = sbr.rel (%p418) target = $region56
        $region55: #{tpu_custom_call.1} parent=51 // pred_region
          %s421 = sand.u32 %s59, 1
          %s422 = scalar_lea.sflag [#allocation7], %s421
          %s423 = sand.u32 %s59, 1
          %s424 = smul.addr %s423, 4
          %s425 = scalar_lea.vmem [#allocation6], %s424
          %s427 = ssub.s32 64, 64
          %428 = vsyncadd %s422, %s427
          %s429 = sadd.s32 %s36, %s35
          %s430 = smul.addr %s429, 64
          %s431 = scalar_lea.hbm %s0, %s430
          %s433 = sshll.u32 %s425, 4
          %s434 = int_to_ptr.vmem [resolvable:$true] %s433
          %436 = dma.hbm_to_vmem [thread:$0]  %s431, 64, %s434, %s422
        $region56: #{tpu_custom_call.1} parent=51 // pred_fallthru
          _
        // Predicated region
        $region57: #{tpu_custom_call.1} parent=51 // pred_check
          %p437 = pneg %p97
        $region58: #{tpu_custom_call.1} parent=51 // pred_check_branch
          %439 = sbr.rel (%p437) target = $region60
        $region59: #{tpu_custom_call.1} parent=51 // pred_region
          %s440 = sand.u32 %s28, 1
          %s441 = scalar_lea.sflag [#allocation10], %s440
          %s442 = sand.u32 %s87, 1
          %s443 = smul.addr %s442, 4
          %s444 = scalar_lea.vmem [#allocation9], %s443
          %s446 = ssub.s32 64, 64
          %447 = vsyncadd %s441, %s446
          %s448 = sadd.s32 %s37, %s35
          %s449 = smul.addr %s448, 64
          %s450 = scalar_lea.hbm %s1, %s449
          %s452 = sshll.u32 %s444, 4
          %s453 = int_to_ptr.vmem [resolvable:$true] %s452
          %455 = dma.hbm_to_vmem [thread:$0]  %s450, 64, %s453, %s441
        $region60: #{tpu_custom_call.1} parent=51 // pred_fallthru
          _
      $region52: #{tpu_custom_call.1} parent=5 // pred_fallthru
        _
      %p456 = scmp.le.s32.totalorder 1, %s28
      %p457 = scmp.lt.s32.totalorder %s28, 3
      %p458 = pnand %p456, %p457
      %p459 = pneg %p458
      // Predicated region
      $region61: #{tpu_custom_call.1} parent=5 // pred_check
        _
      $region62: #{tpu_custom_call.1} parent=5 // pred_check_branch
        %461 = sbr.rel (%p458) target = $region64
      $region63: #{tpu_custom_call.1} parent=5 // pred_region
        %s462 = ssub.s32 %s28, 1
        %s463 = sand.u32 %s62, 1
        %s464 = scalar_lea.sflag [#allocation7], %s463
        %s465 = sand.u32 %s62, 1
        %s466 = smul.addr %s465, 4
        %s467 = scalar_lea.vmem [#allocation6], %s466
        // Predicated region
        $region65: #{tpu_custom_call.1} parent=63 // pred_check
          %p468 = pneg %p75
        $region66: #{tpu_custom_call.1} parent=63 // pred_check_branch
          %470 = sbr.rel (%p468) target = $region68
        $region67: #{tpu_custom_call.1} parent=63 // pred_region
          %471 = dma.done %s464, 64
        $region68: #{tpu_custom_call.1} parent=63 // pred_fallthru
          _
        %s472 = sand.u32 %s33, 1
        %s473 = scalar_lea.sflag [#allocation10], %s472
        %s474 = sand.u32 %s90, 1
        %s475 = smul.addr %s474, 4
        %s476 = scalar_lea.vmem [#allocation9], %s475
        // Predicated region
        $region69: #{tpu_custom_call.1} parent=63 // pred_check
          %p477 = pneg %p103
        $region70: #{tpu_custom_call.1} parent=63 // pred_check_branch
          %479 = sbr.rel (%p477) target = $region72
        $region71: #{tpu_custom_call.1} parent=63 // pred_region
          %480 = dma.done %s473, 64
        $region72: #{tpu_custom_call.1} parent=63 // pred_fallthru
          _
        // Predicated region
        $region73: #{tpu_custom_call.1} parent=63 // pred_check
          %p481 = pneg %p124
        $region74: #{tpu_custom_call.1} parent=63 // pred_check_branch
          %483 = sbr.rel (%p481) target = $region76
        $region75: #{tpu_custom_call.1} parent=63 // pred_region
          %484 = dma.done [#allocation10], 256
        $region76: #{tpu_custom_call.1} parent=63 // pred_fallthru
          _
        // Predicated region
        $region77: #{tpu_custom_call.1} parent=63 // pred_check
          %p485 = pneg %p166
        $region78: #{tpu_custom_call.1} parent=63 // pred_check_branch
          %487 = sbr.rel (%p485) target = $region80
        $region79: #{tpu_custom_call.1} parent=63 // pred_region
          %488 = dma.done [#allocation13], 256
        $region80: #{tpu_custom_call.1} parent=63 // pred_fallthru
          _
        // Predicated region
        $region81: #{tpu_custom_call.1} parent=63 // pred_check
          %p489 = pneg %p229
        $region82: #{tpu_custom_call.1} parent=63 // pred_check_branch
          %491 = sbr.rel (%p489) target = $region84
        $region83: #{tpu_custom_call.1} parent=63 // pred_region
          %492 = dma.done [#allocation13], 16
        $region84: #{tpu_custom_call.1} parent=63 // pred_fallthru
          _
        // Predicated region
        $region85: #{tpu_custom_call.1} parent=63 // pred_check
          %p493 = pneg %p250
        $region86: #{tpu_custom_call.1} parent=63 // pred_check_branch
          %495 = sbr.rel (%p493) target = $region88
        $region87: #{tpu_custom_call.1} parent=63 // pred_region
          %496 = dma.done [#allocation16], 256
        $region88: #{tpu_custom_call.1} parent=63 // pred_fallthru
          _
        %s497 = sand.u32 %s62, 1
        %s498 = scalar_lea.sflag [#allocation7], %s497
        %s499 = sand.u32 %s62, 1
        %s500 = smul.addr %s499, 4
        %s501 = scalar_lea.vmem [#allocation6], %s500
        %p502 = pneg %p75
        %p503 = pneg %p72
        %s504 = sand.u32 %s33, 1
        %s505 = scalar_lea.sflag [#allocation10], %s504
        %s506 = sand.u32 %s90, 1
        %s507 = smul.addr %s506, 4
        %s508 = scalar_lea.vmem [#allocation9], %s507
        %p509 = pneg %p103
        %p510 = pneg %p100
        %p511 = pneg %p124
        %p512 = pneg %p121
        %p513 = pneg %p145
        %p514 = pneg %p142
        %p515 = pneg %p166
        %p516 = pneg %p163
        %p517 = pneg %p187
        %p518 = pneg %p184
        %p519 = pneg %p208
        %p520 = pneg %p205
        %p521 = pneg %p229
        %p522 = pneg %p226
        %p523 = pneg %p250
        %p524 = pneg %p247
        %p525 = pneg %p271
        %p526 = pneg %p268
        %p527 = scmp.lt.s32.totalorder %s39, 0
        %s528 = scalar_select %p527, %s39, 0
        %p529 = scmp.lt.s32.totalorder %s40, 0
        %s530 = scalar_select %p529, %s40, 0
        %s531 = sadd.s32 %s530, %s528
        %s532 = smul.addr %s531, 8
        %s533 = scalar_lea.vmem %s10, %s532
        %p534 = pneg %p299
        %p535 = pneg %p296
        %p536 = pneg %p327
        %p537 = pneg %p324
        %s538 = sand.u32 %s314, 1
        %s539 = scalar_lea.sflag [#allocation8], %s538
        %s540 = sand.u32 %s314, 1
        %s541 = smul.addr %s540, 8
        %s542 = scalar_lea.vmem [#allocation17], %s541
        %p543 = scmp.lt.s32.totalorder %s39, 0
        %s544 = scalar_select %p543, %s39, 0
        %p545 = scmp.lt.s32.totalorder %s40, 0
        %s546 = scalar_select %p545, %s40, 0
        %s547 = sadd.s32 %s546, %s544
        %s548 = smul.addr %s547, 8
        %s549 = scalar_lea.vmem %s10, %s548
        %p551 = scmp.eq.s32.totalorder %s40, 0
        // Predicated region
        $region89: #{tpu_custom_call.1} parent=63 // pred_check
          %p552 = pneg %p551
        $region90: #{tpu_custom_call.1} parent=63 // pred_check_branch
          %554 = sbr.rel (%p552) target = $region92
        $region91: #{tpu_custom_call.1} parent=63 // pred_region
          %v555 = vld [vmem:[%s467] sm:$0xf]
          %v556 = vld [vmem:[#allocation11] sm:$0xf]
          %v557 = vld [vmem:[#allocation11 + $0x4] sm:$0xf]
          %v558 = vld [vmem:[#allocation11 + $0x8] sm:$0xf]
          %v559 = vld [vmem:[#allocation11 + $0xc] sm:$0xf]
          %v560 = vld [vmem:[%s3] sm:$0x1]
          %v562 = vlaneseq
          %v563 = vshrl.u32 %v562, 7
          %v564 = vsub.s32 0, %v563
          %v565 = vrot.slane %v560, %v564
          %v571 = vunpack.c.l.b16 %v556
          %v572 = vunpack.c.l.b16 %v557
          %v573 = vunpack.c.l.b16 %v558
          %v574 = vunpack.c.l.b16 %v559
          %v575 = vpack.c.b16 %v572, %v571
          %v576 = vpack.c.b16 %v574, %v573
          %vm579 = vcmask 261120
          %v581 = vsel %vm579, %v555, 0
          %583 = vmatprep.subr.bf16.mxu0 0
          %584 = vmatpush1.bf16.msra.mxu0 %v575
          %585 = vmatprep.subr.bf16.mxu0 0
          %586 = vmatpush1.bf16.msra.mxu0 %v576
          %587 = vmatprep.subr.bf16.mxu0 0
          %588 = vmatpush1.bf16.msra.mxu0 0
          %589 = vmatprep.subr.bf16.mxu0 0
          %590 = vmatpush1.bf16.msra.mxu0 0
          %591 = vmatprep.subr.bf16.mxu0 0
          %592 = vmatpush1.bf16.msra.mxu0 0
          %593 = vmatprep.subr.bf16.mxu0 0
          %594 = vmatpush1.bf16.msra.mxu0 0
          %595 = vmatprep.subr.bf16.mxu0 0
          %596 = vmatpush1.bf16.msra.mxu0 0
          %597 = vmatprep.subr.bf16.mxu0 0
          %598 = vmatpush1.bf16.msra.mxu0 0
          %599 = vmatprep.subr.bf16.mxu0 0
          %600 = vmatpush1.bf16.msra.mxu0 0
          %601 = vmatprep.subr.bf16.mxu0 0
          %602 = vmatpush1.bf16.msra.mxu0 0
          %603 = vmatprep.subr.bf16.mxu0 0
          %604 = vmatpush1.bf16.msra.mxu0 0
          %605 = vmatprep.subr.bf16.mxu0 0
          %606 = vmatpush1.bf16.msra.mxu0 0
          %607 = vmatprep.subr.bf16.mxu0 0
          %608 = vmatpush1.bf16.msra.mxu0 0
          %609 = vmatprep.subr.bf16.mxu0 0
          %610 = vmatpush1.bf16.msra.mxu0 0
          %611 = vmatprep.subr.bf16.mxu0 0
          %612 = vmatpush1.bf16.msra.mxu0 0
          %613 = vmatprep.subr.bf16.mxu0 0
          %614 = vmatpush1.bf16.msra.mxu0 0
          %615 = vmatprep.mubr.bf16.mxu0 0
          %616 = vmatmul.mubr.bf16.gmra.mrb[0].mxu0 %v581
          %v617 = vpop.f32.mrb[0].mxu0
          %v618 = vadd.f32 %v565, %v617
          %v619 = vpop.f32.mrb[0].mxu0
          %v620 = vpop.f32.mrb[0].mxu0
          %v621 = vpop.f32.mrb[0].mxu0
          %622 = vdwg.mxu0
          %v623 = vmul.f32 %v618, 0.35355338
          %625 = vrot.lane.b32.xlu0 %v623, 120
          %v626 = vpop.permute.xlu0 %625
          %628 = vrot.lane.b32.xlu0 %v623, 112
          %v629 = vpop.permute.xlu0 %628
          %631 = vrot.lane.b32.xlu0 %v623, 104
          %v632 = vpop.permute.xlu0 %631
          %v634 = vcombine.low %v623, %v629
          %v635 = vcombine.high %v623, %v629
          %v637 = vunpack.c.l.s4 1983009808
          %v638 = vunpack.c.0.s8 %v637
          %v639 = vlaneseq
          %v640 = vshrl.u32 %v639, 7
          %v641 = vsub.s32 %v638, %v640
          %v642 = vrot.slane %v634, %v641
          %v644 = vunpack.c.l.s4 1983009808
          %v645 = vunpack.c.0.s8 %v644
          %v646 = vlaneseq
          %v647 = vshrl.u32 %v646, 7
          %v648 = vsub.s32 %v645, %v647
          %v649 = vrot.slane %v635, %v648
          %v650 = vcombine.low %v626, %v632
          %v651 = vcombine.high %v626, %v632
          %v653 = vunpack.c.l.s4 1983009808
          %v654 = vunpack.c.0.s8 %v653
          %v655 = vlaneseq
          %v656 = vshrl.u32 %v655, 7
          %v657 = vsub.s32 %v654, %v656
          %v658 = vrot.slane %v650, %v657
          %v660 = vunpack.c.l.s4 1983009808
          %v661 = vunpack.c.0.s8 %v660
          %v662 = vlaneseq
          %v663 = vshrl.u32 %v662, 7
          %v664 = vsub.s32 %v661, %v663
          %v665 = vrot.slane %v651, %v664
          %v666 = vcombine.low %v642, %v658
          %v667 = vcombine.high %v642, %v658
          %v669 = vunpack.c.l.s4 1934713408
          %v670 = vunpack.c.0.s8 %v669
          %v671 = vlaneseq
          %v672 = vshrl.u32 %v671, 7
          %v673 = vsub.s32 %v670, %v672
          %v674 = vrot.slane %v666, %v673
          %v676 = vunpack.c.l.s4 1934713408
          %v677 = vunpack.c.0.s8 %v676
          %v678 = vlaneseq
          %v679 = vshrl.u32 %v678, 7
          %v680 = vsub.s32 %v677, %v679
          %v681 = vrot.slane %v667, %v680
          %v682 = vcombine.low %v649, %v665
          %v683 = vcombine.high %v649, %v665
          %v685 = vunpack.c.l.s4 1934713408
          %v686 = vunpack.c.0.s8 %v685
          %v687 = vlaneseq
          %v688 = vshrl.u32 %v687, 7
          %v689 = vsub.s32 %v686, %v688
          %v690 = vrot.slane %v682, %v689
          %v692 = vunpack.c.l.s4 1934713408
          %v693 = vunpack.c.0.s8 %v692
          %v694 = vlaneseq
          %v695 = vshrl.u32 %v694, 7
          %v696 = vsub.s32 %v693, %v695
          %v697 = vrot.slane %v683, %v696
          %v698 = vcombine.high %v674, 0.0
          %v699 = vcombine.high %v681, 0.0
          %v700 = vcombine.high %v690, 0.0
          %v701 = vcombine.high %v697, 0.0
          %v702 = vcombine.low %v674, %v681
          %v704 = vunpack.c.l.s4 1983009808
          %v705 = vunpack.c.0.s8 %v704
          %v706 = vlaneseq
          %v707 = vshrl.u32 %v706, 7
          %v708 = vsub.s32 %v705, %v707
          %v709 = vrot.slane %v702, %v708
          %v710 = vcombine.low %v698, %v699
          %v712 = vunpack.c.l.s4 1983009808
          %v713 = vunpack.c.0.s8 %v712
          %v714 = vlaneseq
          %v715 = vshrl.u32 %v714, 7
          %v716 = vsub.s32 %v713, %v715
          %v717 = vrot.slane %v710, %v716
          %v718 = vcombine.low %v690, %v697
          %v720 = vunpack.c.l.s4 1983009808
          %v721 = vunpack.c.0.s8 %v720
          %v722 = vlaneseq
          %v723 = vshrl.u32 %v722, 7
          %v724 = vsub.s32 %v721, %v723
          %v725 = vrot.slane %v718, %v724
          %v726 = vcombine.low %v700, %v701
          %v728 = vunpack.c.l.s4 1983009808
          %v729 = vunpack.c.0.s8 %v728
          %v730 = vlaneseq
          %v731 = vshrl.u32 %v730, 7
          %v732 = vsub.s32 %v729, %v731
          %v733 = vrot.slane %v726, %v732
          %v734 = vcombine.low %v709, %v717
          %v735 = vcombine.high %v709, %v717
          %v737 = vunpack.c.l.s4 1934713408
          %v738 = vunpack.c.0.s8 %v737
          %v739 = vlaneseq
          %v740 = vshrl.u32 %v739, 7
          %v741 = vsub.s32 %v738, %v740
          %v742 = vrot.slane %v734, %v741
          %v744 = vunpack.c.l.s4 1934713408
          %v745 = vunpack.c.0.s8 %v744
          %v746 = vlaneseq
          %v747 = vshrl.u32 %v746, 7
          %v748 = vsub.s32 %v745, %v747
          %v749 = vrot.slane %v735, %v748
          %v750 = vcombine.low %v725, %v733
          %v751 = vcombine.high %v725, %v733
          %v753 = vunpack.c.l.s4 1934713408
          %v754 = vunpack.c.0.s8 %v753
          %v755 = vlaneseq
          %v756 = vshrl.u32 %v755, 7
          %v757 = vsub.s32 %v754, %v756
          %v758 = vrot.slane %v750, %v757
          %v760 = vunpack.c.l.s4 1934713408
          %v761 = vunpack.c.0.s8 %v760
          %v762 = vlaneseq
          %v763 = vshrl.u32 %v762, 7
          %v764 = vsub.s32 %v761, %v763
          %v765 = vrot.slane %v751, %v764
          %v766 = vcombine.low %v742, %v758
          %v767 = vcombine.high %v742, %v758
          %v768 = vcombine.low %v749, %v765
          %v769 = vcombine.high %v749, %v765
          %v770 = vpack.c.bf16 %v766, %v766
          %v771 = vpack.c.bf16 %v767, %v767
          %v772 = vpack.c.bf16 %v768, %v768
          %v773 = vpack.c.bf16 %v769, %v769
          %vm774 = vcmask 60416
          %775 = vst.msk [vmem:[#allocation2] sm:$0xf] %vm774, %v770
          %776 = vst.msk [vmem:[#allocation2 + $0x4] sm:$0xf] %vm774, %v771
          %777 = vst.msk [vmem:[#allocation2 + $0x8] sm:$0xf] %vm774, %v772
          %778 = vst.msk [vmem:[#allocation2 + $0xc] sm:$0xf] %vm774, %v773
          %vm779 = vcmask 7168
          %780 = vst.msk [vmem:[#allocation3] sm:$0xff] %vm779, -inf
          %781 = vst.msk [vmem:[#allocation3 + $0x8] sm:$0xff] %vm779, -inf
          %782 = vst.msk [vmem:[#allocation3 + $0x10] sm:$0xff] %vm779, -inf
          %783 = vst.msk [vmem:[#allocation3 + $0x18] sm:$0xff] %vm779, -inf
          %784 = vst.msk [vmem:[#allocation4] sm:$0xff] %vm779, 0.0
          %785 = vst.msk [vmem:[#allocation4 + $0x8] sm:$0xff] %vm779, 0.0
          %786 = vst.msk [vmem:[#allocation4 + $0x10] sm:$0xff] %vm779, 0.0
          %787 = vst.msk [vmem:[#allocation4 + $0x18] sm:$0xff] %vm779, 0.0
          %vm788 = vcmask 64512
          %789 = vst.msk [vmem:[#allocation5] sm:$0xff] %vm788, 0.0
          %790 = vst.msk [vmem:[#allocation5 + $0x8] sm:$0xff] %vm788, 0.0
          %791 = vst.msk [vmem:[#allocation5 + $0x10] sm:$0xff] %vm788, 0.0
          %792 = vst.msk [vmem:[#allocation5 + $0x18] sm:$0xff] %vm788, 0.0
        $region92: #{tpu_custom_call.1} parent=63 // pred_fallthru
          _
        %v793 = vld [vmem:[%s476] sm:$0xf]
        %v794 = vld [vmem:[#allocation12] sm:$0xf]
        %v795 = vld [vmem:[#allocation12 + $0x4] sm:$0xf]
        %v796 = vld [vmem:[#allocation12 + $0x8] sm:$0xf]
        %v797 = vld [vmem:[#allocation12 + $0xc] sm:$0xf]
        %v798 = vld [vmem:[%s5] sm:$0x1]
        %v800 = vlaneseq
        %v801 = vshrl.u32 %v800, 7
        %v802 = vsub.s32 0, %v801
        %v803 = vrot.slane %v798, %v802
        %v809 = vunpack.c.l.b16 %v794
        %v810 = vunpack.c.l.b16 %v795
        %v811 = vunpack.c.l.b16 %v796
        %v812 = vunpack.c.l.b16 %v797
        %v813 = vpack.c.b16 %v810, %v809
        %v814 = vpack.c.b16 %v812, %v811
        %vm817 = vcmask 261120
        %v819 = vsel %vm817, %v793, 0
        %821 = vmatprep.subr.bf16.mxu0 0
        %822 = vmatpush1.bf16.msra.mxu0 %v813
        %823 = vmatprep.subr.bf16.mxu0 0
        %824 = vmatpush1.bf16.msra.mxu0 %v814
        %825 = vmatprep.subr.bf16.mxu0 0
        %826 = vmatpush1.bf16.msra.mxu0 0
        %827 = vmatprep.subr.bf16.mxu0 0
        %828 = vmatpush1.bf16.msra.mxu0 0
        %829 = vmatprep.subr.bf16.mxu0 0
        %830 = vmatpush1.bf16.msra.mxu0 0
        %831 = vmatprep.subr.bf16.mxu0 0
        %832 = vmatpush1.bf16.msra.mxu0 0
        %833 = vmatprep.subr.bf16.mxu0 0
        %834 = vmatpush1.bf16.msra.mxu0 0
        %835 = vmatprep.subr.bf16.mxu0 0
        %836 = vmatpush1.bf16.msra.mxu0 0
        %837 = vmatprep.subr.bf16.mxu0 0
        %838 = vmatpush1.bf16.msra.mxu0 0
        %839 = vmatprep.subr.bf16.mxu0 0
        %840 = vmatpush1.bf16.msra.mxu0 0
        %841 = vmatprep.subr.bf16.mxu0 0
        %842 = vmatpush1.bf16.msra.mxu0 0
        %843 = vmatprep.subr.bf16.mxu0 0
        %844 = vmatpush1.bf16.msra.mxu0 0
        %845 = vmatprep.subr.bf16.mxu0 0
        %846 = vmatpush1.bf16.msra.mxu0 0
        %847 = vmatprep.subr.bf16.mxu0 0
        %848 = vmatpush1.bf16.msra.mxu0 0
        %849 = vmatprep.subr.bf16.mxu0 0
        %850 = vmatpush1.bf16.msra.mxu0 0
        %851 = vmatprep.subr.bf16.mxu0 0
        %852 = vmatpush1.bf16.msra.mxu0 0
        %853 = vmatprep.mubr.bf16.mxu0 0
        %854 = vmatmul.mubr.bf16.gmra.mrb[0].mxu0 %v819
        %v855 = vpop.f32.mrb[0].mxu0
        %v856 = vadd.f32 %v803, %v855
        %v857 = vpop.f32.mrb[0].mxu0
        %v858 = vpop.f32.mrb[0].mxu0
        %v859 = vpop.f32.mrb[0].mxu0
        %860 = vdwg.mxu0
        %v861 = vld [vmem:[%s6] sm:$0xf]
        %v862 = vld [vmem:[%s6 + $0x4] sm:$0xf]
        %v863 = vld [vmem:[%s6 + $0x8] sm:$0xf]
        %v864 = vld [vmem:[%s6 + $0xc] sm:$0xf]
        %v865 = vld [vmem:[#allocation14] sm:$0x1]
        %v867 = vlaneseq
        %v868 = vshrl.u32 %v867, 7
        %v869 = vsub.s32 0, %v868
        %v870 = vrot.slane %v865, %v869
        %v876 = vunpack.c.l.b16 %v861
        %v877 = vunpack.c.l.b16 %v862
        %v878 = vunpack.c.l.b16 %v863
        %v879 = vunpack.c.l.b16 %v864
        %v880 = vpack.c.b16 %v877, %v876
        %v881 = vpack.c.b16 %v879, %v878
        %884 = vmatprep.subr.bf16.mxu0 0
        %885 = vmatpush1.bf16.msra.mxu0 %v880
        %886 = vmatprep.subr.bf16.mxu0 0
        %887 = vmatpush1.bf16.msra.mxu0 %v881
        %888 = vmatprep.subr.bf16.mxu0 0
        %889 = vmatpush1.bf16.msra.mxu0 0
        %890 = vmatprep.subr.bf16.mxu0 0
        %891 = vmatpush1.bf16.msra.mxu0 0
        %892 = vmatprep.subr.bf16.mxu0 0
        %893 = vmatpush1.bf16.msra.mxu0 0
        %894 = vmatprep.subr.bf16.mxu0 0
        %895 = vmatpush1.bf16.msra.mxu0 0
        %896 = vmatprep.subr.bf16.mxu0 0
        %897 = vmatpush1.bf16.msra.mxu0 0
        %898 = vmatprep.subr.bf16.mxu0 0
        %899 = vmatpush1.bf16.msra.mxu0 0
        %900 = vmatprep.subr.bf16.mxu0 0
        %901 = vmatpush1.bf16.msra.mxu0 0
        %902 = vmatprep.subr.bf16.mxu0 0
        %903 = vmatpush1.bf16.msra.mxu0 0
        %904 = vmatprep.subr.bf16.mxu0 0
        %905 = vmatpush1.bf16.msra.mxu0 0
        %906 = vmatprep.subr.bf16.mxu0 0
        %907 = vmatpush1.bf16.msra.mxu0 0
        %908 = vmatprep.subr.bf16.mxu0 0
        %909 = vmatpush1.bf16.msra.mxu0 0
        %910 = vmatprep.subr.bf16.mxu0 0
        %911 = vmatpush1.bf16.msra.mxu0 0
        %912 = vmatprep.subr.bf16.mxu0 0
        %913 = vmatpush1.bf16.msra.mxu0 0
        %914 = vmatprep.subr.bf16.mxu0 0
        %915 = vmatpush1.bf16.msra.mxu0 0
        %916 = vmatprep.mubr.bf16.mxu0 0
        %917 = vmatmul.mubr.bf16.gmra.mrb[0].mxu0 %v819
        %v918 = vpop.f32.mrb[0].mxu0
        %v919 = vadd.f32 %v870, %v918
        %v920 = vpop.f32.mrb[0].mxu0
        %v921 = vpop.f32.mrb[0].mxu0
        %v922 = vpop.f32.mrb[0].mxu0
        %923 = vdwg.mxu0
        %925 = vrot.lane.b32.xlu0 %v856, 120
        %v926 = vpop.permute.xlu0 %925
        %928 = vrot.lane.b32.xlu0 %v856, 112
        %v929 = vpop.permute.xlu0 %928
        %931 = vrot.lane.b32.xlu0 %v856, 104
        %v932 = vpop.permute.xlu0 %931
        %v934 = vcombine.low %v856, %v929
        %v935 = vcombine.high %v856, %v929
        %v937 = vunpack.c.l.s4 1983009808
        %v938 = vunpack.c.0.s8 %v937
        %v939 = vlaneseq
        %v940 = vshrl.u32 %v939, 7
        %v941 = vsub.s32 %v938, %v940
        %v942 = vrot.slane %v934, %v941
        %v944 = vunpack.c.l.s4 1983009808
        %v945 = vunpack.c.0.s8 %v944
        %v946 = vlaneseq
        %v947 = vshrl.u32 %v946, 7
        %v948 = vsub.s32 %v945, %v947
        %v949 = vrot.slane %v935, %v948
        %v950 = vcombine.low %v926, %v932
        %v951 = vcombine.high %v926, %v932
        %v953 = vunpack.c.l.s4 1983009808
        %v954 = vunpack.c.0.s8 %v953
        %v955 = vlaneseq
        %v956 = vshrl.u32 %v955, 7
        %v957 = vsub.s32 %v954, %v956
        %v958 = vrot.slane %v950, %v957
        %v960 = vunpack.c.l.s4 1983009808
        %v961 = vunpack.c.0.s8 %v960
        %v962 = vlaneseq
        %v963 = vshrl.u32 %v962, 7
        %v964 = vsub.s32 %v961, %v963
        %v965 = vrot.slane %v951, %v964
        %v966 = vcombine.low %v942, %v958
        %v967 = vcombine.high %v942, %v958
        %v969 = vunpack.c.l.s4 1934713408
        %v970 = vunpack.c.0.s8 %v969
        %v971 = vlaneseq
        %v972 = vshrl.u32 %v971, 7
        %v973 = vsub.s32 %v970, %v972
        %v974 = vrot.slane %v966, %v973
        %v976 = vunpack.c.l.s4 1934713408
        %v977 = vunpack.c.0.s8 %v976
        %v978 = vlaneseq
        %v979 = vshrl.u32 %v978, 7
        %v980 = vsub.s32 %v977, %v979
        %v981 = vrot.slane %v967, %v980
        %v982 = vcombine.low %v949, %v965
        %v983 = vcombine.high %v949, %v965
        %v985 = vunpack.c.l.s4 1934713408
        %v986 = vunpack.c.0.s8 %v985
        %v987 = vlaneseq
        %v988 = vshrl.u32 %v987, 7
        %v989 = vsub.s32 %v986, %v988
        %v990 = vrot.slane %v982, %v989
        %v992 = vunpack.c.l.s4 1934713408
        %v993 = vunpack.c.0.s8 %v992
        %v994 = vlaneseq
        %v995 = vshrl.u32 %v994, 7
        %v996 = vsub.s32 %v993, %v995
        %v997 = vrot.slane %v983, %v996
        %v998 = vcombine.high %v974, 0.0
        %v999 = vcombine.high %v981, 0.0
        %v1000 = vcombine.high %v990, 0.0
        %v1001 = vcombine.high %v997, 0.0
        %v1002 = vcombine.low %v974, %v981
        %v1004 = vunpack.c.l.s4 1983009808
        %v1005 = vunpack.c.0.s8 %v1004
        %v1006 = vlaneseq
        %v1007 = vshrl.u32 %v1006, 7
        %v1008 = vsub.s32 %v1005, %v1007
        %v1009 = vrot.slane %v1002, %v1008
        %v1010 = vcombine.low %v998, %v999
        %v1012 = vunpack.c.l.s4 1983009808
        %v1013 = vunpack.c.0.s8 %v1012
        %v1014 = vlaneseq
        %v1015 = vshrl.u32 %v1014, 7
        %v1016 = vsub.s32 %v1013, %v1015
        %v1017 = vrot.slane %v1010, %v1016
        %v1018 = vcombine.low %v990, %v997
        %v1020 = vunpack.c.l.s4 1983009808
        %v1021 = vunpack.c.0.s8 %v1020
        %v1022 = vlaneseq
        %v1023 = vshrl.u32 %v1022, 7
        %v1024 = vsub.s32 %v1021, %v1023
        %v1025 = vrot.slane %v1018, %v1024
        %v1026 = vcombine.low %v1000, %v1001
        %v1028 = vunpack.c.l.s4 1983009808
        %v1029 = vunpack.c.0.s8 %v1028
        %v1030 = vlaneseq
        %v1031 = vshrl.u32 %v1030, 7
        %v1032 = vsub.s32 %v1029, %v1031
        %v1033 = vrot.slane %v1026, %v1032
        %v1034 = vcombine.low %v1009, %v1017
        %v1035 = vcombine.high %v1009, %v1017
        %v1037 = vunpack.c.l.s4 1934713408
        %v1038 = vunpack.c.0.s8 %v1037
        %v1039 = vlaneseq
        %v1040 = vshrl.u32 %v1039, 7
        %v1041 = vsub.s32 %v1038, %v1040
        %v1042 = vrot.slane %v1034, %v1041
        %v1044 = vunpack.c.l.s4 1934713408
        %v1045 = vunpack.c.0.s8 %v1044
        %v1046 = vlaneseq
        %v1047 = vshrl.u32 %v1046, 7
        %v1048 = vsub.s32 %v1045, %v1047
        %v1049 = vrot.slane %v1035, %v1048
        %v1050 = vcombine.low %v1025, %v1033
        %v1051 = vcombine.high %v1025, %v1033
        %v1053 = vunpack.c.l.s4 1934713408
        %v1054 = vunpack.c.0.s8 %v1053
        %v1055 = vlaneseq
        %v1056 = vshrl.u32 %v1055, 7
        %v1057 = vsub.s32 %v1054, %v1056
        %v1058 = vrot.slane %v1050, %v1057
        %v1060 = vunpack.c.l.s4 1934713408
        %v1061 = vunpack.c.0.s8 %v1060
        %v1062 = vlaneseq
        %v1063 = vshrl.u32 %v1062, 7
        %v1064 = vsub.s32 %v1061, %v1063
        %v1065 = vrot.slane %v1051, %v1064
        %v1066 = vcombine.low %v1042, %v1058
        %v1067 = vcombine.high %v1042, %v1058
        %v1068 = vcombine.low %v1049, %v1065
        %v1069 = vcombine.high %v1049, %v1065
        %1071 = vrot.lane.b32.xlu0 %v919, 120
        %v1072 = vpop.permute.xlu0 %1071
        %1074 = vrot.lane.b32.xlu0 %v919, 112
        %v1075 = vpop.permute.xlu0 %1074
        %1077 = vrot.lane.b32.xlu0 %v919, 104
        %v1078 = vpop.permute.xlu0 %1077
        %v1080 = vcombine.low %v919, %v1075
        %v1081 = vcombine.high %v919, %v1075
        %v1083 = vunpack.c.l.s4 1983009808
        %v1084 = vunpack.c.0.s8 %v1083
        %v1085 = vlaneseq
        %v1086 = vshrl.u32 %v1085, 7
        %v1087 = vsub.s32 %v1084, %v1086
        %v1088 = vrot.slane %v1080, %v1087
        %v1090 = vunpack.c.l.s4 1983009808
        %v1091 = vunpack.c.0.s8 %v1090
        %v1092 = vlaneseq
        %v1093 = vshrl.u32 %v1092, 7
        %v1094 = vsub.s32 %v1091, %v1093
        %v1095 = vrot.slane %v1081, %v1094
        %v1096 = vcombine.low %v1072, %v1078
        %v1097 = vcombine.high %v1072, %v1078
        %v1099 = vunpack.c.l.s4 1983009808
        %v1100 = vunpack.c.0.s8 %v1099
        %v1101 = vlaneseq
        %v1102 = vshrl.u32 %v1101, 7
        %v1103 = vsub.s32 %v1100, %v1102
        %v1104 = vrot.slane %v1096, %v1103
        %v1106 = vunpack.c.l.s4 1983009808
        %v1107 = vunpack.c.0.s8 %v1106
        %v1108 = vlaneseq
        %v1109 = vshrl.u32 %v1108, 7
        %v1110 = vsub.s32 %v1107, %v1109
        %v1111 = vrot.slane %v1097, %v1110
        %v1112 = vcombine.low %v1088, %v1104
        %v1113 = vcombine.high %v1088, %v1104
        %v1115 = vunpack.c.l.s4 1934713408
        %v1116 = vunpack.c.0.s8 %v1115
        %v1117 = vlaneseq
        %v1118 = vshrl.u32 %v1117, 7
        %v1119 = vsub.s32 %v1116, %v1118
        %v1120 = vrot.slane %v1112, %v1119
        %v1122 = vunpack.c.l.s4 1934713408
        %v1123 = vunpack.c.0.s8 %v1122
        %v1124 = vlaneseq
        %v1125 = vshrl.u32 %v1124, 7
        %v1126 = vsub.s32 %v1123, %v1125
        %v1127 = vrot.slane %v1113, %v1126
        %v1128 = vcombine.low %v1095, %v1111
        %v1129 = vcombine.high %v1095, %v1111
        %v1131 = vunpack.c.l.s4 1934713408
        %v1132 = vunpack.c.0.s8 %v1131
        %v1133 = vlaneseq
        %v1134 = vshrl.u32 %v1133, 7
        %v1135 = vsub.s32 %v1132, %v1134
        %v1136 = vrot.slane %v1128, %v1135
        %v1138 = vunpack.c.l.s4 1934713408
        %v1139 = vunpack.c.0.s8 %v1138
        %v1140 = vlaneseq
        %v1141 = vshrl.u32 %v1140, 7
        %v1142 = vsub.s32 %v1139, %v1141
        %v1143 = vrot.slane %v1129, %v1142
        %v1144 = vcombine.high %v1120, 0.0
        %v1145 = vcombine.high %v1127, 0.0
        %v1146 = vcombine.high %v1136, 0.0
        %v1147 = vcombine.high %v1143, 0.0
        %v1148 = vcombine.low %v1120, %v1127
        %v1150 = vunpack.c.l.s4 1983009808
        %v1151 = vunpack.c.0.s8 %v1150
        %v1152 = vlaneseq
        %v1153 = vshrl.u32 %v1152, 7
        %v1154 = vsub.s32 %v1151, %v1153
        %v1155 = vrot.slane %v1148, %v1154
        %v1156 = vcombine.low %v1144, %v1145
        %v1158 = vunpack.c.l.s4 1983009808
        %v1159 = vunpack.c.0.s8 %v1158
        %v1160 = vlaneseq
        %v1161 = vshrl.u32 %v1160, 7
        %v1162 = vsub.s32 %v1159, %v1161
        %v1163 = vrot.slane %v1156, %v1162
        %v1164 = vcombine.low %v1136, %v1143
        %v1166 = vunpack.c.l.s4 1983009808
        %v1167 = vunpack.c.0.s8 %v1166
        %v1168 = vlaneseq
        %v1169 = vshrl.u32 %v1168, 7
        %v1170 = vsub.s32 %v1167, %v1169
        %v1171 = vrot.slane %v1164, %v1170
        %v1172 = vcombine.low %v1146, %v1147
        %v1174 = vunpack.c.l.s4 1983009808
        %v1175 = vunpack.c.0.s8 %v1174
        %v1176 = vlaneseq
        %v1177 = vshrl.u32 %v1176, 7
        %v1178 = vsub.s32 %v1175, %v1177
        %v1179 = vrot.slane %v1172, %v1178
        %v1180 = vcombine.low %v1155, %v1163
        %v1181 = vcombine.high %v1155, %v1163
        %v1183 = vunpack.c.l.s4 1934713408
        %v1184 = vunpack.c.0.s8 %v1183
        %v1185 = vlaneseq
        %v1186 = vshrl.u32 %v1185, 7
        %v1187 = vsub.s32 %v1184, %v1186
        %v1188 = vrot.slane %v1180, %v1187
        %v1190 = vunpack.c.l.s4 1934713408
        %v1191 = vunpack.c.0.s8 %v1190
        %v1192 = vlaneseq
        %v1193 = vshrl.u32 %v1192, 7
        %v1194 = vsub.s32 %v1191, %v1193
        %v1195 = vrot.slane %v1181, %v1194
        %v1196 = vcombine.low %v1171, %v1179
        %v1197 = vcombine.high %v1171, %v1179
        %v1199 = vunpack.c.l.s4 1934713408
        %v1200 = vunpack.c.0.s8 %v1199
        %v1201 = vlaneseq
        %v1202 = vshrl.u32 %v1201, 7
        %v1203 = vsub.s32 %v1200, %v1202
        %v1204 = vrot.slane %v1196, %v1203
        %v1206 = vunpack.c.l.s4 1934713408
        %v1207 = vunpack.c.0.s8 %v1206
        %v1208 = vlaneseq
        %v1209 = vshrl.u32 %v1208, 7
        %v1210 = vsub.s32 %v1207, %v1209
        %v1211 = vrot.slane %v1197, %v1210
        %v1212 = vcombine.low %v1188, %v1204
        %v1213 = vcombine.high %v1188, %v1204
        %v1214 = vcombine.low %v1195, %v1211
        %v1215 = vcombine.high %v1195, %v1211
        %v1216 = vpack.c.bf16 %v1066, %v1066
        %v1217 = vpack.c.bf16 %v1067, %v1067
        %v1218 = vpack.c.bf16 %v1068, %v1068
        %v1219 = vpack.c.bf16 %v1069, %v1069
        %v1220 = vpack.c.bf16 %v1212, %v1212
        %v1221 = vpack.c.bf16 %v1213, %v1213
        %v1222 = vpack.c.bf16 %v1214, %v1214
        %v1223 = vpack.c.bf16 %v1215, %v1215
        %v1224 = vld [vmem:[#allocation2] sm:$0xf]
        %v1225 = vld [vmem:[#allocation2 + $0x4] sm:$0xf]
        %v1226 = vld [vmem:[#allocation2 + $0x8] sm:$0xf]
        %v1227 = vld [vmem:[#allocation2 + $0xc] sm:$0xf]
        %v1228 = vld [vmem:[%s549] sm:$0xff]
        %vm1229 = vcmask 64512
        %v1231 = vsel %vm1229, %v1224, 0
        %v1234 = vsel %vm1229, %v1216, 0
        %1236 = vmatprep.subr.bf16.mxu0 0
        %1237 = vmatpush1.bf16.xpose.msra.mxu0 %v1234
        %1238 = vmatprep.subr.bf16.mxu0 0
        %1239 = vmatpush1.bf16.xpose.msra.mxu0 0
        %1240 = vmatprep.subr.bf16.mxu0 0
        %1241 = vmatpush1.bf16.xpose.msra.mxu0 0
        %1242 = vmatprep.subr.bf16.mxu0 0
        %1243 = vmatpush1.bf16.xpose.msra.mxu0 0
        %1244 = vmatprep.subr.bf16.mxu0 0
        %1245 = vmatpush1.bf16.xpose.msra.mxu0 0
        %1246 = vmatprep.subr.bf16.mxu0 0
        %1247 = vmatpush1.bf16.xpose.msra.mxu0 0
        %1248 = vmatprep.subr.bf16.mxu0 0
        %1249 = vmatpush1.bf16.xpose.msra.mxu0 0
        %1250 = vmatprep.subr.bf16.mxu0 0
        %1251 = vmatpush1.bf16.xpose.msra.mxu0 0
        %1252 = vmatprep.subr.bf16.mxu0 0
        %1253 = vmatpush1.bf16.xpose.msra.mxu0 0
        %1254 = vmatprep.subr.bf16.mxu0 0
        %1255 = vmatpush1.bf16.xpose.msra.mxu0 0
        %1256 = vmatprep.subr.bf16.mxu0 0
        %1257 = vmatpush1.bf16.xpose.msra.mxu0 0
        %1258 = vmatprep.subr.bf16.mxu0 0
        %1259 = vmatpush1.bf16.xpose.msra.mxu0 0
        %1260 = vmatprep.subr.bf16.mxu0 0
        %1261 = vmatpush1.bf16.xpose.msra.mxu0 0
        %1262 = vmatprep.subr.bf16.mxu0 0
        %1263 = vmatpush1.bf16.xpose.msra.mxu0 0
        %1264 = vmatprep.subr.bf16.mxu0 0
        %1265 = vmatpush1.bf16.xpose.msra.mxu0 0
        %1266 = vmatprep.subr.bf16.mxu0 0
        %1267 = vmatpush1.bf16.xpose.msra.mxu0 0
        %1268 = vmatprep.mubr.bf16.mxu0 0
        %1269 = vmatmul.mubr.bf16.gmra.mrb[0].mxu0 %v1231
        %v1270 = vpop.f32.mrb[0].mxu0
        %v1271 = vadd.f32 %v1228, %v1270
        %v1272 = vpop.f32.mrb[0].mxu0
        %v1273 = vpop.f32.mrb[0].mxu0
        %v1274 = vpop.f32.mrb[0].mxu0
        %1275 = vdwg.mxu0
        %v1277 = vsel %vm1229, %v1225, 0
        %v1280 = vsel %vm1229, %v1217, 0
        %1282 = vmatprep.subr.bf16.mxu0 0
        %1283 = vmatpush1.bf16.xpose.msra.mxu0 %v1280
        %1284 = vmatprep.subr.bf16.mxu0 0
        %1285 = vmatpush1.bf16.xpose.msra.mxu0 0
        %1286 = vmatprep.subr.bf16.mxu0 0
        %1287 = vmatpush1.bf16.xpose.msra.mxu0 0
        %1288 = vmatprep.subr.bf16.mxu0 0
        %1289 = vmatpush1.bf16.xpose.msra.mxu0 0
        %1290 = vmatprep.subr.bf16.mxu0 0
        %1291 = vmatpush1.bf16.xpose.msra.mxu0 0
        %1292 = vmatprep.subr.bf16.mxu0 0
        %1293 = vmatpush1.bf16.xpose.msra.mxu0 0
        %1294 = vmatprep.subr.bf16.mxu0 0
        %1295 = vmatpush1.bf16.xpose.msra.mxu0 0
        %1296 = vmatprep.subr.bf16.mxu0 0
        %1297 = vmatpush1.bf16.xpose.msra.mxu0 0
        %1298 = vmatprep.subr.bf16.mxu0 0
        %1299 = vmatpush1.bf16.xpose.msra.mxu0 0
        %1300 = vmatprep.subr.bf16.mxu0 0
        %1301 = vmatpush1.bf16.xpose.msra.mxu0 0
        %1302 = vmatprep.subr.bf16.mxu0 0
        %1303 = vmatpush1.bf16.xpose.msra.mxu0 0
        %1304 = vmatprep.subr.bf16.mxu0 0
        %1305 = vmatpush1.bf16.xpose.msra.mxu0 0
        %1306 = vmatprep.subr.bf16.mxu0 0
        %1307 = vmatpush1.bf16.xpose.msra.mxu0 0
        %1308 = vmatprep.subr.bf16.mxu0 0
        %1309 = vmatpush1.bf16.xpose.msra.mxu0 0
        %1310 = vmatprep.subr.bf16.mxu0 0
        %1311 = vmatpush1.bf16.xpose.msra.mxu0 0
        %1312 = vmatprep.subr.bf16.mxu0 0
        %1313 = vmatpush1.bf16.xpose.msra.mxu0 0
        %1314 = vmatprep.mubr.bf16.mxu0 0
        %1315 = vmatmul.mubr.bf16.gmra.mrb[0].mxu0 %v1277
        %v1316 = vpop.f32.mrb[0].mxu0
        %v1317 = vadd.f32 %v1228, %v1316
        %v1318 = vpop.f32.mrb[0].mxu0
        %v1319 = vpop.f32.mrb[0].mxu0
        %v1320 = vpop.f32.mrb[0].mxu0
        %1321 = vdwg.mxu0
        %v1323 = vsel %vm1229, %v1226, 0
        %v1326 = vsel %vm1229, %v1218, 0
        %1328 = vmatprep.subr.bf16.mxu0 0
        %1329 = vmatpush1.bf16.xpose.msra.mxu0 %v1326
        %1330 = vmatprep.subr.bf16.mxu0 0
        %1331 = vmatpush1.bf16.xpose.msra.mxu0 0
        %1332 = vmatprep.subr.bf16.mxu0 0
        %1333 = vmatpush1.bf16.xpose.msra.mxu0 0
        %1334 = vmatprep.subr.bf16.mxu0 0
        %1335 = vmatpush1.bf16.xpose.msra.mxu0 0
        %1336 = vmatprep.subr.bf16.mxu0 0
        %1337 = vmatpush1.bf16.xpose.msra.mxu0 0
        %1338 = vmatprep.subr.bf16.mxu0 0
        %1339 = vmatpush1.bf16.xpose.msra.mxu0 0
        %1340 = vmatprep.subr.bf16.mxu0 0
        %1341 = vmatpush1.bf16.xpose.msra.mxu0 0
        %1342 = vmatprep.subr.bf16.mxu0 0
        %1343 = vmatpush1.bf16.xpose.msra.mxu0 0
        %1344 = vmatprep.subr.bf16.mxu0 0
        %1345 = vmatpush1.bf16.xpose.msra.mxu0 0
        %1346 = vmatprep.subr.bf16.mxu0 0
        %1347 = vmatpush1.bf16.xpose.msra.mxu0 0
        %1348 = vmatprep.subr.bf16.mxu0 0
        %1349 = vmatpush1.bf16.xpose.msra.mxu0 0
        %1350 = vmatprep.subr.bf16.mxu0 0
        %1351 = vmatpush1.bf16.xpose.msra.mxu0 0
        %1352 = vmatprep.subr.bf16.mxu0 0
        %1353 = vmatpush1.bf16.xpose.msra.mxu0 0
        %1354 = vmatprep.subr.bf16.mxu0 0
        %1355 = vmatpush1.bf16.xpose.msra.mxu0 0
        %1356 = vmatprep.subr.bf16.mxu0 0
        %1357 = vmatpush1.bf16.xpose.msra.mxu0 0
        %1358 = vmatprep.subr.bf16.mxu0 0
        %1359 = vmatpush1.bf16.xpose.msra.mxu0 0
        %1360 = vmatprep.mubr.bf16.mxu0 0
        %1361 = vmatmul.mubr.bf16.gmra.mrb[0].mxu0 %v1323
        %v1362 = vpop.f32.mrb[0].mxu0
        %v1363 = vadd.f32 %v1228, %v1362
        %v1364 = vpop.f32.mrb[0].mxu0
        %v1365 = vpop.f32.mrb[0].mxu0
        %v1366 = vpop.f32.mrb[0].mxu0
        %1367 = vdwg.mxu0
        %v1369 = vsel %vm1229, %v1227, 0
        %v1372 = vsel %vm1229, %v1219, 0
        %1374 = vmatprep.subr.bf16.mxu0 0
        %1375 = vmatpush1.bf16.xpose.msra.mxu0 %v1372
        %1376 = vmatprep.subr.bf16.mxu0 0
        %1377 = vmatpush1.bf16.xpose.msra.mxu0 0
        %1378 = vmatprep.subr.bf16.mxu0 0
        %1379 = vmatpush1.bf16.xpose.msra.mxu0 0
        %1380 = vmatprep.subr.bf16.mxu0 0
        %1381 = vmatpush1.bf16.xpose.msra.mxu0 0
        %1382 = vmatprep.subr.bf16.mxu0 0
        %1383 = vmatpush1.bf16.xpose.msra.mxu0 0
        %1384 = vmatprep.subr.bf16.mxu0 0
        %1385 = vmatpush1.bf16.xpose.msra.mxu0 0
        %1386 = vmatprep.subr.bf16.mxu0 0
        %1387 = vmatpush1.bf16.xpose.msra.mxu0 0
        %1388 = vmatprep.subr.bf16.mxu0 0
        %1389 = vmatpush1.bf16.xpose.msra.mxu0 0
        %1390 = vmatprep.subr.bf16.mxu0 0
        %1391 = vmatpush1.bf16.xpose.msra.mxu0 0
        %1392 = vmatprep.subr.bf16.mxu0 0
        %1393 = vmatpush1.bf16.xpose.msra.mxu0 0
        %1394 = vmatprep.subr.bf16.mxu0 0
        %1395 = vmatpush1.bf16.xpose.msra.mxu0 0
        %1396 = vmatprep.subr.bf16.mxu0 0
        %1397 = vmatpush1.bf16.xpose.msra.mxu0 0
        %1398 = vmatprep.subr.bf16.mxu0 0
        %1399 = vmatpush1.bf16.xpose.msra.mxu0 0
        %1400 = vmatprep.subr.bf16.mxu0 0
        %1401 = vmatpush1.bf16.xpose.msra.mxu0 0
        %1402 = vmatprep.subr.bf16.mxu0 0
        %1403 = vmatpush1.bf16.xpose.msra.mxu0 0
        %1404 = vmatprep.subr.bf16.mxu0 0
        %1405 = vmatpush1.bf16.xpose.msra.mxu0 0
        %1406 = vmatprep.mubr.bf16.mxu0 0
        %1407 = vmatmul.mubr.bf16.gmra.mrb[0].mxu0 %v1369
        %v1408 = vpop.f32.mrb[0].mxu0
        %v1409 = vadd.f32 %v1228, %v1408
        %v1410 = vpop.f32.mrb[0].mxu0
        %v1411 = vpop.f32.mrb[0].mxu0
        %v1412 = vpop.f32.mrb[0].mxu0
        %1413 = vdwg.mxu0
        %v1414 = vld [vmem:[#allocation3] sm:$0xff]
        %v1415 = vld [vmem:[#allocation3 + $0x8] sm:$0xff]
        %v1416 = vld [vmem:[#allocation3 + $0x10] sm:$0xff]
        %v1417 = vld [vmem:[#allocation3 + $0x18] sm:$0xff]
        %v1418 = vsel %vm1229, %v1271, -inf
        %1419 = vmax.xlane.f32.xlu0 %v1418
        %v1420 = vpop.xlane.xlu0 %1419
        %v1421 = vsel %vm1229, %v1317, -inf
        %1422 = vmax.xlane.f32.xlu0 %v1421
        %v1423 = vpop.xlane.xlu0 %1422
        %v1424 = vsel %vm1229, %v1363, -inf
        %1425 = vmax.xlane.f32.xlu0 %v1424
        %v1426 = vpop.xlane.xlu0 %1425
        %v1427 = vsel %vm1229, %v1409, -inf
        %1428 = vmax.xlane.f32.xlu0 %v1427
        %v1429 = vpop.xlane.xlu0 %1428
        %v1430 = vmax.f32 %v1414, %v1420
        %v1431 = vmax.f32 %v1415, %v1423
        %v1432 = vmax.f32 %v1416, %v1426
        %v1433 = vmax.f32 %v1417, %v1429
        %v1434 = vsub.f32 %v1414, %v1430
        %v1435 = vsub.f32 %v1415, %v1431
        %v1436 = vsub.f32 %v1416, %v1432
        %v1437 = vsub.f32 %v1417, %v1433
        %v1438 = vmul.f32 %v1434, 1.442695
        %v1439 = vpow.pop %v1438
        %v1440 = vmul.f32 %v1435, 1.442695
        %v1441 = vpow.pop %v1440
        %v1442 = vmul.f32 %v1436, 1.442695
        %v1443 = vpow.pop %v1442
        %v1444 = vmul.f32 %v1437, 1.442695
        %v1445 = vpow.pop %v1444
        %1447 = vset.pattern.permute.xlu0 0
        %1448 = vperm.xlu0 %1447, %v1430
        %v1449 = vpop.permute.xlu0 %1448
        %1452 = vset.pattern.permute.xlu0 0
        %1453 = vperm.xlu0 %1452, %v1431
        %v1454 = vpop.permute.xlu0 %1453
        %1457 = vset.pattern.permute.xlu0 0
        %1458 = vperm.xlu0 %1457, %v1432
        %v1459 = vpop.permute.xlu0 %1458
        %1462 = vset.pattern.permute.xlu0 0
        %1463 = vperm.xlu0 %1462, %v1433
        %v1464 = vpop.permute.xlu0 %1463
        %v1466 = vsub.f32 %v1271, %v1449
        %v1467 = vsub.f32 %v1317, %v1454
        %v1468 = vsub.f32 %v1363, %v1459
        %v1469 = vsub.f32 %v1409, %v1464
        %v1470 = vmul.f32 %v1466, 1.442695
        %v1471 = vpow.pop %v1470
        %v1472 = vmul.f32 %v1467, 1.442695
        %v1473 = vpow.pop %v1472
        %v1474 = vmul.f32 %v1468, 1.442695
        %v1475 = vpow.pop %v1474
        %v1476 = vmul.f32 %v1469, 1.442695
        %v1477 = vpow.pop %v1476
        %v1478 = vld [vmem:[#allocation4] sm:$0xff]
        %v1479 = vld [vmem:[#allocation4 + $0x8] sm:$0xff]
        %v1480 = vld [vmem:[#allocation4 + $0x10] sm:$0xff]
        %v1481 = vld [vmem:[#allocation4 + $0x18] sm:$0xff]
        %v1482 = vmul.f32 %v1439, %v1478
        %v1483 = vmul.f32 %v1441, %v1479
        %v1484 = vmul.f32 %v1443, %v1480
        %v1485 = vmul.f32 %v1445, %v1481
        %v1486 = vsel %vm1229, %v1471, 0.0
        %1487 = vadd.xlane.f32.xlu0 %v1486
        %v1488 = vpop.xlane.xlu0 %1487
        %v1489 = vsel %vm1229, %v1473, 0.0
        %1490 = vadd.xlane.f32.xlu0 %v1489
        %v1491 = vpop.xlane.xlu0 %1490
        %v1492 = vsel %vm1229, %v1475, 0.0
        %1493 = vadd.xlane.f32.xlu0 %v1492
        %v1494 = vpop.xlane.xlu0 %1493
        %v1495 = vsel %vm1229, %v1477, 0.0
        %1496 = vadd.xlane.f32.xlu0 %v1495
        %v1497 = vpop.xlane.xlu0 %1496
        %v1498 = vadd.f32 %v1482, %v1488
        %v1499 = vadd.f32 %v1483, %v1491
        %v1500 = vadd.f32 %v1484, %v1494
        %v1501 = vadd.f32 %v1485, %v1497
        %vm1502 = vcmask 7168
        %1503 = vst.msk [vmem:[#allocation4] sm:$0xff] %vm1502, %v1498
        %1504 = vst.msk [vmem:[#allocation4 + $0x8] sm:$0xff] %vm1502, %v1499
        %1505 = vst.msk [vmem:[#allocation4 + $0x10] sm:$0xff] %vm1502, %v1500
        %1506 = vst.msk [vmem:[#allocation4 + $0x18] sm:$0xff] %vm1502, %v1501
        %v1507 = vpack.c.bf16 %v1471, %v1471
        %v1508 = vpack.c.bf16 %v1473, %v1473
        %v1509 = vpack.c.bf16 %v1475, %v1475
        %v1510 = vpack.c.bf16 %v1477, %v1477
        %v1512 = vsel %vm1229, %v1507, 0
        %vm1514 = vcmask 1043456
        %v1516 = vsel %vm1514, %v1220, 0
        %1518 = vmatprep.subr.bf16.mxu0 0
        %1519 = vmatpush1.bf16.msra.mxu0 %v1516
        %1520 = vmatprep.subr.bf16.mxu0 0
        %1521 = vmatpush1.bf16.msra.mxu0 0
        %1522 = vmatprep.subr.bf16.mxu0 0
        %1523 = vmatpush1.bf16.msra.mxu0 0
        %1524 = vmatprep.subr.bf16.mxu0 0
        %1525 = vmatpush1.bf16.msra.mxu0 0
        %1526 = vmatprep.subr.bf16.mxu0 0
        %1527 = vmatpush1.bf16.msra.mxu0 0
        %1528 = vmatprep.subr.bf16.mxu0 0
        %1529 = vmatpush1.bf16.msra.mxu0 0
        %1530 = vmatprep.subr.bf16.mxu0 0
        %1531 = vmatpush1.bf16.msra.mxu0 0
        %1532 = vmatprep.subr.bf16.mxu0 0
        %1533 = vmatpush1.bf16.msra.mxu0 0
        %1534 = vmatprep.subr.bf16.mxu0 0
        %1535 = vmatpush1.bf16.msra.mxu0 0
        %1536 = vmatprep.subr.bf16.mxu0 0
        %1537 = vmatpush1.bf16.msra.mxu0 0
        %1538 = vmatprep.subr.bf16.mxu0 0
        %1539 = vmatpush1.bf16.msra.mxu0 0
        %1540 = vmatprep.subr.bf16.mxu0 0
        %1541 = vmatpush1.bf16.msra.mxu0 0
        %1542 = vmatprep.subr.bf16.mxu0 0
        %1543 = vmatpush1.bf16.msra.mxu0 0
        %1544 = vmatprep.subr.bf16.mxu0 0
        %1545 = vmatpush1.bf16.msra.mxu0 0
        %1546 = vmatprep.subr.bf16.mxu0 0
        %1547 = vmatpush1.bf16.msra.mxu0 0
        %1548 = vmatprep.subr.bf16.mxu0 0
        %1549 = vmatpush1.bf16.msra.mxu0 0
        %1550 = vmatprep.mubr.bf16.mxu0 0
        %1551 = vmatmul.mubr.bf16.gmra.mrb[0].mxu0 %v1512
        %v1552 = vpop.f32.mrb[0].mxu0
        %v1553 = vadd.f32 0.0, %v1552
        %v1554 = vpop.f32.mrb[0].mxu0
        %v1555 = vpop.f32.mrb[0].mxu0
        %v1556 = vpop.f32.mrb[0].mxu0
        %1557 = vdwg.mxu0
        %v1559 = vsel %vm1229, %v1508, 0
        %v1562 = vsel %vm1514, %v1221, 0
        %1564 = vmatprep.subr.bf16.mxu0 0
        %1565 = vmatpush1.bf16.msra.mxu0 %v1562
        %1566 = vmatprep.subr.bf16.mxu0 0
        %1567 = vmatpush1.bf16.msra.mxu0 0
        %1568 = vmatprep.subr.bf16.mxu0 0
        %1569 = vmatpush1.bf16.msra.mxu0 0
        %1570 = vmatprep.subr.bf16.mxu0 0
        %1571 = vmatpush1.bf16.msra.mxu0 0
        %1572 = vmatprep.subr.bf16.mxu0 0
        %1573 = vmatpush1.bf16.msra.mxu0 0
        %1574 = vmatprep.subr.bf16.mxu0 0
        %1575 = vmatpush1.bf16.msra.mxu0 0
        %1576 = vmatprep.subr.bf16.mxu0 0
        %1577 = vmatpush1.bf16.msra.mxu0 0
        %1578 = vmatprep.subr.bf16.mxu0 0
        %1579 = vmatpush1.bf16.msra.mxu0 0
        %1580 = vmatprep.subr.bf16.mxu0 0
        %1581 = vmatpush1.bf16.msra.mxu0 0
        %1582 = vmatprep.subr.bf16.mxu0 0
        %1583 = vmatpush1.bf16.msra.mxu0 0
        %1584 = vmatprep.subr.bf16.mxu0 0
        %1585 = vmatpush1.bf16.msra.mxu0 0
        %1586 = vmatprep.subr.bf16.mxu0 0
        %1587 = vmatpush1.bf16.msra.mxu0 0
        %1588 = vmatprep.subr.bf16.mxu0 0
        %1589 = vmatpush1.bf16.msra.mxu0 0
        %1590 = vmatprep.subr.bf16.mxu0 0
        %1591 = vmatpush1.bf16.msra.mxu0 0
        %1592 = vmatprep.subr.bf16.mxu0 0
        %1593 = vmatpush1.bf16.msra.mxu0 0
        %1594 = vmatprep.subr.bf16.mxu0 0
        %1595 = vmatpush1.bf16.msra.mxu0 0
        %1596 = vmatprep.mubr.bf16.mxu0 0
        %1597 = vmatmul.mubr.bf16.gmra.mrb[0].mxu0 %v1559
        %v1598 = vpop.f32.mrb[0].mxu0
        %v1599 = vadd.f32 0.0, %v1598
        %v1600 = vpop.f32.mrb[0].mxu0
        %v1601 = vpop.f32.mrb[0].mxu0
        %v1602 = vpop.f32.mrb[0].mxu0
        %1603 = vdwg.mxu0
        %v1605 = vsel %vm1229, %v1509, 0
        %v1608 = vsel %vm1514, %v1222, 0
        %1610 = vmatprep.subr.bf16.mxu0 0
        %1611 = vmatpush1.bf16.msra.mxu0 %v1608
        %1612 = vmatprep.subr.bf16.mxu0 0
        %1613 = vmatpush1.bf16.msra.mxu0 0
        %1614 = vmatprep.subr.bf16.mxu0 0
        %1615 = vmatpush1.bf16.msra.mxu0 0
        %1616 = vmatprep.subr.bf16.mxu0 0
        %1617 = vmatpush1.bf16.msra.mxu0 0
        %1618 = vmatprep.subr.bf16.mxu0 0
        %1619 = vmatpush1.bf16.msra.mxu0 0
        %1620 = vmatprep.subr.bf16.mxu0 0
        %1621 = vmatpush1.bf16.msra.mxu0 0
        %1622 = vmatprep.subr.bf16.mxu0 0
        %1623 = vmatpush1.bf16.msra.mxu0 0
        %1624 = vmatprep.subr.bf16.mxu0 0
        %1625 = vmatpush1.bf16.msra.mxu0 0
        %1626 = vmatprep.subr.bf16.mxu0 0
        %1627 = vmatpush1.bf16.msra.mxu0 0
        %1628 = vmatprep.subr.bf16.mxu0 0
        %1629 = vmatpush1.bf16.msra.mxu0 0
        %1630 = vmatprep.subr.bf16.mxu0 0
        %1631 = vmatpush1.bf16.msra.mxu0 0
        %1632 = vmatprep.subr.bf16.mxu0 0
        %1633 = vmatpush1.bf16.msra.mxu0 0
        %1634 = vmatprep.subr.bf16.mxu0 0
        %1635 = vmatpush1.bf16.msra.mxu0 0
        %1636 = vmatprep.subr.bf16.mxu0 0
        %1637 = vmatpush1.bf16.msra.mxu0 0
        %1638 = vmatprep.subr.bf16.mxu0 0
        %1639 = vmatpush1.bf16.msra.mxu0 0
        %1640 = vmatprep.subr.bf16.mxu0 0
        %1641 = vmatpush1.bf16.msra.mxu0 0
        %1642 = vmatprep.mubr.bf16.mxu0 0
        %1643 = vmatmul.mubr.bf16.gmra.mrb[0].mxu0 %v1605
        %v1644 = vpop.f32.mrb[0].mxu0
        %v1645 = vadd.f32 0.0, %v1644
        %v1646 = vpop.f32.mrb[0].mxu0
        %v1647 = vpop.f32.mrb[0].mxu0
        %v1648 = vpop.f32.mrb[0].mxu0
        %1649 = vdwg.mxu0
        %v1651 = vsel %vm1229, %v1510, 0
        %v1654 = vsel %vm1514, %v1223, 0
        %1656 = vmatprep.subr.bf16.mxu0 0
        %1657 = vmatpush1.bf16.msra.mxu0 %v1654
        %1658 = vmatprep.subr.bf16.mxu0 0
        %1659 = vmatpush1.bf16.msra.mxu0 0
        %1660 = vmatprep.subr.bf16.mxu0 0
        %1661 = vmatpush1.bf16.msra.mxu0 0
        %1662 = vmatprep.subr.bf16.mxu0 0
        %1663 = vmatpush1.bf16.msra.mxu0 0
        %1664 = vmatprep.subr.bf16.mxu0 0
        %1665 = vmatpush1.bf16.msra.mxu0 0
        %1666 = vmatprep.subr.bf16.mxu0 0
        %1667 = vmatpush1.bf16.msra.mxu0 0
        %1668 = vmatprep.subr.bf16.mxu0 0
        %1669 = vmatpush1.bf16.msra.mxu0 0
        %1670 = vmatprep.subr.bf16.mxu0 0
        %1671 = vmatpush1.bf16.msra.mxu0 0
        %1672 = vmatprep.subr.bf16.mxu0 0
        %1673 = vmatpush1.bf16.msra.mxu0 0
        %1674 = vmatprep.subr.bf16.mxu0 0
        %1675 = vmatpush1.bf16.msra.mxu0 0
        %1676 = vmatprep.subr.bf16.mxu0 0
        %1677 = vmatpush1.bf16.msra.mxu0 0
        %1678 = vmatprep.subr.bf16.mxu0 0
        %1679 = vmatpush1.bf16.msra.mxu0 0
        %1680 = vmatprep.subr.bf16.mxu0 0
        %1681 = vmatpush1.bf16.msra.mxu0 0
        %1682 = vmatprep.subr.bf16.mxu0 0
        %1683 = vmatpush1.bf16.msra.mxu0 0
        %1684 = vmatprep.subr.bf16.mxu0 0
        %1685 = vmatpush1.bf16.msra.mxu0 0
        %1686 = vmatprep.subr.bf16.mxu0 0
        %1687 = vmatpush1.bf16.msra.mxu0 0
        %1688 = vmatprep.mubr.bf16.mxu0 0
        %1689 = vmatmul.mubr.bf16.gmra.mrb[0].mxu0 %v1651
        %v1690 = vpop.f32.mrb[0].mxu0
        %v1691 = vadd.f32 0.0, %v1690
        %v1692 = vpop.f32.mrb[0].mxu0
        %v1693 = vpop.f32.mrb[0].mxu0
        %v1694 = vpop.f32.mrb[0].mxu0
        %1695 = vdwg.mxu0
        %v1696 = vld [vmem:[#allocation5] sm:$0xff]
        %v1697 = vld [vmem:[#allocation5 + $0x8] sm:$0xff]
        %v1698 = vld [vmem:[#allocation5 + $0x10] sm:$0xff]
        %v1699 = vld [vmem:[#allocation5 + $0x18] sm:$0xff]
        %1701 = vset.pattern.permute.xlu0 0
        %1702 = vperm.xlu0 %1701, %v1439
        %v1703 = vpop.permute.xlu0 %1702
        %1706 = vset.pattern.permute.xlu0 0
        %1707 = vperm.xlu0 %1706, %v1441
        %v1708 = vpop.permute.xlu0 %1707
        %1711 = vset.pattern.permute.xlu0 0
        %1712 = vperm.xlu0 %1711, %v1443
        %v1713 = vpop.permute.xlu0 %1712
        %1716 = vset.pattern.permute.xlu0 0
        %1717 = vperm.xlu0 %1716, %v1445
        %v1718 = vpop.permute.xlu0 %1717
        %v1720 = vmul.f32 %v1703, %v1696
        %v1721 = vmul.f32 %v1708, %v1697
        %v1722 = vmul.f32 %v1713, %v1698
        %v1723 = vmul.f32 %v1718, %v1699
        %v1724 = vadd.f32 %v1720, %v1553
        %v1725 = vadd.f32 %v1721, %v1599
        %v1726 = vadd.f32 %v1722, %v1645
        %v1727 = vadd.f32 %v1723, %v1691
        %1728 = vst.msk [vmem:[#allocation5] sm:$0xff] %vm1229, %v1724
        %1729 = vst.msk [vmem:[#allocation5 + $0x8] sm:$0xff] %vm1229, %v1725
        %1730 = vst.msk [vmem:[#allocation5 + $0x10] sm:$0xff] %vm1229, %v1726
        %1731 = vst.msk [vmem:[#allocation5 + $0x18] sm:$0xff] %vm1229, %v1727
        %1732 = vst.msk [vmem:[#allocation3] sm:$0xff] %vm1502, %v1430
        %1733 = vst.msk [vmem:[#allocation3 + $0x8] sm:$0xff] %vm1502, %v1431
        %1734 = vst.msk [vmem:[#allocation3 + $0x10] sm:$0xff] %vm1502, %v1432
        %1735 = vst.msk [vmem:[#allocation3 + $0x18] sm:$0xff] %vm1502, %v1433
        // Predicated region
        $region93: #{tpu_custom_call.1} parent=63 // pred_check
          %p1736 = pneg %p551
        $region94: #{tpu_custom_call.1} parent=63 // pred_check_branch
          %1738 = sbr.rel (%p1736) target = $region96
        $region95: #{tpu_custom_call.1} parent=63 // pred_region
          %v1739 = vld [vmem:[#allocation4] sm:$0xff]
          %v1740 = vld [vmem:[#allocation4 + $0x8] sm:$0xff]
          %v1741 = vld [vmem:[#allocation4 + $0x10] sm:$0xff]
          %v1742 = vld [vmem:[#allocation4 + $0x18] sm:$0xff]
          %v1743 = vrcp.pop %v1739
          %v1744 = vrcp.pop %v1740
          %v1745 = vrcp.pop %v1741
          %v1746 = vrcp.pop %v1742
          %v1747 = vld [vmem:[#allocation5] sm:$0xff]
          %v1748 = vld [vmem:[#allocation5 + $0x8] sm:$0xff]
          %v1749 = vld [vmem:[#allocation5 + $0x10] sm:$0xff]
          %v1750 = vld [vmem:[#allocation5 + $0x18] sm:$0xff]
          %1752 = vset.pattern.permute.xlu0 0
          %1753 = vperm.xlu0 %1752, %v1743
          %v1754 = vpop.permute.xlu0 %1753
          %1757 = vset.pattern.permute.xlu0 0
          %1758 = vperm.xlu0 %1757, %v1744
          %v1759 = vpop.permute.xlu0 %1758
          %1762 = vset.pattern.permute.xlu0 0
          %1763 = vperm.xlu0 %1762, %v1745
          %v1764 = vpop.permute.xlu0 %1763
          %1767 = vset.pattern.permute.xlu0 0
          %1768 = vperm.xlu0 %1767, %v1746
          %v1769 = vpop.permute.xlu0 %1768
          %v1771 = vmul.f32 %v1747, %v1754
          %v1772 = vmul.f32 %v1748, %v1759
          %v1773 = vmul.f32 %v1749, %v1764
          %v1774 = vmul.f32 %v1750, %v1769
          %v1775 = vcombine.low %v1771, %v1773
          %v1776 = vcombine.high %v1771, %v1773
          %v1778 = vunpack.c.l.s4 1983009808
          %v1779 = vunpack.c.0.s8 %v1778
          %v1780 = vlaneseq
          %v1781 = vshrl.u32 %v1780, 7
          %v1782 = vsub.s32 %v1779, %v1781
          %v1783 = vrot.slane %v1775, %v1782
          %v1785 = vunpack.c.l.s4 1983009808
          %v1786 = vunpack.c.0.s8 %v1785
          %v1787 = vlaneseq
          %v1788 = vshrl.u32 %v1787, 7
          %v1789 = vsub.s32 %v1786, %v1788
          %v1790 = vrot.slane %v1776, %v1789
          %v1791 = vcombine.low %v1772, %v1774
          %v1792 = vcombine.high %v1772, %v1774
          %v1794 = vunpack.c.l.s4 1983009808
          %v1795 = vunpack.c.0.s8 %v1794
          %v1796 = vlaneseq
          %v1797 = vshrl.u32 %v1796, 7
          %v1798 = vsub.s32 %v1795, %v1797
          %v1799 = vrot.slane %v1791, %v1798
          %v1801 = vunpack.c.l.s4 1983009808
          %v1802 = vunpack.c.0.s8 %v1801
          %v1803 = vlaneseq
          %v1804 = vshrl.u32 %v1803, 7
          %v1805 = vsub.s32 %v1802, %v1804
          %v1806 = vrot.slane %v1792, %v1805
          %v1807 = vcombine.low %v1783, %v1799
          %v1808 = vcombine.high %v1783, %v1799
          %v1810 = vunpack.c.l.s4 1934713408
          %v1811 = vunpack.c.0.s8 %v1810
          %v1812 = vlaneseq
          %v1813 = vshrl.u32 %v1812, 7
          %v1814 = vsub.s32 %v1811, %v1813
          %v1815 = vrot.slane %v1807, %v1814
          %v1817 = vunpack.c.l.s4 1934713408
          %v1818 = vunpack.c.0.s8 %v1817
          %v1819 = vlaneseq
          %v1820 = vshrl.u32 %v1819, 7
          %v1821 = vsub.s32 %v1818, %v1820
          %v1822 = vrot.slane %v1808, %v1821
          %v1823 = vcombine.low %v1790, %v1806
          %v1824 = vcombine.high %v1790, %v1806
          %v1826 = vunpack.c.l.s4 1934713408
          %v1827 = vunpack.c.0.s8 %v1826
          %v1828 = vlaneseq
          %v1829 = vshrl.u32 %v1828, 7
          %v1830 = vsub.s32 %v1827, %v1829
          %v1831 = vrot.slane %v1823, %v1830
          %v1833 = vunpack.c.l.s4 1934713408
          %v1834 = vunpack.c.0.s8 %v1833
          %v1835 = vlaneseq
          %v1836 = vshrl.u32 %v1835, 7
          %v1837 = vsub.s32 %v1834, %v1836
          %v1838 = vrot.slane %v1824, %v1837
          %v1839 = vcombine.high %v1815, 0.0
          %v1840 = vcombine.high %v1822, 0.0
          %v1841 = vcombine.high %v1831, 0.0
          %v1842 = vcombine.high %v1838, 0.0
          %v1843 = vcombine.low %v1815, %v1822
          %v1845 = vunpack.c.l.s4 1983009808
          %v1846 = vunpack.c.0.s8 %v1845
          %v1847 = vlaneseq
          %v1848 = vshrl.u32 %v1847, 7
          %v1849 = vsub.s32 %v1846, %v1848
          %v1850 = vrot.slane %v1843, %v1849
          %v1851 = vcombine.low %v1839, %v1840
          %v1853 = vunpack.c.l.s4 1983009808
          %v1854 = vunpack.c.0.s8 %v1853
          %v1855 = vlaneseq
          %v1856 = vshrl.u32 %v1855, 7
          %v1857 = vsub.s32 %v1854, %v1856
          %v1858 = vrot.slane %v1851, %v1857
          %v1859 = vcombine.low %v1831, %v1838
          %v1861 = vunpack.c.l.s4 1983009808
          %v1862 = vunpack.c.0.s8 %v1861
          %v1863 = vlaneseq
          %v1864 = vshrl.u32 %v1863, 7
          %v1865 = vsub.s32 %v1862, %v1864
          %v1866 = vrot.slane %v1859, %v1865
          %v1867 = vcombine.low %v1841, %v1842
          %v1869 = vunpack.c.l.s4 1983009808
          %v1870 = vunpack.c.0.s8 %v1869
          %v1871 = vlaneseq
          %v1872 = vshrl.u32 %v1871, 7
          %v1873 = vsub.s32 %v1870, %v1872
          %v1874 = vrot.slane %v1867, %v1873
          %v1875 = vcombine.low %v1850, %v1858
          %v1876 = vcombine.high %v1850, %v1858
          %v1878 = vunpack.c.l.s4 1934713408
          %v1879 = vunpack.c.0.s8 %v1878
          %v1880 = vlaneseq
          %v1881 = vshrl.u32 %v1880, 7
          %v1882 = vsub.s32 %v1879, %v1881
          %v1883 = vrot.slane %v1875, %v1882
          %v1885 = vunpack.c.l.s4 1934713408
          %v1886 = vunpack.c.0.s8 %v1885
          %v1887 = vlaneseq
          %v1888 = vshrl.u32 %v1887, 7
          %v1889 = vsub.s32 %v1886, %v1888
          %v1890 = vrot.slane %v1876, %v1889
          %v1891 = vcombine.low %v1866, %v1874
          %v1892 = vcombine.high %v1866, %v1874
          %v1894 = vunpack.c.l.s4 1934713408
          %v1895 = vunpack.c.0.s8 %v1894
          %v1896 = vlaneseq
          %v1897 = vshrl.u32 %v1896, 7
          %v1898 = vsub.s32 %v1895, %v1897
          %v1899 = vrot.slane %v1891, %v1898
          %v1901 = vunpack.c.l.s4 1934713408
          %v1902 = vunpack.c.0.s8 %v1901
          %v1903 = vlaneseq
          %v1904 = vshrl.u32 %v1903, 7
          %v1905 = vsub.s32 %v1902, %v1904
          %v1906 = vrot.slane %v1892, %v1905
          %v1907 = vcombine.low %v1883, %v1899
          %v1908 = vcombine.high %v1883, %v1899
          %v1909 = vcombine.low %v1890, %v1906
          %v1910 = vcombine.high %v1890, %v1906
          %1912 = vrot.lane.b32.xlu0 %v1908, 8
          %v1913 = vpop.permute.xlu0 %1912
          %1916 = vrot.lane.b32.xlu0 %v1909, 16
          %v1917 = vpop.permute.xlu0 %1916
          %1920 = vrot.lane.b32.xlu0 %v1910, 24
          %v1921 = vpop.permute.xlu0 %1920
          %v1923 = vsel %vm1229, %v1907, %v1913
          %vm1924 = vcmask 130048
          %v1925 = vsel %vm1924, %v1923, %v1917
          %vm1926 = vcmask 195584
          %v1927 = vsel %vm1926, %v1925, %v1921
          %v1928 = vpack.c.bf16 %v1927, %v1927
          %v1929 = vld [vmem:[#allocation15] sm:$0xf]
          %v1930 = vld [vmem:[#allocation15 + $0x4] sm:$0xf]
          %v1931 = vld [vmem:[#allocation15 + $0x8] sm:$0xf]
          %v1932 = vld [vmem:[#allocation15 + $0xc] sm:$0xf]
          %v1933 = vld [vmem:[%s9] sm:$0x1]
          %v1935 = vlaneseq
          %v1936 = vshrl.u32 %v1935, 7
          %v1937 = vsub.s32 0, %v1936
          %v1938 = vrot.slane %v1933, %v1937
          %v1944 = vunpack.c.l.b16 %v1929
          %v1945 = vunpack.c.l.b16 %v1930
          %v1946 = vunpack.c.l.b16 %v1931
          %v1947 = vunpack.c.l.b16 %v1932
          %v1948 = vpack.c.b16 %v1945, %v1944
          %v1949 = vpack.c.b16 %v1947, %v1946
          %v1953 = vsel %vm817, %v1928, 0
          %1955 = vmatprep.subr.bf16.mxu0 0
          %1956 = vmatpush1.bf16.msra.mxu0 %v1948
          %1957 = vmatprep.subr.bf16.mxu0 0
          %1958 = vmatpush1.bf16.msra.mxu0 %v1949
          %1959 = vmatprep.subr.bf16.mxu0 0
          %1960 = vmatpush1.bf16.msra.mxu0 0
          %1961 = vmatprep.subr.bf16.mxu0 0
          %1962 = vmatpush1.bf16.msra.mxu0 0
          %1963 = vmatprep.subr.bf16.mxu0 0
          %1964 = vmatpush1.bf16.msra.mxu0 0
          %1965 = vmatprep.subr.bf16.mxu0 0
          %1966 = vmatpush1.bf16.msra.mxu0 0
          %1967 = vmatprep.subr.bf16.mxu0 0
          %1968 = vmatpush1.bf16.msra.mxu0 0
          %1969 = vmatprep.subr.bf16.mxu0 0
          %1970 = vmatpush1.bf16.msra.mxu0 0
          %1971 = vmatprep.subr.bf16.mxu0 0
          %1972 = vmatpush1.bf16.msra.mxu0 0
          %1973 = vmatprep.subr.bf16.mxu0 0
          %1974 = vmatpush1.bf16.msra.mxu0 0
          %1975 = vmatprep.subr.bf16.mxu0 0
          %1976 = vmatpush1.bf16.msra.mxu0 0
          %1977 = vmatprep.subr.bf16.mxu0 0
          %1978 = vmatpush1.bf16.msra.mxu0 0
          %1979 = vmatprep.subr.bf16.mxu0 0
          %1980 = vmatpush1.bf16.msra.mxu0 0
          %1981 = vmatprep.subr.bf16.mxu0 0
          %1982 = vmatpush1.bf16.msra.mxu0 0
          %1983 = vmatprep.subr.bf16.mxu0 0
          %1984 = vmatpush1.bf16.msra.mxu0 0
          %1985 = vmatprep.subr.bf16.mxu0 0
          %1986 = vmatpush1.bf16.msra.mxu0 0
          %1987 = vmatprep.mubr.bf16.mxu0 0
          %1988 = vmatmul.mubr.bf16.gmra.mrb[0].mxu0 %v1953
          %v1989 = vpop.f32.mrb[0].mxu0
          %v1990 = vadd.f32 %v1938, %v1989
          %v1991 = vpop.f32.mrb[0].mxu0
          %v1992 = vpop.f32.mrb[0].mxu0
          %v1993 = vpop.f32.mrb[0].mxu0
          %1994 = vdwg.mxu0
          %1995 = vst.msk [vmem:[%s542] sm:$0xff] %vm817, %v1990
        $region96: #{tpu_custom_call.1} parent=63 // pred_fallthru
          _
        %s1996 = sand.u32 %s314, 1
        %s1997 = scalar_lea.sflag [#allocation8], %s1996
        %s1998 = sand.u32 %s314, 1
        %s1999 = smul.addr %s1998, 8
        %s2000 = scalar_lea.vmem [#allocation17], %s1999
        // Predicated region
        $region97: #{tpu_custom_call.1} parent=63 // pred_check
          %p2001 = pneg %p324
        $region98: #{tpu_custom_call.1} parent=63 // pred_check_branch
          %2003 = sbr.rel (%p2001) target = $region100
        $region99: #{tpu_custom_call.1} parent=63 // pred_region
          %s2005 = ssub.s32 128, 128
          %2006 = vsyncadd %s1997, %s2005
          %s2007 = sadd.s32 %s39, %s38
          %s2008 = smul.addr %s2007, 128
          %s2009 = scalar_lea.hbm %s11, %s2008
          %s2011 = sshll.u32 %s2000, 4
          %s2012 = int_to_ptr.vmem [resolvable:$true] %s2011
          %2014 = dma.vmem_to_hbm [thread:$0]  %s2012, 128, %s2009, %s1997
        $region100: #{tpu_custom_call.1} parent=63 // pred_fallthru
          _
      $region64: #{tpu_custom_call.1} parent=5 // pred_fallthru
        _
      %p2015 = scmp.le.s32.totalorder 2, %s28
      // Predicated region
      $region101: #{tpu_custom_call.1} parent=5 // pred_check
        %p2016 = pneg %p2015
      $region102: #{tpu_custom_call.1} parent=5 // pred_check_branch
        %2018 = sbr.rel (%p2016) target = $region104
      $region103: #{tpu_custom_call.1} parent=5 // pred_region
        %s2019 = ssub.s32 %s28, 2
        // Predicated region
        $region105: #{tpu_custom_call.1} parent=103 // pred_check
          %p2020 = pneg %p330
        $region106: #{tpu_custom_call.1} parent=103 // pred_check_branch
          %2022 = sbr.rel (%p2020) target = $region108
        $region107: #{tpu_custom_call.1} parent=103 // pred_region
          %s2023 = sand.u32 %s315, 1
          %s2024 = scalar_lea.sflag [#allocation8], %s2023
          %s2025 = sand.u32 %s315, 1
          %s2026 = smul.addr %s2025, 8
          %s2027 = scalar_lea.vmem [#allocation17], %s2026
          %2028 = dma.done %s2024, 128
        $region108: #{tpu_custom_call.1} parent=103 // pred_fallthru
          _
      $region104: #{tpu_custom_call.1} parent=5 // pred_fallthru
        _
    $region6: #{tpu_custom_call.1} parent=1 // loop_footer
      %s32 = sadd.s32 1, %s28
    $region7: #{tpu_custom_call.1} parent=1 // loop_footer_branch
      %27 = sbr.rel target = $region3
    $region8: #{tpu_custom_call.1} parent=1 // loop_exit
      _
    %2029 = vsyncpa [#allocation7], 1
    %s2030 = scalar_lea.sflag [#allocation7], 1
    %2031 = vsyncpa %s2030, 1
    %2032 = vsyncpa [#allocation10], 1
    %s2033 = scalar_lea.sflag [#allocation10], 1
    %2034 = vsyncpa %s2033, 1
    %2035 = vsyncpa [#allocation13], 1
    %2036 = vsyncpa [#allocation16], 1
    %2037 = vsyncpa [#allocation8], 1
    %s2038 = scalar_lea.sflag [#allocation8], 1
    %2039 = vsyncpa %s2038, 1

</llo_original>
